<compile_context>
chip_gen: v7x
topology: tpu7x:2x2x1
jax: 0.10.0
libtpu: 0.0.40
codegen_flags: <defaults>
</compile_context>

<pallas_src>
import functools

import jax
import jax.numpy as jnp
from jax import lax
from jax.experimental import pallas as pl
from jax.experimental.pallas import tpu as pltpu


# ----------------------------------------------------------------------------
# Fused Pallas kernel: whole ResidualGroup for one batch element
# ----------------------------------------------------------------------------
def _residual_group_kernel(x_ref, wc_ref, bc_ref, caw1_ref, cab1_ref,
                           caw2_ref, cab2_ref, o_ref, hp_ref, *,
                           num_block, H, W, C, res_scale):
    f32 = jnp.float32
    HW = H * W
    C3 = 3 * C

    # Persistent zero-padded scratch: zero once per grid step; every conv only
    # rewrites the interior so the 1-pixel zero border stays valid.
    hp_ref[...] = jnp.zeros_like(hp_ref)

    x0 = x_ref[0].astype(f32).reshape(HW, C)          # (H*W, C); W % 8 == 0 -> free reshape

    def conv3x3(h, idx):
        """3x3 same-padding conv.  h: (H*W, C) f32 -> (H*W, C) f32 (bias added).

        bf16 im2col temporaries, dy-split MXU contraction (3 dots of K=3C),
        f32 accumulation.
        """
        # Single pass: cast to bf16 while writing into the padded scratch interior.
        hp_ref[1:H + 1, 1:W + 1, :] = h.reshape(H, W, C).astype(jnp.bfloat16)
        hp = hp_ref[...]                                           # (H+2, W+2, C) bf16
        # dx taps packed along lanes -> (H+2, W, 3C) bf16 (the only large temp).
        cols = jnp.concatenate([hp[:, dx:dx + W, :] for dx in range(3)], axis=-1)
        w_l = wc_ref[idx]                                          # (9C, C) bf16
        acc = bc_ref[idx].astype(f32)                              # (1, C) bias, broadcasts
        for dy in range(3):                                        # leading-dim slices: cheap
            acc = acc + jnp.dot(cols[dy:dy + H].reshape(HW, C3),
                                w_l[dy * C3:(dy + 1) * C3, :],
                                preferred_element_type=f32)
        return acc                                                 # (H*W, C) f32

    def rcab(i, h):
        # conv3x3 -> ReLU -> conv3x3 -> channel attention -> * res_scale + x
        y = jnp.maximum(conv3x3(h, 2 * i), 0.0)
        y = conv3x3(y, 2 * i + 1)                                  # (H*W, C)
        # Channel attention (global avg pool -> 1x1 -> ReLU -> 1x1 -> sigmoid), f32.
        pooled = jnp.mean(y, axis=0, keepdims=True)                # (1, C)
        a = jnp.dot(pooled, caw1_ref[i].astype(f32),
                    preferred_element_type=f32) + cab1_ref[i].astype(f32)
        a = jnp.maximum(a, 0.0)
        a = jnp.dot(a, caw2_ref[i].astype(f32),
                    preferred_element_type=f32) + cab2_ref[i].astype(f32)
        a = jax.nn.sigmoid(a) * res_scale                          # fold res_scale into (1, C)
        return y * a + h                                           # one full-size multiply

    # Bounded live ranges / code size even at RCAN's production depth (20 blocks).
    h = lax.fori_loop(0, num_block, rcab, x0)

    # Final conv of the group + group-level residual.
    out = conv3x3(h, 2 * num_block) + x0
    o_ref[0] = out.reshape(H, W, C).astype(o_ref.dtype)


# ----------------------------------------------------------------------------
# Wrapper (pallas_call glue)
# ----------------------------------------------------------------------------
def residual_group_forward(x, params, res_scale):
    """x: (N, H, W, C) NHWC. Returns (N, H, W, C)."""
    N, H, W, C = x.shape
    num_block = len(params["blocks"])
    Csq = params["blocks"][0]["ca_w1"].shape[-1]
    L = 2 * num_block + 1

    # Stack all layer weights once; im2col rows ordered (dy, dx, cin) so the
    # dy-split row slices line up with cols' (dx, cin) lane packing.
    conv_ws, conv_bs = [], []
    for bp in params["blocks"]:
        conv_ws += [bp["w1"], bp["w2"]]
        conv_bs += [bp["b1"], bp["b2"]]
    conv_ws.append(params["conv_w"])
    conv_bs.append(params["conv_b"])
    wc = jnp.stack([w.reshape(9 * C, C) for w in conv_ws]).astype(jnp.bfloat16)
    bc = jnp.stack([b.reshape(1, C) for b in conv_bs])                    # f32
    caw1 = jnp.stack([bp["ca_w1"] for bp in params["blocks"]])            # (nb, C, Csq)
    cab1 = jnp.stack([bp["ca_b1"].reshape(1, Csq) for bp in params["blocks"]])
    caw2 = jnp.stack([bp["ca_w2"] for bp in params["blocks"]])            # (nb, Csq, C)
    cab2 = jnp.stack([bp["ca_b2"].reshape(1, C) for bp in params["blocks"]])

    kernel = functools.partial(_residual_group_kernel, num_block=num_block,
                               H=H, W=W, C=C, res_scale=float(res_scale))

    grid_spec = pltpu.PrefetchScalarGridSpec(
        num_scalar_prefetch=0,
        grid=(N,),                       # N >= 2 keeps both v7x TCs busy + pipelined DMA
        in_specs=[
            pl.BlockSpec((1, H, W, C), lambda n: (n, 0, 0, 0)),
            pl.BlockSpec((L, 9 * C, C), lambda n: (0, 0, 0)),
            pl.BlockSpec((L, 1, C), lambda n: (0, 0, 0)),
            pl.BlockSpec((num_block, C, Csq), lambda n: (0, 0, 0)),
            pl.BlockSpec((num_block, 1, Csq), lambda n: (0, 0, 0)),
            pl.BlockSpec((num_block, Csq, C), lambda n: (0, 0, 0)),
            pl.BlockSpec((num_block, 1, C), lambda n: (0, 0, 0)),
        ],
        out_specs=pl.BlockSpec((1, H, W, C), lambda n: (n, 0, 0, 0)),
        scratch_shapes=[pltpu.VMEM((H + 2, W + 2, C), jnp.bfloat16)],  # padded act buffer
    )

    return pl.pallas_call(
        kernel,
        out_shape=jax.ShapeDtypeStruct((N, H, W, C), x.dtype),
        grid_spec=grid_spec,
        compiler_params=pltpu.CompilerParams(
            dimension_semantics=("parallel",),
            # v7x-safe budget (64 MiB physical); can go to ~100 MiB on v5e/v6e.
            vmem_limit_bytes=48 * 1024 * 1024),
    )(x, wc, bc, caw1, cab1, caw2, cab2)


# ----------------------------------------------------------------------------
# Pure-JAX reference (f32, highest precision) for correctness check
# ----------------------------------------------------------------------------
def _conv3x3_ref(x, w, b, relu=False):
    y = jax.lax.conv_general_dilated(
        x, w, window_strides=(1, 1), padding=((1, 1), (1, 1)),
        dimension_numbers=("NHWC", "HWIO", "NHWC"),
        precision=jax.lax.Precision.HIGHEST) + b.reshape(1, 1, 1, -1)
    return jnp.maximum(y, 0.0) if relu else y


def _rcab_ref(x, p, res_scale):
    h = _conv3x3_ref(x, p["w1"], p["b1"], relu=True)
    h = _conv3x3_ref(h, p["w2"], p["b2"])
    pooled = jnp.mean(h, axis=(1, 2))                                   # (N, C)
    a = jnp.maximum(pooled @ p["ca_w1"] + p["ca_b1"], 0.0)
    a = jax.nn.sigmoid(a @ p["ca_w2"] + p["ca_b2"])                     # (N, C)
    return h * a[:, None, None, :] * res_scale + x


def _residual_group_ref(x, params, res_scale):
    h = x
    for bp in params["blocks"]:
        h = _rcab_ref(h, bp, res_scale)
    return _conv3x3_ref(h, params["conv_w"], params["conv_b"]) + x


# ----------------------------------------------------------------------------
# Deterministic parameter init
# ----------------------------------------------------------------------------
def init_params(key, num_feat, num_block, squeeze_factor):
    csq = num_feat // squeeze_factor
    blocks = []
    for _ in range(num_block):
        key, *ks = jax.random.split(key, 7)
        blocks.append({
            "w1": 0.05 * jax.random.normal(ks[0], (3, 3, num_feat, num_feat), jnp.float32),
            "b1": 0.05 * jax.random.normal(ks[1], (num_feat,), jnp.float32),
            "w2": 0.05 * jax.random.normal(ks[2], (3, 3, num_feat, num_feat), jnp.float32),
            "b2": 0.05 * jax.random.normal(ks[3], (num_feat,), jnp.float32),
            "ca_w1": 0.1 * jax.random.normal(ks[4], (num_feat, csq), jnp.float32),
            "ca_b1": jnp.zeros((csq,), jnp.float32),
            "ca_w2": 0.1 * jax.random.normal(ks[5], (csq, num_feat), jnp.float32),
            "ca_b2": jnp.zeros((num_feat,), jnp.float32),
        })
    key, k1, k2 = jax.random.split(key, 3)
    return {
        "blocks": blocks,
        "conv_w": 0.05 * jax.random.normal(k1, (3, 3, num_feat, num_feat), jnp.float32),
        "conv_b": 0.05 * jax.random.normal(k2, (num_feat,), jnp.float32),
    }


# ----------------------------------------------------------------------------
if __name__ == "__main__":
    num_feat, num_block, squeeze_factor, res_scale = 32, 2, 4, 1.0
    N, H, W = 2, 16, 16

    key = jax.random.PRNGKey(0)
    kx, kp = jax.random.split(key)
    x = jax.random.normal(kx, (N, H, W, num_feat), jnp.float32)   # NHWC
    params = init_params(kp, num_feat, num_block, squeeze_factor)

    out = jax.block_until_ready(residual_group_forward(x, params, res_scale))
    ref = jax.block_until_ready(_residual_group_ref(x, params, res_scale))

    assert out.shape == (N, H, W, num_feat)
    # bf16 MXU operands (f32 accumulation) => tolerance loosened vs pure f32.
    # TODO(synk): at production depth (num_block=20) re-validate accuracy or keep
    # the first/last group convs in f32.
    assert jnp.allclose(out, ref, atol=3e-2, rtol=3e-2), \
        float(jnp.max(jnp.abs(out - ref)))
    print("KERNEL_OK")
</pallas_src>

<mosaic_0001>
module attributes {stable_mosaic.version = 11 : i64} {
  func.func @_residual_group_kernel(%arg0: i32, %arg1: memref<1x16x16x32xf32, #tpu.memory_space<vmem>>, %arg2: memref<5x288x32xbf16, #tpu.memory_space<vmem>>, %arg3: memref<5x1x32xf32, #tpu.memory_space<vmem>>, %arg4: memref<2x32x8xf32, #tpu.memory_space<vmem>>, %arg5: memref<2x1x8xf32, #tpu.memory_space<vmem>>, %arg6: memref<2x8x32xf32, #tpu.memory_space<vmem>>, %arg7: memref<2x1x32xf32, #tpu.memory_space<vmem>>, %arg8: memref<1x16x16x32xf32, #tpu.memory_space<vmem>>, %arg9: memref<18x18x32xbf16, #tpu.memory_space<vmem>>) attributes {dimension_semantics = [#tpu.dimension_semantics<parallel>], iteration_bounds = array<i64: 2>, scalar_prefetch = 0 : i64, scratch_operands = 1 : i64, tpu.core_type = #tpu.core_type<tc>, window_params = [{transform_indices = @transform_0, window_bounds = array<i64: 1, 16, 16, 32>}, {pipeline_mode = #tpu.pipeline_mode<synchronous>, transform_indices = @transform_1, window_bounds = array<i64: 5, 288, 32>}, {pipeline_mode = #tpu.pipeline_mode<synchronous>, transform_indices = @transform_2, window_bounds = array<i64: 5, 1, 32>}, {pipeline_mode = #tpu.pipeline_mode<synchronous>, transform_indices = @transform_3, window_bounds = array<i64: 2, 32, 8>}, {pipeline_mode = #tpu.pipeline_mode<synchronous>, transform_indices = @transform_4, window_bounds = array<i64: 2, 1, 8>}, {pipeline_mode = #tpu.pipeline_mode<synchronous>, transform_indices = @transform_5, window_bounds = array<i64: 2, 8, 32>}, {pipeline_mode = #tpu.pipeline_mode<synchronous>, transform_indices = @transform_6, window_bounds = array<i64: 2, 1, 32>}, {transform_indices = @transform_7, window_bounds = array<i64: 1, 16, 16, 32>}]} {
    %cst = arith.constant 0.000000e+00 : bf16
    %0 = vector.broadcast %cst : bf16 to vector<18x18x32xbf16>
    %c0 = arith.constant 0 : index
    %c0_0 = arith.constant 0 : index
    %c0_1 = arith.constant 0 : index
    %1 = vector.load %arg9[%c0, %c0_0, %c0_1] : memref<18x18x32xbf16, #tpu.memory_space<vmem>>, vector<18x18x32xbf16>
    tpu.vector_store %arg9[%c0, %c0_0, %c0_1], %0 {strides = array<i32>} : memref<18x18x32xbf16, #tpu.memory_space<vmem>>, vector<18x18x32xbf16>,
    %c0_2 = arith.constant 0 : index
    %c0_3 = arith.constant 0 : index
    %c0_4 = arith.constant 0 : index
    %c0_5 = arith.constant 0 : index
    %2 = vector.load %arg1[%c0_2, %c0_3, %c0_4, %c0_5] : memref<1x16x16x32xf32, #tpu.memory_space<vmem>>, vector<1x16x16x32xf32>
    %3 = vector.shape_cast %2 : vector<1x16x16x32xf32> to vector<16x16x32xf32>
    %4 = vector.shape_cast %3 : vector<16x16x32xf32> to vector<256x32xf32>
    %c0_i32 = arith.constant 0 : i32
    %c2_i32 = arith.constant 2 : i32
    %5 = arith.addi %c0_i32, %c2_i32 : i32
    %c1_i32 = arith.constant 1 : i32
    %6 = scf.for %arg10 = %c0_i32 to %5 step %c1_i32 iter_args(%arg11 = %4) -> (vector<256x32xf32>)  : i32 {
      %c2_i32_24 = arith.constant 2 : i32
      %40 = arith.muli %c2_i32_24, %arg10 : i32
      %41 = vector.shape_cast %arg11 : vector<256x32xf32> to vector<16x16x32xf32>
      %42 = arith.truncf %41 : vector<16x16x32xf32> to vector<16x16x32xbf16>
      %c1_25 = arith.constant 1 : index
      %c1_26 = arith.constant 1 : index
      %c0_27 = arith.constant 0 : index
      %43 = vector.load %arg9[%c1_25, %c1_26, %c0_27] : memref<18x18x32xbf16, #tpu.memory_space<vmem>>, vector<16x16x32xbf16>
      tpu.vector_store %arg9[%c1_25, %c1_26, %c0_27], %42 {strides = array<i32>} : memref<18x18x32xbf16, #tpu.memory_space<vmem>>, vector<16x16x32xbf16>,
      %c0_28 = arith.constant 0 : index
      %c0_29 = arith.constant 0 : index
      %c0_30 = arith.constant 0 : index
      %44 = vector.load %arg9[%c0_28, %c0_29, %c0_30] : memref<18x18x32xbf16, #tpu.memory_space<vmem>>, vector<18x18x32xbf16>
      %45 = vector.extract_strided_slice %44 {offsets = [0, 0, 0], sizes = [18, 16, 32], strides = [1, 1, 1]} : vector<18x18x32xbf16> to vector<18x16x32xbf16>
      %46 = vector.extract_strided_slice %44 {offsets = [0, 1, 0], sizes = [18, 16, 32], strides = [1, 1, 1]} : vector<18x18x32xbf16> to vector<18x16x32xbf16>
      %47 = vector.extract_strided_slice %44 {offsets = [0, 2, 0], sizes = [18, 16, 32], strides = [1, 1, 1]} : vector<18x18x32xbf16> to vector<18x16x32xbf16>
      %48 = tpu.concatenate %45, %46, %47 in 2 : vector<18x16x32xbf16>, vector<18x16x32xbf16>, vector<18x16x32xbf16> -> vector<18x16x96xbf16>
      %49 = arith.index_cast %40 : i32 to index
      %c0_31 = arith.constant 0 : index
      %c0_32 = arith.constant 0 : index
      %50 = vector.load %arg2[%49, %c0_31, %c0_32] : memref<5x288x32xbf16, #tpu.memory_space<vmem>>, vector<1x288x32xbf16>
      %51 = vector.shape_cast %50 : vector<1x288x32xbf16> to vector<288x32xbf16>
      %52 = arith.index_cast %40 : i32 to index
      %c0_33 = arith.constant 0 : index
      %c0_34 = arith.constant 0 : index
      %53 = vector.load %arg3[%52, %c0_33, %c0_34] : memref<5x1x32xf32, #tpu.memory_space<vmem>>, vector<1x1x32xf32>
      %54 = vector.shape_cast %53 : vector<1x1x32xf32> to vector<1x32xf32>
      %55 = vector.extract_strided_slice %48 {offsets = [0, 0, 0], sizes = [16, 16, 96], strides = [1, 1, 1]} : vector<18x16x96xbf16> to vector<16x16x96xbf16>
      %56 = vector.shape_cast %55 : vector<16x16x96xbf16> to vector<256x96xbf16>
      %57 = vector.extract_strided_slice %51 {offsets = [0, 0], sizes = [96, 32], strides = [1, 1]} : vector<288x32xbf16> to vector<96x32xbf16>
      %cst_35 = arith.constant dense<0.000000e+00> : vector<256x32xf32>
      %58 = tpu.matmul %56, %57, %cst_35 {dimension_numbers = #tpu.dot_dimension_numbers<[1], [0], [0], [1], [0, 0, 1, 1], [], []>} : vector<256x96xbf16>, vector<96x32xbf16>, vector<256x32xf32> -> vector<256x32xf32>
      %59 = vector.broadcast %54 : vector<1x32xf32> to vector<256x32xf32>
      %60 = arith.addf %59, %58 : vector<256x32xf32>
      %61 = vector.extract_strided_slice %48 {offsets = [1, 0, 0], sizes = [16, 16, 96], strides = [1, 1, 1]} : vector<18x16x96xbf16> to vector<16x16x96xbf16>
      %62 = vector.shape_cast %61 : vector<16x16x96xbf16> to vector<256x96xbf16>
      %63 = vector.extract_strided_slice %51 {offsets = [96, 0], sizes = [96, 32], strides = [1, 1]} : vector<288x32xbf16> to vector<96x32xbf16>
      %cst_36 = arith.constant dense<0.000000e+00> : vector<256x32xf32>
      %64 = tpu.matmul %62, %63, %cst_36 {dimension_numbers = #tpu.dot_dimension_numbers<[1], [0], [0], [1], [0, 0, 1, 1], [], []>} : vector<256x96xbf16>, vector<96x32xbf16>, vector<256x32xf32> -> vector<256x32xf32>
      %65 = arith.addf %60, %64 : vector<256x32xf32>
      %66 = vector.extract_strided_slice %48 {offsets = [2, 0, 0], sizes = [16, 16, 96], strides = [1, 1, 1]} : vector<18x16x96xbf16> to vector<16x16x96xbf16>
      %67 = vector.shape_cast %66 : vector<16x16x96xbf16> to vector<256x96xbf16>
      %68 = vector.extract_strided_slice %51 {offsets = [192, 0], sizes = [96, 32], strides = [1, 1]} : vector<288x32xbf16> to vector<96x32xbf16>
      %cst_37 = arith.constant dense<0.000000e+00> : vector<256x32xf32>
      %69 = tpu.matmul %67, %68, %cst_37 {dimension_numbers = #tpu.dot_dimension_numbers<[1], [0], [0], [1], [0, 0, 1, 1], [], []>} : vector<256x96xbf16>, vector<96x32xbf16>, vector<256x32xf32> -> vector<256x32xf32>
      %70 = arith.addf %65, %69 : vector<256x32xf32>
      %cst_38 = arith.constant 0.000000e+00 : f32
      %71 = vector.broadcast %cst_38 : f32 to vector<256x32xf32>
      %72 = arith.maximumf %70, %71 : vector<256x32xf32>
      %c2_i32_39 = arith.constant 2 : i32
      %73 = arith.muli %c2_i32_39, %arg10 : i32
      %c1_i32_40 = arith.constant 1 : i32
      %74 = arith.addi %73, %c1_i32_40 : i32
      %75 = vector.shape_cast %72 : vector<256x32xf32> to vector<16x16x32xf32>
      %76 = arith.truncf %75 : vector<16x16x32xf32> to vector<16x16x32xbf16>
      %c1_41 = arith.constant 1 : index
      %c1_42 = arith.constant 1 : index
      %c0_43 = arith.constant 0 : index
      %77 = vector.load %arg9[%c1_41, %c1_42, %c0_43] : memref<18x18x32xbf16, #tpu.memory_space<vmem>>, vector<16x16x32xbf16>
      tpu.vector_store %arg9[%c1_41, %c1_42, %c0_43], %76 {strides = array<i32>} : memref<18x18x32xbf16, #tpu.memory_space<vmem>>, vector<16x16x32xbf16>,
      %c0_44 = arith.constant 0 : index
      %c0_45 = arith.constant 0 : index
      %c0_46 = arith.constant 0 : index
      %78 = vector.load %arg9[%c0_44, %c0_45, %c0_46] : memref<18x18x32xbf16, #tpu.memory_space<vmem>>, vector<18x18x32xbf16>
      %79 = vector.extract_strided_slice %78 {offsets = [0, 0, 0], sizes = [18, 16, 32], strides = [1, 1, 1]} : vector<18x18x32xbf16> to vector<18x16x32xbf16>
      %80 = vector.extract_strided_slice %78 {offsets = [0, 1, 0], sizes = [18, 16, 32], strides = [1, 1, 1]} : vector<18x18x32xbf16> to vector<18x16x32xbf16>
      %81 = vector.extract_strided_slice %78 {offsets = [0, 2, 0], sizes = [18, 16, 32], strides = [1, 1, 1]} : vector<18x18x32xbf16> to vector<18x16x32xbf16>
      %82 = tpu.concatenate %79, %80, %81 in 2 : vector<18x16x32xbf16>, vector<18x16x32xbf16>, vector<18x16x32xbf16> -> vector<18x16x96xbf16>
      %83 = arith.index_cast %74 : i32 to index
      %c0_47 = arith.constant 0 : index
      %c0_48 = arith.constant 0 : index
      %84 = vector.load %arg2[%83, %c0_47, %c0_48] : memref<5x288x32xbf16, #tpu.memory_space<vmem>>, vector<1x288x32xbf16>
      %85 = vector.shape_cast %84 : vector<1x288x32xbf16> to vector<288x32xbf16>
      %86 = arith.index_cast %74 : i32 to index
      %c0_49 = arith.constant 0 : index
      %c0_50 = arith.constant 0 : index
      %87 = vector.load %arg3[%86, %c0_49, %c0_50] : memref<5x1x32xf32, #tpu.memory_space<vmem>>, vector<1x1x32xf32>
      %88 = vector.shape_cast %87 : vector<1x1x32xf32> to vector<1x32xf32>
      %89 = vector.extract_strided_slice %82 {offsets = [0, 0, 0], sizes = [16, 16, 96], strides = [1, 1, 1]} : vector<18x16x96xbf16> to vector<16x16x96xbf16>
      %90 = vector.shape_cast %89 : vector<16x16x96xbf16> to vector<256x96xbf16>
      %91 = vector.extract_strided_slice %85 {offsets = [0, 0], sizes = [96, 32], strides = [1, 1]} : vector<288x32xbf16> to vector<96x32xbf16>
      %cst_51 = arith.constant dense<0.000000e+00> : vector<256x32xf32>
      %92 = tpu.matmul %90, %91, %cst_51 {dimension_numbers = #tpu.dot_dimension_numbers<[1], [0], [0], [1], [0, 0, 1, 1], [], []>} : vector<256x96xbf16>, vector<96x32xbf16>, vector<256x32xf32> -> vector<256x32xf32>
      %93 = vector.broadcast %88 : vector<1x32xf32> to vector<256x32xf32>
      %94 = arith.addf %93, %92 : vector<256x32xf32>
      %95 = vector.extract_strided_slice %82 {offsets = [1, 0, 0], sizes = [16, 16, 96], strides = [1, 1, 1]} : vector<18x16x96xbf16> to vector<16x16x96xbf16>
      %96 = vector.shape_cast %95 : vector<16x16x96xbf16> to vector<256x96xbf16>
      %97 = vector.extract_strided_slice %85 {offsets = [96, 0], sizes = [96, 32], strides = [1, 1]} : vector<288x32xbf16> to vector<96x32xbf16>
      %cst_52 = arith.constant dense<0.000000e+00> : vector<256x32xf32>
      %98 = tpu.matmul %96, %97, %cst_52 {dimension_numbers = #tpu.dot_dimension_numbers<[1], [0], [0], [1], [0, 0, 1, 1], [], []>} : vector<256x96xbf16>, vector<96x32xbf16>, vector<256x32xf32> -> vector<256x32xf32>
      %99 = arith.addf %94, %98 : vector<256x32xf32>
      %100 = vector.extract_strided_slice %82 {offsets = [2, 0, 0], sizes = [16, 16, 96], strides = [1, 1, 1]} : vector<18x16x96xbf16> to vector<16x16x96xbf16>
      %101 = vector.shape_cast %100 : vector<16x16x96xbf16> to vector<256x96xbf16>
      %102 = vector.extract_strided_slice %85 {offsets = [192, 0], sizes = [96, 32], strides = [1, 1]} : vector<288x32xbf16> to vector<96x32xbf16>
      %cst_53 = arith.constant dense<0.000000e+00> : vector<256x32xf32>
      %103 = tpu.matmul %101, %102, %cst_53 {dimension_numbers = #tpu.dot_dimension_numbers<[1], [0], [0], [1], [0, 0, 1, 1], [], []>} : vector<256x96xbf16>, vector<96x32xbf16>, vector<256x32xf32> -> vector<256x32xf32>
      %104 = arith.addf %99, %103 : vector<256x32xf32>
      %cst_54 = arith.constant dense<0.000000e+00> : vector<32xf32>
      %105 = vector.multi_reduction <add>, %104, %cst_54 [0] : vector<256x32xf32> to vector<32xf32>
      %106 = vector.shape_cast %105 : vector<32xf32> to vector<1x32xf32>
      %cst_55 = arith.constant 2.560000e+02 : f32
      %107 = vector.broadcast %cst_55 : f32 to vector<1x32xf32>
      %108 = arith.divf %106, %107 : vector<1x32xf32>
      %109 = arith.index_cast %arg10 : i32 to index
      %c0_56 = arith.constant 0 : index
      %c0_57 = arith.constant 0 : index
      %110 = vector.load %arg4[%109, %c0_56, %c0_57] : memref<2x32x8xf32, #tpu.memory_space<vmem>>, vector<1x32x8xf32>
      %111 = vector.shape_cast %110 : vector<1x32x8xf32> to vector<32x8xf32>
      %cst_58 = arith.constant dense<0.000000e+00> : vector<1x8xf32>
      %112 = tpu.matmul %108, %111, %cst_58 {dimension_numbers = #tpu.dot_dimension_numbers<[1], [0], [0], [1], [0, 0, 1, 1], [], []>} : vector<1x32xf32>, vector<32x8xf32>, vector<1x8xf32> -> vector<1x8xf32>
      %113 = arith.index_cast %arg10 : i32 to index
      %c0_59 = arith.constant 0 : index
      %c0_60 = arith.constant 0 : index
      %114 = vector.load %arg5[%113, %c0_59, %c0_60] : memref<2x1x8xf32, #tpu.memory_space<vmem>>, vector<1x1x8xf32>
      %115 = vector.shape_cast %114 : vector<1x1x8xf32> to vector<1x8xf32>
      %116 = arith.addf %112, %115 : vector<1x8xf32>
      %cst_61 = arith.constant 0.000000e+00 : f32
      %117 = vector.broadcast %cst_61 : f32 to vector<1x8xf32>
      %118 = arith.maximumf %116, %117 : vector<1x8xf32>
      %119 = arith.index_cast %arg10 : i32 to index
      %c0_62 = arith.constant 0 : index
      %c0_63 = arith.constant 0 : index
      %120 = vector.load %arg6[%119, %c0_62, %c0_63] : memref<2x8x32xf32, #tpu.memory_space<vmem>>, vector<1x8x32xf32>
      %121 = vector.shape_cast %120 : vector<1x8x32xf32> to vector<8x32xf32>
      %cst_64 = arith.constant dense<0.000000e+00> : vector<1x32xf32>
      %122 = tpu.matmul %118, %121, %cst_64 {dimension_numbers = #tpu.dot_dimension_numbers<[1], [0], [0], [1], [0, 0, 1, 1], [], []>} : vector<1x8xf32>, vector<8x32xf32>, vector<1x32xf32> -> vector<1x32xf32>
      %123 = arith.index_cast %arg10 : i32 to index
      %c0_65 = arith.constant 0 : index
      %c0_66 = arith.constant 0 : index
      %124 = vector.load %arg7[%123, %c0_65, %c0_66] : memref<2x1x32xf32, #tpu.memory_space<vmem>>, vector<1x1x32xf32>
      %125 = vector.shape_cast %124 : vector<1x1x32xf32> to vector<1x32xf32>
      %126 = arith.addf %122, %125 : vector<1x32xf32>
      %127 = arith.negf %126 : vector<1x32xf32>
      %128 = math.exp %127 : vector<1x32xf32>
      %cst_67 = arith.constant 1.000000e+00 : f32
      %129 = vector.broadcast %cst_67 : f32 to vector<1x32xf32>
      %130 = arith.addf %129, %128 : vector<1x32xf32>
      %131 = arith.divf %129, %130 : vector<1x32xf32>
      %cst_68 = arith.constant 1.000000e+00 : f32
      %132 = vector.broadcast %cst_68 : f32 to vector<1x32xf32>
      %133 = arith.mulf %131, %132 : vector<1x32xf32>
      %134 = vector.broadcast %133 : vector<1x32xf32> to vector<256x32xf32>
      %135 = arith.mulf %104, %134 : vector<256x32xf32>
      %136 = arith.addf %135, %arg11 : vector<256x32xf32>
      scf.yield %136 : vector<256x32xf32>
    }
    %c2_i32_6 = arith.constant 2 : i32
    %7 = vector.shape_cast %6 : vector<256x32xf32> to vector<16x16x32xf32>
    %8 = arith.truncf %7 : vector<16x16x32xf32> to vector<16x16x32xbf16>
    %c1 = arith.constant 1 : index
    %c1_7 = arith.constant 1 : index
    %c0_8 = arith.constant 0 : index
    %9 = vector.load %arg9[%c1, %c1_7, %c0_8] : memref<18x18x32xbf16, #tpu.memory_space<vmem>>, vector<16x16x32xbf16>
    tpu.vector_store %arg9[%c1, %c1_7, %c0_8], %8 {strides = array<i32>} : memref<18x18x32xbf16, #tpu.memory_space<vmem>>, vector<16x16x32xbf16>,
    %c0_9 = arith.constant 0 : index
    %c0_10 = arith.constant 0 : index
    %c0_11 = arith.constant 0 : index
    %10 = vector.load %arg9[%c0_9, %c0_10, %c0_11] : memref<18x18x32xbf16, #tpu.memory_space<vmem>>, vector<18x18x32xbf16>
    %11 = vector.extract_strided_slice %10 {offsets = [0, 0, 0], sizes = [18, 16, 32], strides = [1, 1, 1]} : vector<18x18x32xbf16> to vector<18x16x32xbf16>
    %12 = vector.extract_strided_slice %10 {offsets = [0, 1, 0], sizes = [18, 16, 32], strides = [1, 1, 1]} : vector<18x18x32xbf16> to vector<18x16x32xbf16>
    %13 = vector.extract_strided_slice %10 {offsets = [0, 2, 0], sizes = [18, 16, 32], strides = [1, 1, 1]} : vector<18x18x32xbf16> to vector<18x16x32xbf16>
    %14 = tpu.concatenate %11, %12, %13 in 2 : vector<18x16x32xbf16>, vector<18x16x32xbf16>, vector<18x16x32xbf16> -> vector<18x16x96xbf16>
    %c4 = arith.constant 4 : index
    %c0_12 = arith.constant 0 : index
    %c0_13 = arith.constant 0 : index
    %15 = vector.load %arg2[%c4, %c0_12, %c0_13] : memref<5x288x32xbf16, #tpu.memory_space<vmem>>, vector<1x288x32xbf16>
    %16 = vector.shape_cast %15 : vector<1x288x32xbf16> to vector<288x32xbf16>
    %c4_14 = arith.constant 4 : index
    %c0_15 = arith.constant 0 : index
    %c0_16 = arith.constant 0 : index
    %17 = vector.load %arg3[%c4_14, %c0_15, %c0_16] : memref<5x1x32xf32, #tpu.memory_space<vmem>>, vector<1x1x32xf32>
    %18 = vector.shape_cast %17 : vector<1x1x32xf32> to vector<1x32xf32>
    %19 = vector.extract_strided_slice %14 {offsets = [0, 0, 0], sizes = [16, 16, 96], strides = [1, 1, 1]} : vector<18x16x96xbf16> to vector<16x16x96xbf16>
    %20 = vector.shape_cast %19 : vector<16x16x96xbf16> to vector<256x96xbf16>
    %21 = vector.extract_strided_slice %16 {offsets = [0, 0], sizes = [96, 32], strides = [1, 1]} : vector<288x32xbf16> to vector<96x32xbf16>
    %cst_17 = arith.constant dense<0.000000e+00> : vector<256x32xf32>
    %22 = tpu.matmul %20, %21, %cst_17 {dimension_numbers = #tpu.dot_dimension_numbers<[1], [0], [0], [1], [0, 0, 1, 1], [], []>} : vector<256x96xbf16>, vector<96x32xbf16>, vector<256x32xf32> -> vector<256x32xf32>
    %23 = vector.broadcast %18 : vector<1x32xf32> to vector<256x32xf32>
    %24 = arith.addf %23, %22 : vector<256x32xf32>
    %25 = vector.extract_strided_slice %14 {offsets = [1, 0, 0], sizes = [16, 16, 96], strides = [1, 1, 1]} : vector<18x16x96xbf16> to vector<16x16x96xbf16>
    %26 = vector.shape_cast %25 : vector<16x16x96xbf16> to vector<256x96xbf16>
    %27 = vector.extract_strided_slice %16 {offsets = [96, 0], sizes = [96, 32], strides = [1, 1]} : vector<288x32xbf16> to vector<96x32xbf16>
    %cst_18 = arith.constant dense<0.000000e+00> : vector<256x32xf32>
    %28 = tpu.matmul %26, %27, %cst_18 {dimension_numbers = #tpu.dot_dimension_numbers<[1], [0], [0], [1], [0, 0, 1, 1], [], []>} : vector<256x96xbf16>, vector<96x32xbf16>, vector<256x32xf32> -> vector<256x32xf32>
    %29 = arith.addf %24, %28 : vector<256x32xf32>
    %30 = vector.extract_strided_slice %14 {offsets = [2, 0, 0], sizes = [16, 16, 96], strides = [1, 1, 1]} : vector<18x16x96xbf16> to vector<16x16x96xbf16>
    %31 = vector.shape_cast %30 : vector<16x16x96xbf16> to vector<256x96xbf16>
    %32 = vector.extract_strided_slice %16 {offsets = [192, 0], sizes = [96, 32], strides = [1, 1]} : vector<288x32xbf16> to vector<96x32xbf16>
    %cst_19 = arith.constant dense<0.000000e+00> : vector<256x32xf32>
    %33 = tpu.matmul %31, %32, %cst_19 {dimension_numbers = #tpu.dot_dimension_numbers<[1], [0], [0], [1], [0, 0, 1, 1], [], []>} : vector<256x96xbf16>, vector<96x32xbf16>, vector<256x32xf32> -> vector<256x32xf32>
    %34 = arith.addf %29, %33 : vector<256x32xf32>
    %35 = arith.addf %34, %4 : vector<256x32xf32>
    %36 = vector.shape_cast %35 : vector<256x32xf32> to vector<16x16x32xf32>
    %c0_20 = arith.constant 0 : index
    %c0_21 = arith.constant 0 : index
    %c0_22 = arith.constant 0 : index
    %c0_23 = arith.constant 0 : index
    %37 = vector.load %arg8[%c0_20, %c0_21, %c0_22, %c0_23] : memref<1x16x16x32xf32, #tpu.memory_space<vmem>>, vector<1x16x16x32xf32>
    %38 = vector.shape_cast %37 : vector<1x16x16x32xf32> to vector<16x16x32xf32>
    %39 = vector.shape_cast %36 : vector<16x16x32xf32> to vector<1x16x16x32xf32>
    tpu.vector_store %arg8[%c0_20, %c0_21, %c0_22, %c0_23], %39 {strides = array<i32>} : memref<1x16x16x32xf32, #tpu.memory_space<vmem>>, vector<1x16x16x32xf32>,
    return
  }
  func.func @transform_0(%arg0: i32) -> (i32, i32, i32, i32) {
    %c0_i32 = arith.constant 0 : i32
    %c0_i32_0 = arith.constant 0 : i32
    %c0_i32_1 = arith.constant 0 : i32
    %c0_i32_2 = arith.constant 0 : i32
    return %arg0, %c0_i32, %c0_i32_0, %c0_i32_1 : i32, i32, i32, i32
  }
  func.func @transform_1(%arg0: i32) -> (i32, i32, i32) {
    %c0_i32 = arith.constant 0 : i32
    %c0_i32_0 = arith.constant 0 : i32
    %c0_i32_1 = arith.constant 0 : i32
    %c0_i32_2 = arith.constant 0 : i32
    return %c0_i32, %c0_i32_0, %c0_i32_1 : i32, i32, i32
  }
  func.func @transform_2(%arg0: i32) -> (i32, i32, i32) {
    %c0_i32 = arith.constant 0 : i32
    %c0_i32_0 = arith.constant 0 : i32
    %c0_i32_1 = arith.constant 0 : i32
    %c0_i32_2 = arith.constant 0 : i32
    return %c0_i32, %c0_i32_0, %c0_i32_1 : i32, i32, i32
  }
  func.func @transform_3(%arg0: i32) -> (i32, i32, i32) {
    %c0_i32 = arith.constant 0 : i32
    %c0_i32_0 = arith.constant 0 : i32
    %c0_i32_1 = arith.constant 0 : i32
    %c0_i32_2 = arith.constant 0 : i32
    return %c0_i32, %c0_i32_0, %c0_i32_1 : i32, i32, i32
  }
  func.func @transform_4(%arg0: i32) -> (i32, i32, i32) {
    %c0_i32 = arith.constant 0 : i32
    %c0_i32_0 = arith.constant 0 : i32
    %c0_i32_1 = arith.constant 0 : i32
    %c0_i32_2 = arith.constant 0 : i32
    return %c0_i32, %c0_i32_0, %c0_i32_1 : i32, i32, i32
  }
  func.func @transform_5(%arg0: i32) -> (i32, i32, i32) {
    %c0_i32 = arith.constant 0 : i32
    %c0_i32_0 = arith.constant 0 : i32
    %c0_i32_1 = arith.constant 0 : i32
    %c0_i32_2 = arith.constant 0 : i32
    return %c0_i32, %c0_i32_0, %c0_i32_1 : i32, i32, i32
  }
  func.func @transform_6(%arg0: i32) -> (i32, i32, i32) {
    %c0_i32 = arith.constant 0 : i32
    %c0_i32_0 = arith.constant 0 : i32
    %c0_i32_1 = arith.constant 0 : i32
    %c0_i32_2 = arith.constant 0 : i32
    return %c0_i32, %c0_i32_0, %c0_i32_1 : i32, i32, i32
  }
  func.func @transform_7(%arg0: i32) -> (i32, i32, i32, i32) {
    %c0_i32 = arith.constant 0 : i32
    %c0_i32_0 = arith.constant 0 : i32
    %c0_i32_1 = arith.constant 0 : i32
    %c0_i32_2 = arith.constant 0 : i32
    return %arg0, %c0_i32, %c0_i32_0, %c0_i32_1 : i32, i32, i32, i32
  }
}

</mosaic_0001>

<llo_original>
// kernel: tpu_custom_call.1
$region0: #{tpu_custom_call.1}
  #allocation0 [shape = 'u32[]', space=smem, size = 0x4, offset = 0x4, fixed_abs, tag = 'smem constant byte address 0x4 - core index']
  #allocation1 [shape = 'u32[144,128]{1,0:T(1,128)}', space=vmem, size = 0x12000, scoped, tag = 'internal scratch']
  #allocation2 [shape = 'bf16[18,18,32]{2,1,0:T(8,128)(2,1)}', space=vmem, size = 0x1b000, scoped, tag = 'scratch operand']
  %s0 = inlined_call_operand.vmem [shape: f32[2,16,16,32], index: 0, kind: input, shape index: {}]
  %s1 = inlined_call_operand.vmem [shape: bf16[5,288,32], index: 1, kind: input, shape index: {}]
  %s2 = inlined_call_operand.vmem [shape: f32[5,1,32], index: 2, kind: input, shape index: {}]
  %s3 = inlined_call_operand.vmem [shape: f32[2,32,8], index: 3, kind: input, shape index: {}]
  %s4 = inlined_call_operand.vmem [shape: f32[2,1,8], index: 4, kind: input, shape index: {}]
  %s5 = inlined_call_operand.vmem [shape: f32[2,8,32], index: 5, kind: input, shape index: {}]
  %s6 = inlined_call_operand.vmem [shape: f32[2,1,32], index: 6, kind: input, shape index: {}]
  %s7 = inlined_call_operand.hbm [shape: f32[2,16,16,32], index: 7, kind: output, shape index: {}]
  %s8 = sld [smem:[#allocation0]]
  $region68: #{tpu_custom_call.1} parent=0
    _
  %s10 = ssub.s32 1, %s8
  %s11 = scalar_select 0, %s10, %s8
  $region1: #{tpu_custom_call.1} parent=0
    #allocation3 [shape = 'u8[262144]{0}', space=vmem, size = 0x40000, scoped, tag = 'output window, operand 0']
    #allocation4 [shape = 's32[2]{0}', space=sflag, size = 0x8, scoped, tag = 'scoped memory for tpu_custom_call.1']
    %12 = vsyncpa [#allocation4], 0
    %s13 = scalar_lea.sflag [#allocation4], 1
    %14 = vsyncpa %s13, 0
    loop: start=0, step=1, limit=4
    $region2: #{tpu_custom_call.1} parent=1 // loop_pre_header
      _
    $region3: #{tpu_custom_call.1} parent=1 // loop_header
      %s16 = sphi 0, %s20
      %p17 = scmp.ge.s32.totalorder %s16, 4
      %s26 = sphi 0, %s28
      %s29 = sphi 0, %s26
      %s30 = sphi 0, %s29
      %s46 = sphi 0, %s30
      %s50 = sphi 0, %s50
      %s52 = sphi 0, %s50
      %s53 = sphi 0, %s52
      %s67 = sphi 0, %s53
      %s71 = sphi 0, %s71
      %s73 = sphi 0, %s71
      %s74 = sphi 0, %s73
      %s88 = sphi 0, %s74
      %s92 = sphi 0, %s92
      %s94 = sphi 0, %s92
      %s95 = sphi 0, %s94
      %s109 = sphi 0, %s95
      %s113 = sphi 0, %s113
      %s115 = sphi 0, %s113
      %s116 = sphi 0, %s115
      %s130 = sphi 0, %s116
      %s134 = sphi 0, %s134
      %s136 = sphi 0, %s134
      %s137 = sphi 0, %s136
      %s151 = sphi 0, %s137
      %s155 = sphi 0, %s155
      %s157 = sphi 0, %s155
      %s158 = sphi 0, %s157
      %s172 = sphi 0, %s158
      %s178 = sphi 0, %s180
      %s181 = sphi 0, %s178
      %s182 = sphi 0, %s181
      %s198 = sphi 0, %s182
    $region4: #{tpu_custom_call.1} parent=1 // loop_header_branch
      %19 = sbr.rel (%p17) target = $region8
    $region5: #{tpu_custom_call.1} parent=1 // loop_body
      %s21 = ssub.s32 %s16, 1
      %s22 = ssub.s32 %s16, 2
      %s23 = sadd.s32 %s16, 1
      %s24 = ssub.s32 %s16, %s23
      %p25 = scmp.eq.s32.totalorder %s24, 0
      %s27 = sadd.s32 %s26, 1
      %s28 = scalar_select %p25, %s26, %s27
      %p31 = pneg %p25
      %p32 = scmp.eq.s32.totalorder %s16, 1
      %p33 = por %p31, %p32
      %p34 = scmp.ne.s32.totalorder %s26, %s29
      %p35 = scmp.eq.s32.totalorder %s16, 0
      %p36 = por %p34, %p35
      %p37 = scmp.ne.s32.totalorder %s26, %s29
      %p38 = scmp.eq.s32.totalorder %s21, 1
      %p39 = por %p37, %p38
      %p40 = scmp.ne.s32.totalorder %s29, %s30
      %p41 = scmp.eq.s32.totalorder %s21, 0
      %p42 = por %p40, %p41
      %p43 = scmp.ne.s32.totalorder %s29, %s30
      %p44 = scmp.eq.s32.totalorder %s22, 1
      %p45 = por %p43, %p44
      %p47 = scmp.ne.s32.totalorder %s30, %s46
      %p48 = scmp.eq.s32.totalorder %s22, 0
      %p49 = por %p47, %p48
      %s51 = sadd.s32 %s50, 1
      %p54 = scmp.eq.s32.totalorder %s16, 1
      %p55 = scmp.ne.s32.totalorder %s50, %s52
      %p56 = scmp.eq.s32.totalorder %s16, 0
      %p57 = por %p55, %p56
      %p58 = scmp.ne.s32.totalorder %s50, %s52
      %p59 = scmp.eq.s32.totalorder %s21, 1
      %p60 = por %p58, %p59
      %p61 = scmp.ne.s32.totalorder %s52, %s53
      %p62 = scmp.eq.s32.totalorder %s21, 0
      %p63 = por %p61, %p62
      %p64 = scmp.ne.s32.totalorder %s52, %s53
      %p65 = scmp.eq.s32.totalorder %s22, 1
      %p66 = por %p64, %p65
      %p68 = scmp.ne.s32.totalorder %s53, %s67
      %p69 = scmp.eq.s32.totalorder %s22, 0
      %p70 = por %p68, %p69
      %s72 = sadd.s32 %s71, 1
      %p75 = scmp.eq.s32.totalorder %s16, 1
      %p76 = scmp.ne.s32.totalorder %s71, %s73
      %p77 = scmp.eq.s32.totalorder %s16, 0
      %p78 = por %p76, %p77
      %p79 = scmp.ne.s32.totalorder %s71, %s73
      %p80 = scmp.eq.s32.totalorder %s21, 1
      %p81 = por %p79, %p80
      %p82 = scmp.ne.s32.totalorder %s73, %s74
      %p83 = scmp.eq.s32.totalorder %s21, 0
      %p84 = por %p82, %p83
      %p85 = scmp.ne.s32.totalorder %s73, %s74
      %p86 = scmp.eq.s32.totalorder %s22, 1
      %p87 = por %p85, %p86
      %p89 = scmp.ne.s32.totalorder %s74, %s88
      %p90 = scmp.eq.s32.totalorder %s22, 0
      %p91 = por %p89, %p90
      %s93 = sadd.s32 %s92, 1
      %p96 = scmp.eq.s32.totalorder %s16, 1
      %p97 = scmp.ne.s32.totalorder %s92, %s94
      %p98 = scmp.eq.s32.totalorder %s16, 0
      %p99 = por %p97, %p98
      %p100 = scmp.ne.s32.totalorder %s92, %s94
      %p101 = scmp.eq.s32.totalorder %s21, 1
      %p102 = por %p100, %p101
      %p103 = scmp.ne.s32.totalorder %s94, %s95
      %p104 = scmp.eq.s32.totalorder %s21, 0
      %p105 = por %p103, %p104
      %p106 = scmp.ne.s32.totalorder %s94, %s95
      %p107 = scmp.eq.s32.totalorder %s22, 1
      %p108 = por %p106, %p107
      %p110 = scmp.ne.s32.totalorder %s95, %s109
      %p111 = scmp.eq.s32.totalorder %s22, 0
      %p112 = por %p110, %p111
      %s114 = sadd.s32 %s113, 1
      %p117 = scmp.eq.s32.totalorder %s16, 1
      %p118 = scmp.ne.s32.totalorder %s113, %s115
      %p119 = scmp.eq.s32.totalorder %s16, 0
      %p120 = por %p118, %p119
      %p121 = scmp.ne.s32.totalorder %s113, %s115
      %p122 = scmp.eq.s32.totalorder %s21, 1
      %p123 = por %p121, %p122
      %p124 = scmp.ne.s32.totalorder %s115, %s116
      %p125 = scmp.eq.s32.totalorder %s21, 0
      %p126 = por %p124, %p125
      %p127 = scmp.ne.s32.totalorder %s115, %s116
      %p128 = scmp.eq.s32.totalorder %s22, 1
      %p129 = por %p127, %p128
      %p131 = scmp.ne.s32.totalorder %s116, %s130
      %p132 = scmp.eq.s32.totalorder %s22, 0
      %p133 = por %p131, %p132
      %s135 = sadd.s32 %s134, 1
      %p138 = scmp.eq.s32.totalorder %s16, 1
      %p139 = scmp.ne.s32.totalorder %s134, %s136
      %p140 = scmp.eq.s32.totalorder %s16, 0
      %p141 = por %p139, %p140
      %p142 = scmp.ne.s32.totalorder %s134, %s136
      %p143 = scmp.eq.s32.totalorder %s21, 1
      %p144 = por %p142, %p143
      %p145 = scmp.ne.s32.totalorder %s136, %s137
      %p146 = scmp.eq.s32.totalorder %s21, 0
      %p147 = por %p145, %p146
      %p148 = scmp.ne.s32.totalorder %s136, %s137
      %p149 = scmp.eq.s32.totalorder %s22, 1
      %p150 = por %p148, %p149
      %p152 = scmp.ne.s32.totalorder %s137, %s151
      %p153 = scmp.eq.s32.totalorder %s22, 0
      %p154 = por %p152, %p153
      %s156 = sadd.s32 %s155, 1
      %p159 = scmp.eq.s32.totalorder %s16, 1
      %p160 = scmp.ne.s32.totalorder %s155, %s157
      %p161 = scmp.eq.s32.totalorder %s16, 0
      %p162 = por %p160, %p161
      %p163 = scmp.ne.s32.totalorder %s155, %s157
      %p164 = scmp.eq.s32.totalorder %s21, 1
      %p165 = por %p163, %p164
      %p166 = scmp.ne.s32.totalorder %s157, %s158
      %p167 = scmp.eq.s32.totalorder %s21, 0
      %p168 = por %p166, %p167
      %p169 = scmp.ne.s32.totalorder %s157, %s158
      %p170 = scmp.eq.s32.totalorder %s22, 1
      %p171 = por %p169, %p170
      %p173 = scmp.ne.s32.totalorder %s158, %s172
      %p174 = scmp.eq.s32.totalorder %s22, 0
      %p175 = por %p173, %p174
      %s176 = ssub.s32 %s16, %s23
      %p177 = scmp.eq.s32.totalorder %s176, 0
      %s179 = sadd.s32 %s178, 1
      %s180 = scalar_select %p177, %s178, %s179
      %p183 = pneg %p177
      %p184 = scmp.eq.s32.totalorder %s16, 1
      %p185 = por %p183, %p184
      %p186 = scmp.ne.s32.totalorder %s178, %s181
      %p187 = scmp.eq.s32.totalorder %s16, 0
      %p188 = por %p186, %p187
      %p189 = scmp.ne.s32.totalorder %s178, %s181
      %p190 = scmp.eq.s32.totalorder %s21, 1
      %p191 = por %p189, %p190
      %p192 = scmp.ne.s32.totalorder %s181, %s182
      %p193 = scmp.eq.s32.totalorder %s21, 0
      %p194 = por %p192, %p193
      %p195 = scmp.ne.s32.totalorder %s181, %s182
      %p196 = scmp.eq.s32.totalorder %s22, 1
      %p197 = por %p195, %p196
      %p199 = scmp.ne.s32.totalorder %s182, %s198
      %p200 = scmp.eq.s32.totalorder %s22, 0
      %p201 = por %p199, %p200
      %p202 = scmp.le.s32.totalorder 1, %s16
      %p203 = scmp.lt.s32.totalorder %s16, 3
      %p204 = pnand %p202, %p203
      %p205 = pneg %p204
      // Predicated region
      $region9: #{tpu_custom_call.1} parent=5 // pred_check
        _
      $region10: #{tpu_custom_call.1} parent=5 // pred_check_branch
        %207 = sbr.rel (%p204) target = $region12
      $region11: #{tpu_custom_call.1} parent=5 // pred_region
        %s208 = ssub.s32 %s16, 1
        // Predicated region
        $region13: #{tpu_custom_call.1} parent=11 // pred_check
          %p209 = pneg %p63
        $region14: #{tpu_custom_call.1} parent=11 // pred_check_branch
          %211 = sbr.rel (%p209) target = $region16
        $region15: #{tpu_custom_call.1} parent=11 // pred_region
          _
        $region16: #{tpu_custom_call.1} parent=11 // pred_fallthru
          _
        // Predicated region
        $region17: #{tpu_custom_call.1} parent=11 // pred_check
          %p212 = pneg %p84
        $region18: #{tpu_custom_call.1} parent=11 // pred_check_branch
          %214 = sbr.rel (%p212) target = $region20
        $region19: #{tpu_custom_call.1} parent=11 // pred_region
          _
        $region20: #{tpu_custom_call.1} parent=11 // pred_fallthru
          _
        // Predicated region
        $region21: #{tpu_custom_call.1} parent=11 // pred_check
          %p215 = pneg %p105
        $region22: #{tpu_custom_call.1} parent=11 // pred_check_branch
          %217 = sbr.rel (%p215) target = $region24
        $region23: #{tpu_custom_call.1} parent=11 // pred_region
          _
        $region24: #{tpu_custom_call.1} parent=11 // pred_fallthru
          _
        // Predicated region
        $region25: #{tpu_custom_call.1} parent=11 // pred_check
          %p218 = pneg %p126
        $region26: #{tpu_custom_call.1} parent=11 // pred_check_branch
          %220 = sbr.rel (%p218) target = $region28
        $region27: #{tpu_custom_call.1} parent=11 // pred_region
          _
        $region28: #{tpu_custom_call.1} parent=11 // pred_fallthru
          _
        // Predicated region
        $region29: #{tpu_custom_call.1} parent=11 // pred_check
          %p221 = pneg %p147
        $region30: #{tpu_custom_call.1} parent=11 // pred_check_branch
          %223 = sbr.rel (%p221) target = $region32
        $region31: #{tpu_custom_call.1} parent=11 // pred_region
          _
        $region32: #{tpu_custom_call.1} parent=11 // pred_fallthru
          _
        // Predicated region
        $region33: #{tpu_custom_call.1} parent=11 // pred_check
          %p224 = pneg %p168
        $region34: #{tpu_custom_call.1} parent=11 // pred_check_branch
          %226 = sbr.rel (%p224) target = $region36
        $region35: #{tpu_custom_call.1} parent=11 // pred_region
          _
        $region36: #{tpu_custom_call.1} parent=11 // pred_fallthru
          _
      $region12: #{tpu_custom_call.1} parent=5 // pred_fallthru
        _
      %p227 = scmp.lt.s32.totalorder %s16, 2
      // Predicated region
      $region37: #{tpu_custom_call.1} parent=5 // pred_check
        %p228 = pneg %p227
      $region38: #{tpu_custom_call.1} parent=5 // pred_check_branch
        %230 = sbr.rel (%p228) target = $region40
      $region39: #{tpu_custom_call.1} parent=5 // pred_region
        // Predicated region
        $region41: #{tpu_custom_call.1} parent=39 // pred_check
          %p231 = pneg %p36
        $region42: #{tpu_custom_call.1} parent=39 // pred_check_branch
          %233 = sbr.rel (%p231) target = $region44
        $region43: #{tpu_custom_call.1} parent=39 // pred_region
          %p234 = scmp.lt.s32.totalorder %s16, 1
          %s235 = scalar_select %p234, %s16, 1
          %s236 = smul.addr %s235, 32
          %s237 = smul.addr %s236, 8
          %s238 = scalar_lea.vmem %s0, %s237
        $region44: #{tpu_custom_call.1} parent=39 // pred_fallthru
          _
      $region40: #{tpu_custom_call.1} parent=5 // pred_fallthru
        _
      %p239 = scmp.le.s32.totalorder 1, %s16
      %p240 = scmp.lt.s32.totalorder %s16, 3
      %p241 = pnand %p239, %p240
      %p242 = pneg %p241
      // Predicated region
      $region45: #{tpu_custom_call.1} parent=5 // pred_check
        _
      $region46: #{tpu_custom_call.1} parent=5 // pred_check_branch
        %244 = sbr.rel (%p241) target = $region48
      $region47: #{tpu_custom_call.1} parent=5 // pred_region
        %s245 = ssub.s32 %s16, 1
        %p246 = scmp.lt.s32.totalorder %s21, 1
        %s247 = scalar_select %p246, %s21, 1
        %s248 = smul.addr %s247, 32
        %s249 = smul.addr %s248, 8
        %s250 = scalar_lea.vmem %s0, %s249
        %p251 = pneg %p42
        %p252 = pneg %p39
        %p253 = pneg %p63
        %p254 = pneg %p60
        %p255 = pneg %p84
        %p256 = pneg %p81
        %p257 = pneg %p105
        %p258 = pneg %p102
        %p259 = pneg %p126
        %p260 = pneg %p123
        %p261 = pneg %p147
        %p262 = pneg %p144
        %p263 = pneg %p168
        %p264 = pneg %p165
        %p265 = pneg %p194
        %p266 = pneg %p191
        %s267 = sand.u32 %s181, 1
        %s268 = scalar_lea.sflag [#allocation4], %s267
        %s269 = sand.u32 %s181, 1
        %s270 = smul.addr %s269, 256
        %s271 = scalar_lea.vmem [#allocation3], %s270
        %p272 = scmp.lt.s32.totalorder %s21, 1
        %s273 = scalar_select %p272, %s21, 1
        %s274 = smul.addr %s273, 32
        %s275 = smul.addr %s274, 8
        %s276 = scalar_lea.vmem %s0, %s275
        %vm278 = vcmask 257024
        %279 = vst.msk [vmem:[#allocation2] sm:$0xf] %vm278, 0
        %280 = vst.msk [vmem:[#allocation2 + $0x4] sm:$0xf] %vm278, 0
        %vm281 = vcmask 253952
        %282 = vst.msk [vmem:[#allocation2 + $0x8] sm:$0x1] %vm281, 0
        %283 = vst.msk [vmem:[#allocation2 + $0xc] sm:$0xf] %vm278, 0
        %284 = vst.msk [vmem:[#allocation2 + $0x10] sm:$0xf] %vm278, 0
        %285 = vst.msk [vmem:[#allocation2 + $0x14] sm:$0x1] %vm281, 0
        %286 = vst.msk [vmem:[#allocation2 + $0x18] sm:$0xf] %vm278, 0
        %287 = vst.msk [vmem:[#allocation2 + $0x1c] sm:$0xf] %vm278, 0
        %288 = vst.msk [vmem:[#allocation2 + $0x20] sm:$0x1] %vm281, 0
        %289 = vst.msk [vmem:[#allocation2 + $0x24] sm:$0xf] %vm278, 0
        %290 = vst.msk [vmem:[#allocation2 + $0x28] sm:$0xf] %vm278, 0
        %291 = vst.msk [vmem:[#allocation2 + $0x2c] sm:$0x1] %vm281, 0
        %292 = vst.msk [vmem:[#allocation2 + $0x30] sm:$0xf] %vm278, 0
        %293 = vst.msk [vmem:[#allocation2 + $0x34] sm:$0xf] %vm278, 0
        %294 = vst.msk [vmem:[#allocation2 + $0x38] sm:$0x1] %vm281, 0
        %295 = vst.msk [vmem:[#allocation2 + $0x3c] sm:$0xf] %vm278, 0
        %296 = vst.msk [vmem:[#allocation2 + $0x40] sm:$0xf] %vm278, 0
        %297 = vst.msk [vmem:[#allocation2 + $0x44] sm:$0x1] %vm281, 0
        %298 = vst.msk [vmem:[#allocation2 + $0x48] sm:$0xf] %vm278, 0
        %299 = vst.msk [vmem:[#allocation2 + $0x4c] sm:$0xf] %vm278, 0
        %300 = vst.msk [vmem:[#allocation2 + $0x50] sm:$0x1] %vm281, 0
        %301 = vst.msk [vmem:[#allocation2 + $0x54] sm:$0xf] %vm278, 0
        %302 = vst.msk [vmem:[#allocation2 + $0x58] sm:$0xf] %vm278, 0
        %303 = vst.msk [vmem:[#allocation2 + $0x5c] sm:$0x1] %vm281, 0
        %304 = vst.msk [vmem:[#allocation2 + $0x60] sm:$0xf] %vm278, 0
        %305 = vst.msk [vmem:[#allocation2 + $0x64] sm:$0xf] %vm278, 0
        %306 = vst.msk [vmem:[#allocation2 + $0x68] sm:$0x1] %vm281, 0
        %307 = vst.msk [vmem:[#allocation2 + $0x6c] sm:$0xf] %vm278, 0
        %308 = vst.msk [vmem:[#allocation2 + $0x70] sm:$0xf] %vm278, 0
        %309 = vst.msk [vmem:[#allocation2 + $0x74] sm:$0x1] %vm281, 0
        %310 = vst.msk [vmem:[#allocation2 + $0x78] sm:$0xf] %vm278, 0
        %311 = vst.msk [vmem:[#allocation2 + $0x7c] sm:$0xf] %vm278, 0
        %312 = vst.msk [vmem:[#allocation2 + $0x80] sm:$0x1] %vm281, 0
        %313 = vst.msk [vmem:[#allocation2 + $0x84] sm:$0xf] %vm278, 0
        %314 = vst.msk [vmem:[#allocation2 + $0x88] sm:$0xf] %vm278, 0
        %315 = vst.msk [vmem:[#allocation2 + $0x8c] sm:$0x1] %vm281, 0
        %316 = vst.msk [vmem:[#allocation2 + $0x90] sm:$0xf] %vm278, 0
        %317 = vst.msk [vmem:[#allocation2 + $0x94] sm:$0xf] %vm278, 0
        %318 = vst.msk [vmem:[#allocation2 + $0x98] sm:$0x1] %vm281, 0
        %319 = vst.msk [vmem:[#allocation2 + $0x9c] sm:$0xf] %vm278, 0
        %320 = vst.msk [vmem:[#allocation2 + $0xa0] sm:$0xf] %vm278, 0
        %321 = vst.msk [vmem:[#allocation2 + $0xa4] sm:$0x1] %vm281, 0
        %322 = vst.msk [vmem:[#allocation2 + $0xa8] sm:$0xf] %vm278, 0
        %323 = vst.msk [vmem:[#allocation2 + $0xac] sm:$0xf] %vm278, 0
        %324 = vst.msk [vmem:[#allocation2 + $0xb0] sm:$0x1] %vm281, 0
        %325 = vst.msk [vmem:[#allocation2 + $0xb4] sm:$0xf] %vm278, 0
        %326 = vst.msk [vmem:[#allocation2 + $0xb8] sm:$0xf] %vm278, 0
        %327 = vst.msk [vmem:[#allocation2 + $0xbc] sm:$0x1] %vm281, 0
        %328 = vst.msk [vmem:[#allocation2 + $0xc0] sm:$0xf] %vm278, 0
        %329 = vst.msk [vmem:[#allocation2 + $0xc4] sm:$0xf] %vm278, 0
        %330 = vst.msk [vmem:[#allocation2 + $0xc8] sm:$0x1] %vm281, 0
        %331 = vst.msk [vmem:[#allocation2 + $0xcc] sm:$0xf] %vm278, 0
        %332 = vst.msk [vmem:[#allocation2 + $0xd0] sm:$0xf] %vm278, 0
        %333 = vst.msk [vmem:[#allocation2 + $0xd4] sm:$0x1] %vm281, 0
        %v334 = vld [vmem:[%s276] sm:$0xff]
        %v335 = vld [vmem:[%s276 + $0x8] sm:$0xff]
        %v336 = vld [vmem:[%s276 + $0x10] sm:$0xff]
        %v337 = vld [vmem:[%s276 + $0x18] sm:$0xff]
        %v338 = vld [vmem:[%s276 + $0x20] sm:$0xff]
        %v339 = vld [vmem:[%s276 + $0x28] sm:$0xff]
        %v340 = vld [vmem:[%s276 + $0x30] sm:$0xff]
        %v341 = vld [vmem:[%s276 + $0x38] sm:$0xff]
        %v342 = vld [vmem:[%s276 + $0x40] sm:$0xff]
        %v343 = vld [vmem:[%s276 + $0x48] sm:$0xff]
        %v344 = vld [vmem:[%s276 + $0x50] sm:$0xff]
        %v345 = vld [vmem:[%s276 + $0x58] sm:$0xff]
        %v346 = vld [vmem:[%s276 + $0x60] sm:$0xff]
        %v347 = vld [vmem:[%s276 + $0x68] sm:$0xff]
        %v348 = vld [vmem:[%s276 + $0x70] sm:$0xff]
        %v349 = vld [vmem:[%s276 + $0x78] sm:$0xff]
        %v350 = vld [vmem:[%s276 + $0x80] sm:$0xff]
        %v351 = vld [vmem:[%s276 + $0x88] sm:$0xff]
        %v352 = vld [vmem:[%s276 + $0x90] sm:$0xff]
        %v353 = vld [vmem:[%s276 + $0x98] sm:$0xff]
        %v354 = vld [vmem:[%s276 + $0xa0] sm:$0xff]
        %v355 = vld [vmem:[%s276 + $0xa8] sm:$0xff]
        %v356 = vld [vmem:[%s276 + $0xb0] sm:$0xff]
        %v357 = vld [vmem:[%s276 + $0xb8] sm:$0xff]
        %v358 = vld [vmem:[%s276 + $0xc0] sm:$0xff]
        %v359 = vld [vmem:[%s276 + $0xc8] sm:$0xff]
        %v360 = vld [vmem:[%s276 + $0xd0] sm:$0xff]
        %v361 = vld [vmem:[%s276 + $0xd8] sm:$0xff]
        %v362 = vld [vmem:[%s276 + $0xe0] sm:$0xff]
        %v363 = vld [vmem:[%s276 + $0xe8] sm:$0xff]
        %v364 = vld [vmem:[%s276 + $0xf0] sm:$0xff]
        %v365 = vld [vmem:[%s276 + $0xf8] sm:$0xff]
        loop: start=0, step=1, limit=2
        $region49: #{tpu_custom_call.1} parent=47 // loop_pre_header
          _
        $region50: #{tpu_custom_call.1} parent=47 // loop_header
          %s367 = sphi 0, %s371
          %p368 = scmp.ge.s32.totalorder %s367, 2
          %v372 = vphi %v334, %v4546
          %v373 = vphi %v335, %v4547
          %v374 = vphi %v336, %v4548
          %v375 = vphi %v337, %v4549
          %v376 = vphi %v338, %v4550
          %v377 = vphi %v339, %v4551
          %v378 = vphi %v340, %v4552
          %v379 = vphi %v341, %v4553
          %v380 = vphi %v342, %v4554
          %v381 = vphi %v343, %v4555
          %v382 = vphi %v344, %v4556
          %v383 = vphi %v345, %v4557
          %v384 = vphi %v346, %v4558
          %v385 = vphi %v347, %v4559
          %v386 = vphi %v348, %v4560
          %v387 = vphi %v349, %v4561
          %v388 = vphi %v350, %v4562
          %v389 = vphi %v351, %v4563
          %v390 = vphi %v352, %v4564
          %v391 = vphi %v353, %v4565
          %v392 = vphi %v354, %v4566
          %v393 = vphi %v355, %v4567
          %v394 = vphi %v356, %v4568
          %v395 = vphi %v357, %v4569
          %v396 = vphi %v358, %v4570
          %v397 = vphi %v359, %v4571
          %v398 = vphi %v360, %v4572
          %v399 = vphi %v361, %v4573
          %v400 = vphi %v362, %v4574
          %v401 = vphi %v363, %v4575
          %v402 = vphi %v364, %v4576
          %v403 = vphi %v365, %v4577
        $region51: #{tpu_custom_call.1} parent=47 // loop_header_branch
          %370 = sbr.rel (%p368) target = $region55
        $region52: #{tpu_custom_call.1} parent=47 // loop_body
          %s404 = smul.u32 %s367, 2
          %v405 = vpack.c.bf16 %v373, %v372
          %v406 = vpack.c.bf16 %v375, %v374
          %v407 = vpack.c.bf16 %v377, %v376
          %v408 = vpack.c.bf16 %v379, %v378
          %v409 = vpack.c.bf16 %v381, %v380
          %v410 = vpack.c.bf16 %v383, %v382
          %v411 = vpack.c.bf16 %v385, %v384
          %v412 = vpack.c.bf16 %v387, %v386
          %v413 = vpack.c.bf16 %v389, %v388
          %v414 = vpack.c.bf16 %v391, %v390
          %v415 = vpack.c.bf16 %v393, %v392
          %v416 = vpack.c.bf16 %v395, %v394
          %v417 = vpack.c.bf16 %v397, %v396
          %v418 = vpack.c.bf16 %v399, %v398
          %v419 = vpack.c.bf16 %v401, %v400
          %v420 = vpack.c.bf16 %v403, %v402
          %v437 = vunpack.c.l.b16 %v405
          %v438 = vunpack.c.h.b16 %v405
          %v439 = vunpack.c.l.b16 %v406
          %v440 = vunpack.c.h.b16 %v406
          %v441 = vunpack.c.l.b16 %v407
          %v442 = vunpack.c.h.b16 %v407
          %v443 = vunpack.c.l.b16 %v408
          %v444 = vunpack.c.h.b16 %v408
          %v445 = vunpack.c.l.b16 %v409
          %v446 = vunpack.c.h.b16 %v409
          %v447 = vunpack.c.l.b16 %v410
          %v448 = vunpack.c.h.b16 %v410
          %v449 = vunpack.c.l.b16 %v411
          %v450 = vunpack.c.h.b16 %v411
          %v451 = vunpack.c.l.b16 %v412
          %v452 = vunpack.c.h.b16 %v412
          %v453 = vunpack.c.l.b16 %v413
          %v454 = vunpack.c.h.b16 %v413
          %v455 = vunpack.c.l.b16 %v414
          %v456 = vunpack.c.h.b16 %v414
          %v457 = vunpack.c.l.b16 %v415
          %v458 = vunpack.c.h.b16 %v415
          %v459 = vunpack.c.l.b16 %v416
          %v460 = vunpack.c.h.b16 %v416
          %v461 = vunpack.c.l.b16 %v417
          %v462 = vunpack.c.h.b16 %v417
          %v463 = vunpack.c.l.b16 %v418
          %v464 = vunpack.c.h.b16 %v418
          %v465 = vunpack.c.l.b16 %v419
          %v466 = vunpack.c.h.b16 %v419
          %v467 = vunpack.c.l.b16 %v420
          %v468 = vunpack.c.h.b16 %v420
          %v469 = vpack.c.b16 %v437, %v437
          %v470 = vpack.c.b16 %v438, %v438
          %v471 = vpack.c.b16 %v439, %v439
          %v472 = vpack.c.b16 %v440, %v440
          %v473 = vpack.c.b16 %v441, %v441
          %v474 = vpack.c.b16 %v442, %v442
          %v475 = vpack.c.b16 %v443, %v443
          %v476 = vpack.c.b16 %v444, %v444
          %v477 = vpack.c.b16 %v445, %v445
          %v478 = vpack.c.b16 %v446, %v446
          %v479 = vpack.c.b16 %v447, %v447
          %v480 = vpack.c.b16 %v448, %v448
          %v481 = vpack.c.b16 %v449, %v449
          %v482 = vpack.c.b16 %v450, %v450
          %v483 = vpack.c.b16 %v451, %v451
          %v484 = vpack.c.b16 %v452, %v452
          %v485 = vpack.c.b16 %v453, %v453
          %v486 = vpack.c.b16 %v454, %v454
          %v487 = vpack.c.b16 %v455, %v455
          %v488 = vpack.c.b16 %v456, %v456
          %v489 = vpack.c.b16 %v457, %v457
          %v490 = vpack.c.b16 %v458, %v458
          %v491 = vpack.c.b16 %v459, %v459
          %v492 = vpack.c.b16 %v460, %v460
          %v493 = vpack.c.b16 %v461, %v461
          %v494 = vpack.c.b16 %v462, %v462
          %v495 = vpack.c.b16 %v463, %v463
          %v496 = vpack.c.b16 %v464, %v464
          %v497 = vpack.c.b16 %v465, %v465
          %v498 = vpack.c.b16 %v466, %v466
          %v499 = vpack.c.b16 %v467, %v467
          %v500 = vpack.c.b16 %v468, %v468
          %vm501 = vsmask.f32 256
          %vm502 = vsmask.f32 4368
          %vm503 = vmor %vm501, %vm502
          %v505 = vshrl.u32 %v469, 16
          %v507 = vrot.slane %v505, 7
          %v508 = vshll.u32 %v469, 16
          %v510 = vor.u32 %v507, %v508
          %v511 = vrot.slane %v507, 4
          %v513 = vshrl.u32 %v470, 16
          %v515 = vrot.slane %v513, 7
          %v516 = vshll.u32 %v470, 16
          %v518 = vor.u32 %v515, %v516
          %v519 = vsel %vm503, %v511, %v518
          %v520 = vrot.slane %v515, 4
          %v522 = vshrl.u32 %v471, 16
          %v524 = vrot.slane %v522, 7
          %v525 = vshll.u32 %v471, 16
          %v527 = vor.u32 %v524, %v525
          %v528 = vrot.slane %v524, 4
          %v530 = vshrl.u32 %v472, 16
          %v532 = vrot.slane %v530, 7
          %v533 = vshll.u32 %v472, 16
          %v535 = vor.u32 %v532, %v533
          %v536 = vsel %vm503, %v528, %v535
          %v537 = vrot.slane %v532, 4
          %v539 = vshrl.u32 %v473, 16
          %v541 = vrot.slane %v539, 7
          %v542 = vshll.u32 %v473, 16
          %v544 = vor.u32 %v541, %v542
          %v545 = vrot.slane %v541, 4
          %v547 = vshrl.u32 %v474, 16
          %v549 = vrot.slane %v547, 7
          %v550 = vshll.u32 %v474, 16
          %v552 = vor.u32 %v549, %v550
          %v553 = vsel %vm503, %v545, %v552
          %v554 = vrot.slane %v549, 4
          %v556 = vshrl.u32 %v475, 16
          %v558 = vrot.slane %v556, 7
          %v559 = vshll.u32 %v475, 16
          %v561 = vor.u32 %v558, %v559
          %v562 = vrot.slane %v558, 4
          %v564 = vshrl.u32 %v476, 16
          %v566 = vrot.slane %v564, 7
          %v567 = vshll.u32 %v476, 16
          %v569 = vor.u32 %v566, %v567
          %v570 = vsel %vm503, %v562, %v569
          %v571 = vrot.slane %v566, 4
          %v573 = vshrl.u32 %v477, 16
          %v575 = vrot.slane %v573, 7
          %v576 = vshll.u32 %v477, 16
          %v578 = vor.u32 %v575, %v576
          %v579 = vrot.slane %v575, 4
          %v581 = vshrl.u32 %v478, 16
          %v583 = vrot.slane %v581, 7
          %v584 = vshll.u32 %v478, 16
          %v586 = vor.u32 %v583, %v584
          %v587 = vsel %vm503, %v579, %v586
          %v588 = vrot.slane %v583, 4
          %v590 = vshrl.u32 %v479, 16
          %v592 = vrot.slane %v590, 7
          %v593 = vshll.u32 %v479, 16
          %v595 = vor.u32 %v592, %v593
          %v596 = vrot.slane %v592, 4
          %v598 = vshrl.u32 %v480, 16
          %v600 = vrot.slane %v598, 7
          %v601 = vshll.u32 %v480, 16
          %v603 = vor.u32 %v600, %v601
          %v604 = vsel %vm503, %v596, %v603
          %v605 = vrot.slane %v600, 4
          %v607 = vshrl.u32 %v481, 16
          %v609 = vrot.slane %v607, 7
          %v610 = vshll.u32 %v481, 16
          %v612 = vor.u32 %v609, %v610
          %v613 = vrot.slane %v609, 4
          %v615 = vshrl.u32 %v482, 16
          %v617 = vrot.slane %v615, 7
          %v618 = vshll.u32 %v482, 16
          %v620 = vor.u32 %v617, %v618
          %v621 = vsel %vm503, %v613, %v620
          %v622 = vrot.slane %v617, 4
          %v624 = vshrl.u32 %v483, 16
          %v626 = vrot.slane %v624, 7
          %v627 = vshll.u32 %v483, 16
          %v629 = vor.u32 %v626, %v627
          %v630 = vrot.slane %v626, 4
          %v632 = vshrl.u32 %v484, 16
          %v634 = vrot.slane %v632, 7
          %v635 = vshll.u32 %v484, 16
          %v637 = vor.u32 %v634, %v635
          %v638 = vsel %vm503, %v630, %v637
          %v639 = vrot.slane %v634, 4
          %v641 = vshrl.u32 %v485, 16
          %v643 = vrot.slane %v641, 7
          %v644 = vshll.u32 %v485, 16
          %v646 = vor.u32 %v643, %v644
          %v647 = vrot.slane %v643, 4
          %v649 = vshrl.u32 %v486, 16
          %v651 = vrot.slane %v649, 7
          %v652 = vshll.u32 %v486, 16
          %v654 = vor.u32 %v651, %v652
          %v655 = vsel %vm503, %v647, %v654
          %v656 = vrot.slane %v651, 4
          %v658 = vshrl.u32 %v487, 16
          %v660 = vrot.slane %v658, 7
          %v661 = vshll.u32 %v487, 16
          %v663 = vor.u32 %v660, %v661
          %v664 = vrot.slane %v660, 4
          %v666 = vshrl.u32 %v488, 16
          %v668 = vrot.slane %v666, 7
          %v669 = vshll.u32 %v488, 16
          %v671 = vor.u32 %v668, %v669
          %v672 = vsel %vm503, %v664, %v671
          %v673 = vrot.slane %v668, 4
          %v675 = vshrl.u32 %v489, 16
          %v677 = vrot.slane %v675, 7
          %v678 = vshll.u32 %v489, 16
          %v680 = vor.u32 %v677, %v678
          %v681 = vrot.slane %v677, 4
          %v683 = vshrl.u32 %v490, 16
          %v685 = vrot.slane %v683, 7
          %v686 = vshll.u32 %v490, 16
          %v688 = vor.u32 %v685, %v686
          %v689 = vsel %vm503, %v681, %v688
          %v690 = vrot.slane %v685, 4
          %v692 = vshrl.u32 %v491, 16
          %v694 = vrot.slane %v692, 7
          %v695 = vshll.u32 %v491, 16
          %v697 = vor.u32 %v694, %v695
          %v698 = vrot.slane %v694, 4
          %v700 = vshrl.u32 %v492, 16
          %v702 = vrot.slane %v700, 7
          %v703 = vshll.u32 %v492, 16
          %v705 = vor.u32 %v702, %v703
          %v706 = vsel %vm503, %v698, %v705
          %v707 = vrot.slane %v702, 4
          %v709 = vshrl.u32 %v493, 16
          %v711 = vrot.slane %v709, 7
          %v712 = vshll.u32 %v493, 16
          %v714 = vor.u32 %v711, %v712
          %v715 = vrot.slane %v711, 4
          %v717 = vshrl.u32 %v494, 16
          %v719 = vrot.slane %v717, 7
          %v720 = vshll.u32 %v494, 16
          %v722 = vor.u32 %v719, %v720
          %v723 = vsel %vm503, %v715, %v722
          %v724 = vrot.slane %v719, 4
          %v726 = vshrl.u32 %v495, 16
          %v728 = vrot.slane %v726, 7
          %v729 = vshll.u32 %v495, 16
          %v731 = vor.u32 %v728, %v729
          %v732 = vrot.slane %v728, 4
          %v734 = vshrl.u32 %v496, 16
          %v736 = vrot.slane %v734, 7
          %v737 = vshll.u32 %v496, 16
          %v739 = vor.u32 %v736, %v737
          %v740 = vsel %vm503, %v732, %v739
          %v741 = vrot.slane %v736, 4
          %v743 = vshrl.u32 %v497, 16
          %v745 = vrot.slane %v743, 7
          %v746 = vshll.u32 %v497, 16
          %v748 = vor.u32 %v745, %v746
          %v749 = vrot.slane %v745, 4
          %v751 = vshrl.u32 %v498, 16
          %v753 = vrot.slane %v751, 7
          %v754 = vshll.u32 %v498, 16
          %v756 = vor.u32 %v753, %v754
          %v757 = vsel %vm503, %v749, %v756
          %v758 = vrot.slane %v753, 4
          %v760 = vshrl.u32 %v499, 16
          %v762 = vrot.slane %v760, 7
          %v763 = vshll.u32 %v499, 16
          %v765 = vor.u32 %v762, %v763
          %v766 = vrot.slane %v762, 4
          %v768 = vshrl.u32 %v500, 16
          %v770 = vrot.slane %v768, 7
          %v771 = vshll.u32 %v500, 16
          %v773 = vor.u32 %v770, %v771
          %v774 = vsel %vm503, %v766, %v773
          %v775 = vrot.slane %v770, 4
          %s824 = scalar_lea.vmem [#allocation2], 12
          %vm825 = vcmask 257024
          %vm826 = vsmask.f32 7938
          %vm827 = vmand %vm825, %vm826
          %v828 = vld [vmem:[%s824] sm:$0xf]
          %v829 = vsel %vm827, %v510, %v828
          %830 = vst [vmem:[%s824] sm:$0xf] %v829
          %831 = vst.msk [vmem:[%s824 + $0x4] sm:$0xf] %vm278, %v519
          %vm832 = vcmask 253952
          %vm833 = vmand %vm832, %vm501
          %v834 = vld [vmem:[%s824 + $0x8] sm:$0x1]
          %v835 = vsel %vm833, %v520, %v834
          %836 = vst [vmem:[%s824 + $0x8] sm:$0x1] %v835
          %v837 = vld [vmem:[%s824 + $0xc] sm:$0xf]
          %v838 = vsel %vm827, %v527, %v837
          %839 = vst [vmem:[%s824 + $0xc] sm:$0xf] %v838
          %840 = vst.msk [vmem:[%s824 + $0x10] sm:$0xf] %vm278, %v536
          %v841 = vld [vmem:[%s824 + $0x14] sm:$0x1]
          %v842 = vsel %vm833, %v537, %v841
          %843 = vst [vmem:[%s824 + $0x14] sm:$0x1] %v842
          %v844 = vld [vmem:[%s824 + $0x18] sm:$0xf]
          %v845 = vsel %vm827, %v544, %v844
          %846 = vst [vmem:[%s824 + $0x18] sm:$0xf] %v845
          %847 = vst.msk [vmem:[%s824 + $0x1c] sm:$0xf] %vm278, %v553
          %v848 = vld [vmem:[%s824 + $0x20] sm:$0x1]
          %v849 = vsel %vm833, %v554, %v848
          %850 = vst [vmem:[%s824 + $0x20] sm:$0x1] %v849
          %v851 = vld [vmem:[%s824 + $0x24] sm:$0xf]
          %v852 = vsel %vm827, %v561, %v851
          %853 = vst [vmem:[%s824 + $0x24] sm:$0xf] %v852
          %854 = vst.msk [vmem:[%s824 + $0x28] sm:$0xf] %vm278, %v570
          %v855 = vld [vmem:[%s824 + $0x2c] sm:$0x1]
          %v856 = vsel %vm833, %v571, %v855
          %857 = vst [vmem:[%s824 + $0x2c] sm:$0x1] %v856
          %v858 = vld [vmem:[%s824 + $0x30] sm:$0xf]
          %v859 = vsel %vm827, %v578, %v858
          %860 = vst [vmem:[%s824 + $0x30] sm:$0xf] %v859
          %861 = vst.msk [vmem:[%s824 + $0x34] sm:$0xf] %vm278, %v587
          %v862 = vld [vmem:[%s824 + $0x38] sm:$0x1]
          %v863 = vsel %vm833, %v588, %v862
          %864 = vst [vmem:[%s824 + $0x38] sm:$0x1] %v863
          %v865 = vld [vmem:[%s824 + $0x3c] sm:$0xf]
          %v866 = vsel %vm827, %v595, %v865
          %867 = vst [vmem:[%s824 + $0x3c] sm:$0xf] %v866
          %868 = vst.msk [vmem:[%s824 + $0x40] sm:$0xf] %vm278, %v604
          %v869 = vld [vmem:[%s824 + $0x44] sm:$0x1]
          %v870 = vsel %vm833, %v605, %v869
          %871 = vst [vmem:[%s824 + $0x44] sm:$0x1] %v870
          %v872 = vld [vmem:[%s824 + $0x48] sm:$0xf]
          %v873 = vsel %vm827, %v612, %v872
          %874 = vst [vmem:[%s824 + $0x48] sm:$0xf] %v873
          %875 = vst.msk [vmem:[%s824 + $0x4c] sm:$0xf] %vm278, %v621
          %v876 = vld [vmem:[%s824 + $0x50] sm:$0x1]
          %v877 = vsel %vm833, %v622, %v876
          %878 = vst [vmem:[%s824 + $0x50] sm:$0x1] %v877
          %v879 = vld [vmem:[%s824 + $0x54] sm:$0xf]
          %v880 = vsel %vm827, %v629, %v879
          %881 = vst [vmem:[%s824 + $0x54] sm:$0xf] %v880
          %882 = vst.msk [vmem:[%s824 + $0x58] sm:$0xf] %vm278, %v638
          %v883 = vld [vmem:[%s824 + $0x5c] sm:$0x1]
          %v884 = vsel %vm833, %v639, %v883
          %885 = vst [vmem:[%s824 + $0x5c] sm:$0x1] %v884
          %v886 = vld [vmem:[%s824 + $0x60] sm:$0xf]
          %v887 = vsel %vm827, %v646, %v886
          %888 = vst [vmem:[%s824 + $0x60] sm:$0xf] %v887
          %889 = vst.msk [vmem:[%s824 + $0x64] sm:$0xf] %vm278, %v655
          %v890 = vld [vmem:[%s824 + $0x68] sm:$0x1]
          %v891 = vsel %vm833, %v656, %v890
          %892 = vst [vmem:[%s824 + $0x68] sm:$0x1] %v891
          %v893 = vld [vmem:[%s824 + $0x6c] sm:$0xf]
          %v894 = vsel %vm827, %v663, %v893
          %895 = vst [vmem:[%s824 + $0x6c] sm:$0xf] %v894
          %896 = vst.msk [vmem:[%s824 + $0x70] sm:$0xf] %vm278, %v672
          %v897 = vld [vmem:[%s824 + $0x74] sm:$0x1]
          %v898 = vsel %vm833, %v673, %v897
          %899 = vst [vmem:[%s824 + $0x74] sm:$0x1] %v898
          %v900 = vld [vmem:[%s824 + $0x78] sm:$0xf]
          %v901 = vsel %vm827, %v680, %v900
          %902 = vst [vmem:[%s824 + $0x78] sm:$0xf] %v901
          %903 = vst.msk [vmem:[%s824 + $0x7c] sm:$0xf] %vm278, %v689
          %v904 = vld [vmem:[%s824 + $0x80] sm:$0x1]
          %v905 = vsel %vm833, %v690, %v904
          %906 = vst [vmem:[%s824 + $0x80] sm:$0x1] %v905
          %v907 = vld [vmem:[%s824 + $0x84] sm:$0xf]
          %v908 = vsel %vm827, %v697, %v907
          %909 = vst [vmem:[%s824 + $0x84] sm:$0xf] %v908
          %910 = vst.msk [vmem:[%s824 + $0x88] sm:$0xf] %vm278, %v706
          %v911 = vld [vmem:[%s824 + $0x8c] sm:$0x1]
          %v912 = vsel %vm833, %v707, %v911
          %913 = vst [vmem:[%s824 + $0x8c] sm:$0x1] %v912
          %v914 = vld [vmem:[%s824 + $0x90] sm:$0xf]
          %v915 = vsel %vm827, %v714, %v914
          %916 = vst [vmem:[%s824 + $0x90] sm:$0xf] %v915
          %917 = vst.msk [vmem:[%s824 + $0x94] sm:$0xf] %vm278, %v723
          %v918 = vld [vmem:[%s824 + $0x98] sm:$0x1]
          %v919 = vsel %vm833, %v724, %v918
          %920 = vst [vmem:[%s824 + $0x98] sm:$0x1] %v919
          %v921 = vld [vmem:[%s824 + $0x9c] sm:$0xf]
          %v922 = vsel %vm827, %v731, %v921
          %923 = vst [vmem:[%s824 + $0x9c] sm:$0xf] %v922
          %924 = vst.msk [vmem:[%s824 + $0xa0] sm:$0xf] %vm278, %v740
          %v925 = vld [vmem:[%s824 + $0xa4] sm:$0x1]
          %v926 = vsel %vm833, %v741, %v925
          %927 = vst [vmem:[%s824 + $0xa4] sm:$0x1] %v926
          %v928 = vld [vmem:[%s824 + $0xa8] sm:$0xf]
          %v929 = vsel %vm827, %v748, %v928
          %930 = vst [vmem:[%s824 + $0xa8] sm:$0xf] %v929
          %931 = vst.msk [vmem:[%s824 + $0xac] sm:$0xf] %vm278, %v757
          %v932 = vld [vmem:[%s824 + $0xb0] sm:$0x1]
          %v933 = vsel %vm833, %v758, %v932
          %934 = vst [vmem:[%s824 + $0xb0] sm:$0x1] %v933
          %v935 = vld [vmem:[%s824 + $0xb4] sm:$0xf]
          %v936 = vsel %vm827, %v765, %v935
          %937 = vst [vmem:[%s824 + $0xb4] sm:$0xf] %v936
          %938 = vst.msk [vmem:[%s824 + $0xb8] sm:$0xf] %vm278, %v774
          %v939 = vld [vmem:[%s824 + $0xbc] sm:$0x1]
          %v940 = vsel %vm833, %v775, %v939
          %941 = vst [vmem:[%s824 + $0xbc] sm:$0x1] %v940
          %v942 = vld [vmem:[#allocation2] sm:$0xf]
          %v943 = vld [vmem:[#allocation2 + $0x4] sm:$0xf]
          %v944 = vld [vmem:[#allocation2 + $0x8] sm:$0x1]
          %v945 = vld [vmem:[#allocation2 + $0xc] sm:$0xf]
          %v946 = vld [vmem:[#allocation2 + $0x10] sm:$0xf]
          %v947 = vld [vmem:[#allocation2 + $0x14] sm:$0x1]
          %v948 = vld [vmem:[#allocation2 + $0x18] sm:$0xf]
          %v949 = vld [vmem:[#allocation2 + $0x1c] sm:$0xf]
          %v950 = vld [vmem:[#allocation2 + $0x20] sm:$0x1]
          %v951 = vld [vmem:[#allocation2 + $0x24] sm:$0xf]
          %v952 = vld [vmem:[#allocation2 + $0x28] sm:$0xf]
          %v953 = vld [vmem:[#allocation2 + $0x2c] sm:$0x1]
          %v954 = vld [vmem:[#allocation2 + $0x30] sm:$0xf]
          %v955 = vld [vmem:[#allocation2 + $0x34] sm:$0xf]
          %v956 = vld [vmem:[#allocation2 + $0x38] sm:$0x1]
          %v957 = vld [vmem:[#allocation2 + $0x3c] sm:$0xf]
          %v958 = vld [vmem:[#allocation2 + $0x40] sm:$0xf]
          %v959 = vld [vmem:[#allocation2 + $0x44] sm:$0x1]
          %v960 = vld [vmem:[#allocation2 + $0x48] sm:$0xf]
          %v961 = vld [vmem:[#allocation2 + $0x4c] sm:$0xf]
          %v962 = vld [vmem:[#allocation2 + $0x50] sm:$0x1]
          %v963 = vld [vmem:[#allocation2 + $0x54] sm:$0xf]
          %v964 = vld [vmem:[#allocation2 + $0x58] sm:$0xf]
          %v965 = vld [vmem:[#allocation2 + $0x5c] sm:$0x1]
          %v966 = vld [vmem:[#allocation2 + $0x60] sm:$0xf]
          %v967 = vld [vmem:[#allocation2 + $0x64] sm:$0xf]
          %v968 = vld [vmem:[#allocation2 + $0x68] sm:$0x1]
          %v969 = vld [vmem:[#allocation2 + $0x6c] sm:$0xf]
          %v970 = vld [vmem:[#allocation2 + $0x70] sm:$0xf]
          %v971 = vld [vmem:[#allocation2 + $0x74] sm:$0x1]
          %v972 = vld [vmem:[#allocation2 + $0x78] sm:$0xf]
          %v973 = vld [vmem:[#allocation2 + $0x7c] sm:$0xf]
          %v974 = vld [vmem:[#allocation2 + $0x80] sm:$0x1]
          %v975 = vld [vmem:[#allocation2 + $0x84] sm:$0xf]
          %v976 = vld [vmem:[#allocation2 + $0x88] sm:$0xf]
          %v977 = vld [vmem:[#allocation2 + $0x8c] sm:$0x1]
          %v978 = vld [vmem:[#allocation2 + $0x90] sm:$0xf]
          %v979 = vld [vmem:[#allocation2 + $0x94] sm:$0xf]
          %v980 = vld [vmem:[#allocation2 + $0x98] sm:$0x1]
          %v981 = vld [vmem:[#allocation2 + $0x9c] sm:$0xf]
          %v982 = vld [vmem:[#allocation2 + $0xa0] sm:$0xf]
          %v983 = vld [vmem:[#allocation2 + $0xa4] sm:$0x1]
          %v984 = vld [vmem:[#allocation2 + $0xa8] sm:$0xf]
          %v985 = vld [vmem:[#allocation2 + $0xac] sm:$0xf]
          %v986 = vld [vmem:[#allocation2 + $0xb0] sm:$0x1]
          %v987 = vld [vmem:[#allocation2 + $0xb4] sm:$0xf]
          %v988 = vld [vmem:[#allocation2 + $0xb8] sm:$0xf]
          %v989 = vld [vmem:[#allocation2 + $0xbc] sm:$0x1]
          %v990 = vld [vmem:[#allocation2 + $0xc0] sm:$0xf]
          %v991 = vld [vmem:[#allocation2 + $0xc4] sm:$0xf]
          %v992 = vld [vmem:[#allocation2 + $0xc8] sm:$0x1]
          %v993 = vld [vmem:[#allocation2 + $0xcc] sm:$0xf]
          %v994 = vld [vmem:[#allocation2 + $0xd0] sm:$0xf]
          %v995 = vld [vmem:[#allocation2 + $0xd4] sm:$0x1]
          %v1032 = vunpack.c.l.b16 %v942
          %v1033 = vunpack.c.l.b16 %v943
          %v1034 = vunpack.c.l.b16 %v945
          %v1035 = vunpack.c.l.b16 %v946
          %v1036 = vunpack.c.l.b16 %v948
          %v1037 = vunpack.c.l.b16 %v949
          %v1038 = vunpack.c.l.b16 %v951
          %v1039 = vunpack.c.l.b16 %v952
          %v1040 = vunpack.c.l.b16 %v954
          %v1041 = vunpack.c.l.b16 %v955
          %v1042 = vunpack.c.l.b16 %v957
          %v1043 = vunpack.c.l.b16 %v958
          %v1044 = vunpack.c.l.b16 %v960
          %v1045 = vunpack.c.l.b16 %v961
          %v1046 = vunpack.c.l.b16 %v963
          %v1047 = vunpack.c.l.b16 %v964
          %v1048 = vunpack.c.l.b16 %v966
          %v1049 = vunpack.c.l.b16 %v967
          %v1050 = vunpack.c.l.b16 %v969
          %v1051 = vunpack.c.l.b16 %v970
          %v1052 = vunpack.c.l.b16 %v972
          %v1053 = vunpack.c.l.b16 %v973
          %v1054 = vunpack.c.l.b16 %v975
          %v1055 = vunpack.c.l.b16 %v976
          %v1056 = vunpack.c.l.b16 %v978
          %v1057 = vunpack.c.l.b16 %v979
          %v1058 = vunpack.c.l.b16 %v981
          %v1059 = vunpack.c.l.b16 %v982
          %v1060 = vunpack.c.l.b16 %v984
          %v1061 = vunpack.c.l.b16 %v985
          %v1062 = vunpack.c.l.b16 %v987
          %v1063 = vunpack.c.l.b16 %v988
          %v1064 = vunpack.c.l.b16 %v990
          %v1065 = vunpack.c.l.b16 %v991
          %v1066 = vunpack.c.l.b16 %v993
          %v1067 = vunpack.c.l.b16 %v994
          %v1068 = vpack.c.b16 %v1033, %v1032
          %v1069 = vpack.c.b16 %v1035, %v1034
          %v1070 = vpack.c.b16 %v1037, %v1036
          %v1071 = vpack.c.b16 %v1039, %v1038
          %v1072 = vpack.c.b16 %v1041, %v1040
          %v1073 = vpack.c.b16 %v1043, %v1042
          %v1074 = vpack.c.b16 %v1045, %v1044
          %v1075 = vpack.c.b16 %v1047, %v1046
          %v1076 = vpack.c.b16 %v1049, %v1048
          %v1077 = vpack.c.b16 %v1051, %v1050
          %v1078 = vpack.c.b16 %v1053, %v1052
          %v1079 = vpack.c.b16 %v1055, %v1054
          %v1080 = vpack.c.b16 %v1057, %v1056
          %v1081 = vpack.c.b16 %v1059, %v1058
          %v1082 = vpack.c.b16 %v1061, %v1060
          %v1083 = vpack.c.b16 %v1063, %v1062
          %v1084 = vpack.c.b16 %v1065, %v1064
          %v1085 = vpack.c.b16 %v1067, %v1066
          %v1104 = vunpack.c.l.b16 %v944
          %v1105 = vunpack.c.l.b16 %v947
          %v1106 = vunpack.c.l.b16 %v950
          %v1107 = vunpack.c.l.b16 %v953
          %v1108 = vunpack.c.l.b16 %v956
          %v1109 = vunpack.c.l.b16 %v959
          %v1110 = vunpack.c.l.b16 %v962
          %v1111 = vunpack.c.l.b16 %v965
          %v1112 = vunpack.c.l.b16 %v968
          %v1113 = vunpack.c.l.b16 %v971
          %v1114 = vunpack.c.l.b16 %v974
          %v1115 = vunpack.c.l.b16 %v977
          %v1116 = vunpack.c.l.b16 %v980
          %v1117 = vunpack.c.l.b16 %v983
          %v1118 = vunpack.c.l.b16 %v986
          %v1119 = vunpack.c.l.b16 %v989
          %v1120 = vunpack.c.l.b16 %v992
          %v1121 = vunpack.c.l.b16 %v995
          %v1122 = vpack.c.b16 %v1104, %v1104
          %v1123 = vpack.c.b16 %v1105, %v1105
          %v1124 = vpack.c.b16 %v1106, %v1106
          %v1125 = vpack.c.b16 %v1107, %v1107
          %v1126 = vpack.c.b16 %v1108, %v1108
          %v1127 = vpack.c.b16 %v1109, %v1109
          %v1128 = vpack.c.b16 %v1110, %v1110
          %v1129 = vpack.c.b16 %v1111, %v1111
          %v1130 = vpack.c.b16 %v1112, %v1112
          %v1131 = vpack.c.b16 %v1113, %v1113
          %v1132 = vpack.c.b16 %v1114, %v1114
          %v1133 = vpack.c.b16 %v1115, %v1115
          %v1134 = vpack.c.b16 %v1116, %v1116
          %v1135 = vpack.c.b16 %v1117, %v1117
          %v1136 = vpack.c.b16 %v1118, %v1118
          %v1137 = vpack.c.b16 %v1119, %v1119
          %v1138 = vpack.c.b16 %v1120, %v1120
          %v1139 = vpack.c.b16 %v1121, %v1121
          %vm1140 = vsmask.f32 7424
          %v1142 = vshrl.u32 %v1068, 16
          %v1144 = vshll.u32 %v1068, 16
          %v1146 = vrot.slane %v1144, 1
          %v1147 = vor.u32 %v1142, %v1146
          %v1149 = vshll.u32 %v1122, 16
          %v1151 = vrot.slane %v1149, 1
          %v1152 = vsel %vm1140, %v1147, %v1151
          %v1154 = vshrl.u32 %v1069, 16
          %v1156 = vshll.u32 %v1069, 16
          %v1158 = vrot.slane %v1156, 1
          %v1159 = vor.u32 %v1154, %v1158
          %v1161 = vshll.u32 %v1123, 16
          %v1163 = vrot.slane %v1161, 1
          %v1164 = vsel %vm1140, %v1159, %v1163
          %v1166 = vshrl.u32 %v1070, 16
          %v1168 = vshll.u32 %v1070, 16
          %v1170 = vrot.slane %v1168, 1
          %v1171 = vor.u32 %v1166, %v1170
          %v1173 = vshll.u32 %v1124, 16
          %v1175 = vrot.slane %v1173, 1
          %v1176 = vsel %vm1140, %v1171, %v1175
          %v1178 = vshrl.u32 %v1071, 16
          %v1180 = vshll.u32 %v1071, 16
          %v1182 = vrot.slane %v1180, 1
          %v1183 = vor.u32 %v1178, %v1182
          %v1185 = vshll.u32 %v1125, 16
          %v1187 = vrot.slane %v1185, 1
          %v1188 = vsel %vm1140, %v1183, %v1187
          %v1190 = vshrl.u32 %v1072, 16
          %v1192 = vshll.u32 %v1072, 16
          %v1194 = vrot.slane %v1192, 1
          %v1195 = vor.u32 %v1190, %v1194
          %v1197 = vshll.u32 %v1126, 16
          %v1199 = vrot.slane %v1197, 1
          %v1200 = vsel %vm1140, %v1195, %v1199
          %v1202 = vshrl.u32 %v1073, 16
          %v1204 = vshll.u32 %v1073, 16
          %v1206 = vrot.slane %v1204, 1
          %v1207 = vor.u32 %v1202, %v1206
          %v1209 = vshll.u32 %v1127, 16
          %v1211 = vrot.slane %v1209, 1
          %v1212 = vsel %vm1140, %v1207, %v1211
          %v1214 = vshrl.u32 %v1074, 16
          %v1216 = vshll.u32 %v1074, 16
          %v1218 = vrot.slane %v1216, 1
          %v1219 = vor.u32 %v1214, %v1218
          %v1221 = vshll.u32 %v1128, 16
          %v1223 = vrot.slane %v1221, 1
          %v1224 = vsel %vm1140, %v1219, %v1223
          %v1226 = vshrl.u32 %v1075, 16
          %v1228 = vshll.u32 %v1075, 16
          %v1230 = vrot.slane %v1228, 1
          %v1231 = vor.u32 %v1226, %v1230
          %v1233 = vshll.u32 %v1129, 16
          %v1235 = vrot.slane %v1233, 1
          %v1236 = vsel %vm1140, %v1231, %v1235
          %v1238 = vshrl.u32 %v1076, 16
          %v1240 = vshll.u32 %v1076, 16
          %v1242 = vrot.slane %v1240, 1
          %v1243 = vor.u32 %v1238, %v1242
          %v1245 = vshll.u32 %v1130, 16
          %v1247 = vrot.slane %v1245, 1
          %v1248 = vsel %vm1140, %v1243, %v1247
          %v1250 = vshrl.u32 %v1077, 16
          %v1252 = vshll.u32 %v1077, 16
          %v1254 = vrot.slane %v1252, 1
          %v1255 = vor.u32 %v1250, %v1254
          %v1257 = vshll.u32 %v1131, 16
          %v1259 = vrot.slane %v1257, 1
          %v1260 = vsel %vm1140, %v1255, %v1259
          %v1262 = vshrl.u32 %v1078, 16
          %v1264 = vshll.u32 %v1078, 16
          %v1266 = vrot.slane %v1264, 1
          %v1267 = vor.u32 %v1262, %v1266
          %v1269 = vshll.u32 %v1132, 16
          %v1271 = vrot.slane %v1269, 1
          %v1272 = vsel %vm1140, %v1267, %v1271
          %v1274 = vshrl.u32 %v1079, 16
          %v1276 = vshll.u32 %v1079, 16
          %v1278 = vrot.slane %v1276, 1
          %v1279 = vor.u32 %v1274, %v1278
          %v1281 = vshll.u32 %v1133, 16
          %v1283 = vrot.slane %v1281, 1
          %v1284 = vsel %vm1140, %v1279, %v1283
          %v1286 = vshrl.u32 %v1080, 16
          %v1288 = vshll.u32 %v1080, 16
          %v1290 = vrot.slane %v1288, 1
          %v1291 = vor.u32 %v1286, %v1290
          %v1293 = vshll.u32 %v1134, 16
          %v1295 = vrot.slane %v1293, 1
          %v1296 = vsel %vm1140, %v1291, %v1295
          %v1298 = vshrl.u32 %v1081, 16
          %v1300 = vshll.u32 %v1081, 16
          %v1302 = vrot.slane %v1300, 1
          %v1303 = vor.u32 %v1298, %v1302
          %v1305 = vshll.u32 %v1135, 16
          %v1307 = vrot.slane %v1305, 1
          %v1308 = vsel %vm1140, %v1303, %v1307
          %v1310 = vshrl.u32 %v1082, 16
          %v1312 = vshll.u32 %v1082, 16
          %v1314 = vrot.slane %v1312, 1
          %v1315 = vor.u32 %v1310, %v1314
          %v1317 = vshll.u32 %v1136, 16
          %v1319 = vrot.slane %v1317, 1
          %v1320 = vsel %vm1140, %v1315, %v1319
          %v1322 = vshrl.u32 %v1083, 16
          %v1324 = vshll.u32 %v1083, 16
          %v1326 = vrot.slane %v1324, 1
          %v1327 = vor.u32 %v1322, %v1326
          %v1329 = vshll.u32 %v1137, 16
          %v1331 = vrot.slane %v1329, 1
          %v1332 = vsel %vm1140, %v1327, %v1331
          %v1334 = vshrl.u32 %v1084, 16
          %v1336 = vshll.u32 %v1084, 16
          %v1338 = vrot.slane %v1336, 1
          %v1339 = vor.u32 %v1334, %v1338
          %v1341 = vshll.u32 %v1138, 16
          %v1343 = vrot.slane %v1341, 1
          %v1344 = vsel %vm1140, %v1339, %v1343
          %v1346 = vshrl.u32 %v1085, 16
          %v1348 = vshll.u32 %v1085, 16
          %v1350 = vrot.slane %v1348, 1
          %v1351 = vor.u32 %v1346, %v1350
          %v1353 = vshll.u32 %v1139, 16
          %v1355 = vrot.slane %v1353, 1
          %v1356 = vsel %vm1140, %v1351, %v1355
          %1357 = vrot.lane.b32.xlu0 %v1152, 32
          %v1358 = vpop.permute.xlu0 %1357
          %1359 = vrot.lane.b32.xlu0 %v1164, 32
          %v1360 = vpop.permute.xlu0 %1359
          %1361 = vrot.lane.b32.xlu0 %v1176, 32
          %v1362 = vpop.permute.xlu0 %1361
          %1363 = vrot.lane.b32.xlu0 %v1188, 32
          %v1364 = vpop.permute.xlu0 %1363
          %1365 = vrot.lane.b32.xlu0 %v1200, 32
          %v1366 = vpop.permute.xlu0 %1365
          %1367 = vrot.lane.b32.xlu0 %v1212, 32
          %v1368 = vpop.permute.xlu0 %1367
          %1369 = vrot.lane.b32.xlu0 %v1224, 32
          %v1370 = vpop.permute.xlu0 %1369
          %1371 = vrot.lane.b32.xlu0 %v1236, 32
          %v1372 = vpop.permute.xlu0 %1371
          %1373 = vrot.lane.b32.xlu0 %v1248, 32
          %v1374 = vpop.permute.xlu0 %1373
          %1375 = vrot.lane.b32.xlu0 %v1260, 32
          %v1376 = vpop.permute.xlu0 %1375
          %1377 = vrot.lane.b32.xlu0 %v1272, 32
          %v1378 = vpop.permute.xlu0 %1377
          %1379 = vrot.lane.b32.xlu0 %v1284, 32
          %v1380 = vpop.permute.xlu0 %1379
          %1381 = vrot.lane.b32.xlu0 %v1296, 32
          %v1382 = vpop.permute.xlu0 %1381
          %1383 = vrot.lane.b32.xlu0 %v1308, 32
          %v1384 = vpop.permute.xlu0 %1383
          %1385 = vrot.lane.b32.xlu0 %v1320, 32
          %v1386 = vpop.permute.xlu0 %1385
          %1387 = vrot.lane.b32.xlu0 %v1332, 32
          %v1388 = vpop.permute.xlu0 %1387
          %1389 = vrot.lane.b32.xlu0 %v1344, 32
          %v1390 = vpop.permute.xlu0 %1389
          %1391 = vrot.lane.b32.xlu0 %v1356, 32
          %v1392 = vpop.permute.xlu0 %1391
          %vm1393 = vcmask 1046528
          %v1394 = vrot.slane %v1068, 1
          %v1395 = vrot.slane %v1122, 1
          %v1396 = vsel %vm1393, %v1394, %v1395
          %v1397 = vrot.slane %v1069, 1
          %v1398 = vrot.slane %v1123, 1
          %v1399 = vsel %vm1393, %v1397, %v1398
          %v1400 = vrot.slane %v1070, 1
          %v1401 = vrot.slane %v1124, 1
          %v1402 = vsel %vm1393, %v1400, %v1401
          %v1403 = vrot.slane %v1071, 1
          %v1404 = vrot.slane %v1125, 1
          %v1405 = vsel %vm1393, %v1403, %v1404
          %v1406 = vrot.slane %v1072, 1
          %v1407 = vrot.slane %v1126, 1
          %v1408 = vsel %vm1393, %v1406, %v1407
          %v1409 = vrot.slane %v1073, 1
          %v1410 = vrot.slane %v1127, 1
          %v1411 = vsel %vm1393, %v1409, %v1410
          %v1412 = vrot.slane %v1074, 1
          %v1413 = vrot.slane %v1128, 1
          %v1414 = vsel %vm1393, %v1412, %v1413
          %v1415 = vrot.slane %v1075, 1
          %v1416 = vrot.slane %v1129, 1
          %v1417 = vsel %vm1393, %v1415, %v1416
          %v1418 = vrot.slane %v1076, 1
          %v1419 = vrot.slane %v1130, 1
          %v1420 = vsel %vm1393, %v1418, %v1419
          %v1421 = vrot.slane %v1077, 1
          %v1422 = vrot.slane %v1131, 1
          %v1423 = vsel %vm1393, %v1421, %v1422
          %v1424 = vrot.slane %v1078, 1
          %v1425 = vrot.slane %v1132, 1
          %v1426 = vsel %vm1393, %v1424, %v1425
          %v1427 = vrot.slane %v1079, 1
          %v1428 = vrot.slane %v1133, 1
          %v1429 = vsel %vm1393, %v1427, %v1428
          %v1430 = vrot.slane %v1080, 1
          %v1431 = vrot.slane %v1134, 1
          %v1432 = vsel %vm1393, %v1430, %v1431
          %v1433 = vrot.slane %v1081, 1
          %v1434 = vrot.slane %v1135, 1
          %v1435 = vsel %vm1393, %v1433, %v1434
          %v1436 = vrot.slane %v1082, 1
          %v1437 = vrot.slane %v1136, 1
          %v1438 = vsel %vm1393, %v1436, %v1437
          %v1439 = vrot.slane %v1083, 1
          %v1440 = vrot.slane %v1137, 1
          %v1441 = vsel %vm1393, %v1439, %v1440
          %v1442 = vrot.slane %v1084, 1
          %v1443 = vrot.slane %v1138, 1
          %v1444 = vsel %vm1393, %v1442, %v1443
          %v1445 = vrot.slane %v1085, 1
          %v1446 = vrot.slane %v1139, 1
          %v1447 = vsel %vm1393, %v1445, %v1446
          %1448 = vrot.lane.b32.xlu0 %v1396, 64
          %v1449 = vpop.permute.xlu0 %1448
          %1450 = vrot.lane.b32.xlu0 %v1399, 64
          %v1451 = vpop.permute.xlu0 %1450
          %1452 = vrot.lane.b32.xlu0 %v1402, 64
          %v1453 = vpop.permute.xlu0 %1452
          %1454 = vrot.lane.b32.xlu0 %v1405, 64
          %v1455 = vpop.permute.xlu0 %1454
          %1456 = vrot.lane.b32.xlu0 %v1408, 64
          %v1457 = vpop.permute.xlu0 %1456
          %1458 = vrot.lane.b32.xlu0 %v1411, 64
          %v1459 = vpop.permute.xlu0 %1458
          %1460 = vrot.lane.b32.xlu0 %v1414, 64
          %v1461 = vpop.permute.xlu0 %1460
          %1462 = vrot.lane.b32.xlu0 %v1417, 64
          %v1463 = vpop.permute.xlu0 %1462
          %1464 = vrot.lane.b32.xlu0 %v1420, 64
          %v1465 = vpop.permute.xlu0 %1464
          %1466 = vrot.lane.b32.xlu0 %v1423, 64
          %v1467 = vpop.permute.xlu0 %1466
          %1468 = vrot.lane.b32.xlu0 %v1426, 64
          %v1469 = vpop.permute.xlu0 %1468
          %1470 = vrot.lane.b32.xlu0 %v1429, 64
          %v1471 = vpop.permute.xlu0 %1470
          %1472 = vrot.lane.b32.xlu0 %v1432, 64
          %v1473 = vpop.permute.xlu0 %1472
          %1474 = vrot.lane.b32.xlu0 %v1435, 64
          %v1475 = vpop.permute.xlu0 %1474
          %1476 = vrot.lane.b32.xlu0 %v1438, 64
          %v1477 = vpop.permute.xlu0 %1476
          %1478 = vrot.lane.b32.xlu0 %v1441, 64
          %v1479 = vpop.permute.xlu0 %1478
          %1480 = vrot.lane.b32.xlu0 %v1444, 64
          %v1481 = vpop.permute.xlu0 %1480
          %1482 = vrot.lane.b32.xlu0 %v1447, 64
          %v1483 = vpop.permute.xlu0 %1482
          %vm1484 = vcmask 261120
          %v1486 = vsel %vm1484, %v1068, %v1358
          %v1488 = vsel %vm1484, %v1069, %v1360
          %v1490 = vsel %vm1484, %v1070, %v1362
          %v1492 = vsel %vm1484, %v1071, %v1364
          %v1494 = vsel %vm1484, %v1072, %v1366
          %v1496 = vsel %vm1484, %v1073, %v1368
          %v1498 = vsel %vm1484, %v1074, %v1370
          %v1500 = vsel %vm1484, %v1075, %v1372
          %v1502 = vsel %vm1484, %v1076, %v1374
          %v1504 = vsel %vm1484, %v1077, %v1376
          %v1506 = vsel %vm1484, %v1078, %v1378
          %v1508 = vsel %vm1484, %v1079, %v1380
          %v1510 = vsel %vm1484, %v1080, %v1382
          %v1512 = vsel %vm1484, %v1081, %v1384
          %v1514 = vsel %vm1484, %v1082, %v1386
          %v1516 = vsel %vm1484, %v1083, %v1388
          %v1518 = vsel %vm1484, %v1084, %v1390
          %v1520 = vsel %vm1484, %v1085, %v1392
          %vm1521 = vcmask 523264
          %v1523 = vsel %vm1521, %v1486, %v1449
          %v1525 = vsel %vm1521, %v1488, %v1451
          %v1527 = vsel %vm1521, %v1490, %v1453
          %v1529 = vsel %vm1521, %v1492, %v1455
          %v1531 = vsel %vm1521, %v1494, %v1457
          %v1533 = vsel %vm1521, %v1496, %v1459
          %v1535 = vsel %vm1521, %v1498, %v1461
          %v1537 = vsel %vm1521, %v1500, %v1463
          %v1539 = vsel %vm1521, %v1502, %v1465
          %v1541 = vsel %vm1521, %v1504, %v1467
          %v1543 = vsel %vm1521, %v1506, %v1469
          %v1545 = vsel %vm1521, %v1508, %v1471
          %v1547 = vsel %vm1521, %v1510, %v1473
          %v1549 = vsel %vm1521, %v1512, %v1475
          %v1551 = vsel %vm1521, %v1514, %v1477
          %v1553 = vsel %vm1521, %v1516, %v1479
          %v1555 = vsel %vm1521, %v1518, %v1481
          %v1557 = vsel %vm1521, %v1520, %v1483
          %s1558 = smul.u32 %s404, 36
          %s1559 = smul.addr %s1558, 4
          %s1560 = scalar_lea.vmem %s1, %s1559
          %v1561 = vld [vmem:[%s1560] sm:$0xf]
          %v1562 = vld [vmem:[%s1560 + $0x4] sm:$0xf]
          %v1563 = vld [vmem:[%s1560 + $0x8] sm:$0xf]
          %v1564 = vld [vmem:[%s1560 + $0xc] sm:$0xf]
          %v1565 = vld [vmem:[%s1560 + $0x10] sm:$0xf]
          %v1566 = vld [vmem:[%s1560 + $0x14] sm:$0xf]
          %v1567 = vld [vmem:[%s1560 + $0x18] sm:$0xf]
          %v1568 = vld [vmem:[%s1560 + $0x1c] sm:$0xf]
          %v1569 = vld [vmem:[%s1560 + $0x20] sm:$0xf]
          %v1570 = vld [vmem:[%s1560 + $0x24] sm:$0xf]
          %v1571 = vld [vmem:[%s1560 + $0x28] sm:$0xf]
          %v1572 = vld [vmem:[%s1560 + $0x2c] sm:$0xf]
          %v1573 = vld [vmem:[%s1560 + $0x30] sm:$0xf]
          %v1574 = vld [vmem:[%s1560 + $0x34] sm:$0xf]
          %v1575 = vld [vmem:[%s1560 + $0x38] sm:$0xf]
          %v1576 = vld [vmem:[%s1560 + $0x3c] sm:$0xf]
          %v1577 = vld [vmem:[%s1560 + $0x40] sm:$0xf]
          %v1578 = vld [vmem:[%s1560 + $0x44] sm:$0xf]
          %v1579 = vld [vmem:[%s1560 + $0x48] sm:$0xf]
          %v1580 = vld [vmem:[%s1560 + $0x4c] sm:$0xf]
          %v1581 = vld [vmem:[%s1560 + $0x50] sm:$0xf]
          %v1582 = vld [vmem:[%s1560 + $0x54] sm:$0xf]
          %v1583 = vld [vmem:[%s1560 + $0x58] sm:$0xf]
          %v1584 = vld [vmem:[%s1560 + $0x5c] sm:$0xf]
          %v1585 = vld [vmem:[%s1560 + $0x60] sm:$0xf]
          %v1586 = vld [vmem:[%s1560 + $0x64] sm:$0xf]
          %v1587 = vld [vmem:[%s1560 + $0x68] sm:$0xf]
          %v1588 = vld [vmem:[%s1560 + $0x6c] sm:$0xf]
          %v1589 = vld [vmem:[%s1560 + $0x70] sm:$0xf]
          %v1590 = vld [vmem:[%s1560 + $0x74] sm:$0xf]
          %v1591 = vld [vmem:[%s1560 + $0x78] sm:$0xf]
          %v1592 = vld [vmem:[%s1560 + $0x7c] sm:$0xf]
          %v1593 = vld [vmem:[%s1560 + $0x80] sm:$0xf]
          %v1594 = vld [vmem:[%s1560 + $0x84] sm:$0xf]
          %v1595 = vld [vmem:[%s1560 + $0x88] sm:$0xf]
          %v1596 = vld [vmem:[%s1560 + $0x8c] sm:$0xf]
          %s1597 = scalar_lea.vmem %s2, %s404
          %v1598 = vld [vmem:[%s1597] sm:$0x1]
          %v1611 = vunpack.c.l.b16 %v1561
          %v1612 = vunpack.c.l.b16 %v1562
          %v1613 = vunpack.c.l.b16 %v1563
          %v1614 = vunpack.c.l.b16 %v1564
          %v1615 = vunpack.c.l.b16 %v1565
          %v1616 = vunpack.c.l.b16 %v1566
          %v1617 = vunpack.c.l.b16 %v1567
          %v1618 = vunpack.c.l.b16 %v1568
          %v1619 = vunpack.c.l.b16 %v1569
          %v1620 = vunpack.c.l.b16 %v1570
          %v1621 = vunpack.c.l.b16 %v1571
          %v1622 = vunpack.c.l.b16 %v1572
          %v1623 = vpack.c.b16 %v1612, %v1611
          %v1624 = vpack.c.b16 %v1614, %v1613
          %v1625 = vpack.c.b16 %v1616, %v1615
          %v1626 = vpack.c.b16 %v1618, %v1617
          %v1627 = vpack.c.b16 %v1620, %v1619
          %v1628 = vpack.c.b16 %v1622, %v1621
          %vm1635 = vcmask 785408
          %v1636 = vsel %vm1635, %v1523, 0
          %v1638 = vsel %vm1635, %v1525, 0
          %v1640 = vsel %vm1635, %v1527, 0
          %v1642 = vsel %vm1635, %v1529, 0
          %v1644 = vsel %vm1635, %v1531, 0
          %v1646 = vsel %vm1635, %v1533, 0
          %v1648 = vsel %vm1635, %v1535, 0
          %v1650 = vsel %vm1635, %v1537, 0
          %v1652 = vsel %vm1635, %v1539, 0
          %v1654 = vsel %vm1635, %v1541, 0
          %v1656 = vsel %vm1635, %v1543, 0
          %v1658 = vsel %vm1635, %v1545, 0
          %v1660 = vsel %vm1635, %v1547, 0
          %v1662 = vsel %vm1635, %v1549, 0
          %v1664 = vsel %vm1635, %v1551, 0
          %v1666 = vsel %vm1635, %v1553, 0
          %1668 = vmatprep.subr.bf16.mxu0 0
          %1669 = vmatpush1.bf16.msra.mxu0 %v1623
          %1670 = vmatprep.subr.bf16.mxu0 0
          %1671 = vmatpush1.bf16.msra.mxu0 %v1624
          %1672 = vmatprep.subr.bf16.mxu0 0
          %1673 = vmatpush1.bf16.msra.mxu0 %v1625
          %1674 = vmatprep.subr.bf16.mxu0 0
          %1675 = vmatpush1.bf16.msra.mxu0 %v1626
          %1676 = vmatprep.subr.bf16.mxu0 0
          %1677 = vmatpush1.bf16.msra.mxu0 %v1627
          %1678 = vmatprep.subr.bf16.mxu0 0
          %1679 = vmatpush1.bf16.msra.mxu0 %v1628
          %1680 = vmatprep.subr.bf16.mxu0 0
          %1681 = vmatpush1.bf16.msra.mxu0 0
          %1682 = vmatprep.subr.bf16.mxu0 0
          %1683 = vmatpush1.bf16.msra.mxu0 0
          %1684 = vmatprep.subr.bf16.mxu0 0
          %1685 = vmatpush1.bf16.msra.mxu0 0
          %1686 = vmatprep.subr.bf16.mxu0 0
          %1687 = vmatpush1.bf16.msra.mxu0 0
          %1688 = vmatprep.subr.bf16.mxu0 0
          %1689 = vmatpush1.bf16.msra.mxu0 0
          %1690 = vmatprep.subr.bf16.mxu0 0
          %1691 = vmatpush1.bf16.msra.mxu0 0
          %1692 = vmatprep.subr.bf16.mxu0 0
          %1693 = vmatpush1.bf16.msra.mxu0 0
          %1694 = vmatprep.subr.bf16.mxu0 0
          %1695 = vmatpush1.bf16.msra.mxu0 0
          %1696 = vmatprep.subr.bf16.mxu0 0
          %1697 = vmatpush1.bf16.msra.mxu0 0
          %1698 = vmatprep.subr.bf16.mxu0 0
          %1699 = vmatpush1.bf16.msra.mxu0 0
          %1700 = vmatprep.mubr.bf16.mxu0 0
          %1701 = vmatmul.mubr.bf16.gmra.mrb[0].mxu0 %v1636
          %v1702 = vpop.f32.mrb[0].mxu0
          %v1703 = vadd.f32 0.0, %v1702
          %v1704 = vpop.f32.mrb[0].mxu0
          %v1705 = vpop.f32.mrb[0].mxu0
          %v1706 = vadd.f32 0.0, %v1705
          %v1707 = vpop.f32.mrb[0].mxu0
          %1708 = vmatprep.mubr.bf16.mxu0 0
          %1709 = vmatmul.mubr.bf16.gmra.mrb[0].mxu0 %v1638
          %v1710 = vpop.f32.mrb[0].mxu0
          %v1711 = vadd.f32 0.0, %v1710
          %v1712 = vpop.f32.mrb[0].mxu0
          %v1713 = vpop.f32.mrb[0].mxu0
          %v1714 = vadd.f32 0.0, %v1713
          %v1715 = vpop.f32.mrb[0].mxu0
          %1716 = vmatprep.mubr.bf16.mxu0 0
          %1717 = vmatmul.mubr.bf16.gmra.mrb[0].mxu0 %v1640
          %v1718 = vpop.f32.mrb[0].mxu0
          %v1719 = vadd.f32 0.0, %v1718
          %v1720 = vpop.f32.mrb[0].mxu0
          %v1721 = vpop.f32.mrb[0].mxu0
          %v1722 = vadd.f32 0.0, %v1721
          %v1723 = vpop.f32.mrb[0].mxu0
          %1724 = vmatprep.mubr.bf16.mxu0 0
          %1725 = vmatmul.mubr.bf16.gmra.mrb[0].mxu0 %v1642
          %v1726 = vpop.f32.mrb[0].mxu0
          %v1727 = vadd.f32 0.0, %v1726
          %v1728 = vpop.f32.mrb[0].mxu0
          %v1729 = vpop.f32.mrb[0].mxu0
          %v1730 = vadd.f32 0.0, %v1729
          %v1731 = vpop.f32.mrb[0].mxu0
          %1732 = vmatprep.mubr.bf16.mxu0 0
          %1733 = vmatmul.mubr.bf16.gmra.mrb[0].mxu0 %v1644
          %v1734 = vpop.f32.mrb[0].mxu0
          %v1735 = vadd.f32 0.0, %v1734
          %v1736 = vpop.f32.mrb[0].mxu0
          %v1737 = vpop.f32.mrb[0].mxu0
          %v1738 = vadd.f32 0.0, %v1737
          %v1739 = vpop.f32.mrb[0].mxu0
          %1740 = vmatprep.mubr.bf16.mxu0 0
          %1741 = vmatmul.mubr.bf16.gmra.mrb[0].mxu0 %v1646
          %v1742 = vpop.f32.mrb[0].mxu0
          %v1743 = vadd.f32 0.0, %v1742
          %v1744 = vpop.f32.mrb[0].mxu0
          %v1745 = vpop.f32.mrb[0].mxu0
          %v1746 = vadd.f32 0.0, %v1745
          %v1747 = vpop.f32.mrb[0].mxu0
          %1748 = vmatprep.mubr.bf16.mxu0 0
          %1749 = vmatmul.mubr.bf16.gmra.mrb[0].mxu0 %v1648
          %v1750 = vpop.f32.mrb[0].mxu0
          %v1751 = vadd.f32 0.0, %v1750
          %v1752 = vpop.f32.mrb[0].mxu0
          %v1753 = vpop.f32.mrb[0].mxu0
          %v1754 = vadd.f32 0.0, %v1753
          %v1755 = vpop.f32.mrb[0].mxu0
          %1756 = vmatprep.mubr.bf16.mxu0 0
          %1757 = vmatmul.mubr.bf16.gmra.mrb[0].mxu0 %v1650
          %v1758 = vpop.f32.mrb[0].mxu0
          %v1759 = vadd.f32 0.0, %v1758
          %v1760 = vpop.f32.mrb[0].mxu0
          %v1761 = vpop.f32.mrb[0].mxu0
          %v1762 = vadd.f32 0.0, %v1761
          %v1763 = vpop.f32.mrb[0].mxu0
          %1764 = vmatprep.mubr.bf16.mxu0 0
          %1765 = vmatmul.mubr.bf16.gmra.mrb[0].mxu0 %v1652
          %v1766 = vpop.f32.mrb[0].mxu0
          %v1767 = vadd.f32 0.0, %v1766
          %v1768 = vpop.f32.mrb[0].mxu0
          %v1769 = vpop.f32.mrb[0].mxu0
          %v1770 = vadd.f32 0.0, %v1769
          %v1771 = vpop.f32.mrb[0].mxu0
          %1772 = vmatprep.mubr.bf16.mxu0 0
          %1773 = vmatmul.mubr.bf16.gmra.mrb[0].mxu0 %v1654
          %v1774 = vpop.f32.mrb[0].mxu0
          %v1775 = vadd.f32 0.0, %v1774
          %v1776 = vpop.f32.mrb[0].mxu0
          %v1777 = vpop.f32.mrb[0].mxu0
          %v1778 = vadd.f32 0.0, %v1777
          %v1779 = vpop.f32.mrb[0].mxu0
          %1780 = vmatprep.mubr.bf16.mxu0 0
          %1781 = vmatmul.mubr.bf16.gmra.mrb[0].mxu0 %v1656
          %v1782 = vpop.f32.mrb[0].mxu0
          %v1783 = vadd.f32 0.0, %v1782
          %v1784 = vpop.f32.mrb[0].mxu0
          %v1785 = vpop.f32.mrb[0].mxu0
          %v1786 = vadd.f32 0.0, %v1785
          %v1787 = vpop.f32.mrb[0].mxu0
          %1788 = vmatprep.mubr.bf16.mxu0 0
          %1789 = vmatmul.mubr.bf16.gmra.mrb[0].mxu0 %v1658
          %v1790 = vpop.f32.mrb[0].mxu0
          %v1791 = vadd.f32 0.0, %v1790
          %v1792 = vpop.f32.mrb[0].mxu0
          %v1793 = vpop.f32.mrb[0].mxu0
          %v1794 = vadd.f32 0.0, %v1793
          %v1795 = vpop.f32.mrb[0].mxu0
          %1796 = vmatprep.mubr.bf16.mxu0 0
          %1797 = vmatmul.mubr.bf16.gmra.mrb[0].mxu0 %v1660
          %v1798 = vpop.f32.mrb[0].mxu0
          %v1799 = vadd.f32 0.0, %v1798
          %v1800 = vpop.f32.mrb[0].mxu0
          %v1801 = vpop.f32.mrb[0].mxu0
          %v1802 = vadd.f32 0.0, %v1801
          %v1803 = vpop.f32.mrb[0].mxu0
          %1804 = vmatprep.mubr.bf16.mxu0 0
          %1805 = vmatmul.mubr.bf16.gmra.mrb[0].mxu0 %v1662
          %v1806 = vpop.f32.mrb[0].mxu0
          %v1807 = vadd.f32 0.0, %v1806
          %v1808 = vpop.f32.mrb[0].mxu0
          %v1809 = vpop.f32.mrb[0].mxu0
          %v1810 = vadd.f32 0.0, %v1809
          %v1811 = vpop.f32.mrb[0].mxu0
          %1812 = vmatprep.mubr.bf16.mxu0 0
          %1813 = vmatmul.mubr.bf16.gmra.mrb[0].mxu0 %v1664
          %v1814 = vpop.f32.mrb[0].mxu0
          %v1815 = vadd.f32 0.0, %v1814
          %v1816 = vpop.f32.mrb[0].mxu0
          %v1817 = vpop.f32.mrb[0].mxu0
          %v1818 = vadd.f32 0.0, %v1817
          %v1819 = vpop.f32.mrb[0].mxu0
          %1820 = vmatprep.mubr.bf16.mxu0 0
          %1821 = vmatmul.mubr.bf16.gmra.mrb[0].mxu0 %v1666
          %v1822 = vpop.f32.mrb[0].mxu0
          %v1823 = vadd.f32 0.0, %v1822
          %v1824 = vpop.f32.mrb[0].mxu0
          %v1825 = vpop.f32.mrb[0].mxu0
          %v1826 = vadd.f32 0.0, %v1825
          %v1827 = vpop.f32.mrb[0].mxu0
          %1828 = vdwg.mxu0
          %v1830 = vlaneseq
          %v1831 = vshrl.u32 %v1830, 7
          %v1832 = vsub.s32 0, %v1831
          %v1833 = vrot.slane %v1598, %v1832
          %v1835 = vadd.f32 %v1833, %v1703
          %v1836 = vadd.f32 %v1833, %v1706
          %v1837 = vadd.f32 %v1833, %v1711
          %v1838 = vadd.f32 %v1833, %v1714
          %v1839 = vadd.f32 %v1833, %v1719
          %v1840 = vadd.f32 %v1833, %v1722
          %v1841 = vadd.f32 %v1833, %v1727
          %v1842 = vadd.f32 %v1833, %v1730
          %v1843 = vadd.f32 %v1833, %v1735
          %v1844 = vadd.f32 %v1833, %v1738
          %v1845 = vadd.f32 %v1833, %v1743
          %v1846 = vadd.f32 %v1833, %v1746
          %v1847 = vadd.f32 %v1833, %v1751
          %v1848 = vadd.f32 %v1833, %v1754
          %v1849 = vadd.f32 %v1833, %v1759
          %v1850 = vadd.f32 %v1833, %v1762
          %v1851 = vadd.f32 %v1833, %v1767
          %v1852 = vadd.f32 %v1833, %v1770
          %v1853 = vadd.f32 %v1833, %v1775
          %v1854 = vadd.f32 %v1833, %v1778
          %v1855 = vadd.f32 %v1833, %v1783
          %v1856 = vadd.f32 %v1833, %v1786
          %v1857 = vadd.f32 %v1833, %v1791
          %v1858 = vadd.f32 %v1833, %v1794
          %v1859 = vadd.f32 %v1833, %v1799
          %v1860 = vadd.f32 %v1833, %v1802
          %v1861 = vadd.f32 %v1833, %v1807
          %v1862 = vadd.f32 %v1833, %v1810
          %v1863 = vadd.f32 %v1833, %v1815
          %v1864 = vadd.f32 %v1833, %v1818
          %v1865 = vadd.f32 %v1833, %v1823
          %v1866 = vadd.f32 %v1833, %v1826
          %v1879 = vunpack.c.l.b16 %v1573
          %v1880 = vunpack.c.l.b16 %v1574
          %v1881 = vunpack.c.l.b16 %v1575
          %v1882 = vunpack.c.l.b16 %v1576
          %v1883 = vunpack.c.l.b16 %v1577
          %v1884 = vunpack.c.l.b16 %v1578
          %v1885 = vunpack.c.l.b16 %v1579
          %v1886 = vunpack.c.l.b16 %v1580
          %v1887 = vunpack.c.l.b16 %v1581
          %v1888 = vunpack.c.l.b16 %v1582
          %v1889 = vunpack.c.l.b16 %v1583
          %v1890 = vunpack.c.l.b16 %v1584
          %v1891 = vpack.c.b16 %v1880, %v1879
          %v1892 = vpack.c.b16 %v1882, %v1881
          %v1893 = vpack.c.b16 %v1884, %v1883
          %v1894 = vpack.c.b16 %v1886, %v1885
          %v1895 = vpack.c.b16 %v1888, %v1887
          %v1896 = vpack.c.b16 %v1890, %v1889
          %v1903 = vsel %vm1635, %v1555, 0
          %1905 = vmatprep.subr.bf16.mxu0 0
          %1906 = vmatpush1.bf16.msra.mxu0 %v1891
          %1907 = vmatprep.subr.bf16.mxu0 0
          %1908 = vmatpush1.bf16.msra.mxu0 %v1892
          %1909 = vmatprep.subr.bf16.mxu0 0
          %1910 = vmatpush1.bf16.msra.mxu0 %v1893
          %1911 = vmatprep.subr.bf16.mxu0 0
          %1912 = vmatpush1.bf16.msra.mxu0 %v1894
          %1913 = vmatprep.subr.bf16.mxu0 0
          %1914 = vmatpush1.bf16.msra.mxu0 %v1895
          %1915 = vmatprep.subr.bf16.mxu0 0
          %1916 = vmatpush1.bf16.msra.mxu0 %v1896
          %1917 = vmatprep.subr.bf16.mxu0 0
          %1918 = vmatpush1.bf16.msra.mxu0 0
          %1919 = vmatprep.subr.bf16.mxu0 0
          %1920 = vmatpush1.bf16.msra.mxu0 0
          %1921 = vmatprep.subr.bf16.mxu0 0
          %1922 = vmatpush1.bf16.msra.mxu0 0
          %1923 = vmatprep.subr.bf16.mxu0 0
          %1924 = vmatpush1.bf16.msra.mxu0 0
          %1925 = vmatprep.subr.bf16.mxu0 0
          %1926 = vmatpush1.bf16.msra.mxu0 0
          %1927 = vmatprep.subr.bf16.mxu0 0
          %1928 = vmatpush1.bf16.msra.mxu0 0
          %1929 = vmatprep.subr.bf16.mxu0 0
          %1930 = vmatpush1.bf16.msra.mxu0 0
          %1931 = vmatprep.subr.bf16.mxu0 0
          %1932 = vmatpush1.bf16.msra.mxu0 0
          %1933 = vmatprep.subr.bf16.mxu0 0
          %1934 = vmatpush1.bf16.msra.mxu0 0
          %1935 = vmatprep.subr.bf16.mxu0 0
          %1936 = vmatpush1.bf16.msra.mxu0 0
          %1937 = vmatprep.mubr.bf16.mxu0 0
          %1938 = vmatmul.mubr.bf16.gmra.mrb[0].mxu0 %v1638
          %v1939 = vpop.f32.mrb[0].mxu0
          %v1940 = vadd.f32 0.0, %v1939
          %v1941 = vpop.f32.mrb[0].mxu0
          %v1942 = vpop.f32.mrb[0].mxu0
          %v1943 = vadd.f32 0.0, %v1942
          %v1944 = vpop.f32.mrb[0].mxu0
          %1945 = vmatprep.mubr.bf16.mxu0 0
          %1946 = vmatmul.mubr.bf16.gmra.mrb[0].mxu0 %v1640
          %v1947 = vpop.f32.mrb[0].mxu0
          %v1948 = vadd.f32 0.0, %v1947
          %v1949 = vpop.f32.mrb[0].mxu0
          %v1950 = vpop.f32.mrb[0].mxu0
          %v1951 = vadd.f32 0.0, %v1950
          %v1952 = vpop.f32.mrb[0].mxu0
          %1953 = vmatprep.mubr.bf16.mxu0 0
          %1954 = vmatmul.mubr.bf16.gmra.mrb[0].mxu0 %v1642
          %v1955 = vpop.f32.mrb[0].mxu0
          %v1956 = vadd.f32 0.0, %v1955
          %v1957 = vpop.f32.mrb[0].mxu0
          %v1958 = vpop.f32.mrb[0].mxu0
          %v1959 = vadd.f32 0.0, %v1958
          %v1960 = vpop.f32.mrb[0].mxu0
          %1961 = vmatprep.mubr.bf16.mxu0 0
          %1962 = vmatmul.mubr.bf16.gmra.mrb[0].mxu0 %v1644
          %v1963 = vpop.f32.mrb[0].mxu0
          %v1964 = vadd.f32 0.0, %v1963
          %v1965 = vpop.f32.mrb[0].mxu0
          %v1966 = vpop.f32.mrb[0].mxu0
          %v1967 = vadd.f32 0.0, %v1966
          %v1968 = vpop.f32.mrb[0].mxu0
          %1969 = vmatprep.mubr.bf16.mxu0 0
          %1970 = vmatmul.mubr.bf16.gmra.mrb[0].mxu0 %v1646
          %v1971 = vpop.f32.mrb[0].mxu0
          %v1972 = vadd.f32 0.0, %v1971
          %v1973 = vpop.f32.mrb[0].mxu0
          %v1974 = vpop.f32.mrb[0].mxu0
          %v1975 = vadd.f32 0.0, %v1974
          %v1976 = vpop.f32.mrb[0].mxu0
          %1977 = vmatprep.mubr.bf16.mxu0 0
          %1978 = vmatmul.mubr.bf16.gmra.mrb[0].mxu0 %v1648
          %v1979 = vpop.f32.mrb[0].mxu0
          %v1980 = vadd.f32 0.0, %v1979
          %v1981 = vpop.f32.mrb[0].mxu0
          %v1982 = vpop.f32.mrb[0].mxu0
          %v1983 = vadd.f32 0.0, %v1982
          %v1984 = vpop.f32.mrb[0].mxu0
          %1985 = vmatprep.mubr.bf16.mxu0 0
          %1986 = vmatmul.mubr.bf16.gmra.mrb[0].mxu0 %v1650
          %v1987 = vpop.f32.mrb[0].mxu0
          %v1988 = vadd.f32 0.0, %v1987
          %v1989 = vpop.f32.mrb[0].mxu0
          %v1990 = vpop.f32.mrb[0].mxu0
          %v1991 = vadd.f32 0.0, %v1990
          %v1992 = vpop.f32.mrb[0].mxu0
          %1993 = vmatprep.mubr.bf16.mxu0 0
          %1994 = vmatmul.mubr.bf16.gmra.mrb[0].mxu0 %v1652
          %v1995 = vpop.f32.mrb[0].mxu0
          %v1996 = vadd.f32 0.0, %v1995
          %v1997 = vpop.f32.mrb[0].mxu0
          %v1998 = vpop.f32.mrb[0].mxu0
          %v1999 = vadd.f32 0.0, %v1998
          %v2000 = vpop.f32.mrb[0].mxu0
          %2001 = vmatprep.mubr.bf16.mxu0 0
          %2002 = vmatmul.mubr.bf16.gmra.mrb[0].mxu0 %v1654
          %v2003 = vpop.f32.mrb[0].mxu0
          %v2004 = vadd.f32 0.0, %v2003
          %v2005 = vpop.f32.mrb[0].mxu0
          %v2006 = vpop.f32.mrb[0].mxu0
          %v2007 = vadd.f32 0.0, %v2006
          %v2008 = vpop.f32.mrb[0].mxu0
          %2009 = vmatprep.mubr.bf16.mxu0 0
          %2010 = vmatmul.mubr.bf16.gmra.mrb[0].mxu0 %v1656
          %v2011 = vpop.f32.mrb[0].mxu0
          %v2012 = vadd.f32 0.0, %v2011
          %v2013 = vpop.f32.mrb[0].mxu0
          %v2014 = vpop.f32.mrb[0].mxu0
          %v2015 = vadd.f32 0.0, %v2014
          %v2016 = vpop.f32.mrb[0].mxu0
          %2017 = vmatprep.mubr.bf16.mxu0 0
          %2018 = vmatmul.mubr.bf16.gmra.mrb[0].mxu0 %v1658
          %v2019 = vpop.f32.mrb[0].mxu0
          %v2020 = vadd.f32 0.0, %v2019
          %v2021 = vpop.f32.mrb[0].mxu0
          %v2022 = vpop.f32.mrb[0].mxu0
          %v2023 = vadd.f32 0.0, %v2022
          %v2024 = vpop.f32.mrb[0].mxu0
          %2025 = vmatprep.mubr.bf16.mxu0 0
          %2026 = vmatmul.mubr.bf16.gmra.mrb[0].mxu0 %v1660
          %v2027 = vpop.f32.mrb[0].mxu0
          %v2028 = vadd.f32 0.0, %v2027
          %v2029 = vpop.f32.mrb[0].mxu0
          %v2030 = vpop.f32.mrb[0].mxu0
          %v2031 = vadd.f32 0.0, %v2030
          %v2032 = vpop.f32.mrb[0].mxu0
          %2033 = vmatprep.mubr.bf16.mxu0 0
          %2034 = vmatmul.mubr.bf16.gmra.mrb[0].mxu0 %v1662
          %v2035 = vpop.f32.mrb[0].mxu0
          %v2036 = vadd.f32 0.0, %v2035
          %v2037 = vpop.f32.mrb[0].mxu0
          %v2038 = vpop.f32.mrb[0].mxu0
          %v2039 = vadd.f32 0.0, %v2038
          %v2040 = vpop.f32.mrb[0].mxu0
          %2041 = vmatprep.mubr.bf16.mxu0 0
          %2042 = vmatmul.mubr.bf16.gmra.mrb[0].mxu0 %v1664
          %v2043 = vpop.f32.mrb[0].mxu0
          %v2044 = vadd.f32 0.0, %v2043
          %v2045 = vpop.f32.mrb[0].mxu0
          %v2046 = vpop.f32.mrb[0].mxu0
          %v2047 = vadd.f32 0.0, %v2046
          %v2048 = vpop.f32.mrb[0].mxu0
          %2049 = vmatprep.mubr.bf16.mxu0 0
          %2050 = vmatmul.mubr.bf16.gmra.mrb[0].mxu0 %v1666
          %v2051 = vpop.f32.mrb[0].mxu0
          %v2052 = vadd.f32 0.0, %v2051
          %v2053 = vpop.f32.mrb[0].mxu0
          %v2054 = vpop.f32.mrb[0].mxu0
          %v2055 = vadd.f32 0.0, %v2054
          %v2056 = vpop.f32.mrb[0].mxu0
          %2057 = vmatprep.mubr.bf16.mxu0 0
          %2058 = vmatmul.mubr.bf16.gmra.mrb[0].mxu0 %v1903
          %v2059 = vpop.f32.mrb[0].mxu0
          %v2060 = vadd.f32 0.0, %v2059
          %v2061 = vpop.f32.mrb[0].mxu0
          %v2062 = vpop.f32.mrb[0].mxu0
          %v2063 = vadd.f32 0.0, %v2062
          %v2064 = vpop.f32.mrb[0].mxu0
          %2065 = vdwg.mxu0
          %v2066 = vadd.f32 %v1835, %v1940
          %v2067 = vadd.f32 %v1836, %v1943
          %v2068 = vadd.f32 %v1837, %v1948
          %v2069 = vadd.f32 %v1838, %v1951
          %v2070 = vadd.f32 %v1839, %v1956
          %v2071 = vadd.f32 %v1840, %v1959
          %v2072 = vadd.f32 %v1841, %v1964
          %v2073 = vadd.f32 %v1842, %v1967
          %v2074 = vadd.f32 %v1843, %v1972
          %v2075 = vadd.f32 %v1844, %v1975
          %v2076 = vadd.f32 %v1845, %v1980
          %v2077 = vadd.f32 %v1846, %v1983
          %v2078 = vadd.f32 %v1847, %v1988
          %v2079 = vadd.f32 %v1848, %v1991
          %v2080 = vadd.f32 %v1849, %v1996
          %v2081 = vadd.f32 %v1850, %v1999
          %v2082 = vadd.f32 %v1851, %v2004
          %v2083 = vadd.f32 %v1852, %v2007
          %v2084 = vadd.f32 %v1853, %v2012
          %v2085 = vadd.f32 %v1854, %v2015
          %v2086 = vadd.f32 %v1855, %v2020
          %v2087 = vadd.f32 %v1856, %v2023
          %v2088 = vadd.f32 %v1857, %v2028
          %v2089 = vadd.f32 %v1858, %v2031
          %v2090 = vadd.f32 %v1859, %v2036
          %v2091 = vadd.f32 %v1860, %v2039
          %v2092 = vadd.f32 %v1861, %v2044
          %v2093 = vadd.f32 %v1862, %v2047
          %v2094 = vadd.f32 %v1863, %v2052
          %v2095 = vadd.f32 %v1864, %v2055
          %v2096 = vadd.f32 %v1865, %v2060
          %v2097 = vadd.f32 %v1866, %v2063
          %v2110 = vunpack.c.l.b16 %v1585
          %v2111 = vunpack.c.l.b16 %v1586
          %v2112 = vunpack.c.l.b16 %v1587
          %v2113 = vunpack.c.l.b16 %v1588
          %v2114 = vunpack.c.l.b16 %v1589
          %v2115 = vunpack.c.l.b16 %v1590
          %v2116 = vunpack.c.l.b16 %v1591
          %v2117 = vunpack.c.l.b16 %v1592
          %v2118 = vunpack.c.l.b16 %v1593
          %v2119 = vunpack.c.l.b16 %v1594
          %v2120 = vunpack.c.l.b16 %v1595
          %v2121 = vunpack.c.l.b16 %v1596
          %v2122 = vpack.c.b16 %v2111, %v2110
          %v2123 = vpack.c.b16 %v2113, %v2112
          %v2124 = vpack.c.b16 %v2115, %v2114
          %v2125 = vpack.c.b16 %v2117, %v2116
          %v2126 = vpack.c.b16 %v2119, %v2118
          %v2127 = vpack.c.b16 %v2121, %v2120
          %v2134 = vsel %vm1635, %v1557, 0
          %2136 = vmatprep.subr.bf16.mxu0 0
          %2137 = vmatpush1.bf16.msra.mxu0 %v2122
          %2138 = vmatprep.subr.bf16.mxu0 0
          %2139 = vmatpush1.bf16.msra.mxu0 %v2123
          %2140 = vmatprep.subr.bf16.mxu0 0
          %2141 = vmatpush1.bf16.msra.mxu0 %v2124
          %2142 = vmatprep.subr.bf16.mxu0 0
          %2143 = vmatpush1.bf16.msra.mxu0 %v2125
          %2144 = vmatprep.subr.bf16.mxu0 0
          %2145 = vmatpush1.bf16.msra.mxu0 %v2126
          %2146 = vmatprep.subr.bf16.mxu0 0
          %2147 = vmatpush1.bf16.msra.mxu0 %v2127
          %2148 = vmatprep.subr.bf16.mxu0 0
          %2149 = vmatpush1.bf16.msra.mxu0 0
          %2150 = vmatprep.subr.bf16.mxu0 0
          %2151 = vmatpush1.bf16.msra.mxu0 0
          %2152 = vmatprep.subr.bf16.mxu0 0
          %2153 = vmatpush1.bf16.msra.mxu0 0
          %2154 = vmatprep.subr.bf16.mxu0 0
          %2155 = vmatpush1.bf16.msra.mxu0 0
          %2156 = vmatprep.subr.bf16.mxu0 0
          %2157 = vmatpush1.bf16.msra.mxu0 0
          %2158 = vmatprep.subr.bf16.mxu0 0
          %2159 = vmatpush1.bf16.msra.mxu0 0
          %2160 = vmatprep.subr.bf16.mxu0 0
          %2161 = vmatpush1.bf16.msra.mxu0 0
          %2162 = vmatprep.subr.bf16.mxu0 0
          %2163 = vmatpush1.bf16.msra.mxu0 0
          %2164 = vmatprep.subr.bf16.mxu0 0
          %2165 = vmatpush1.bf16.msra.mxu0 0
          %2166 = vmatprep.subr.bf16.mxu0 0
          %2167 = vmatpush1.bf16.msra.mxu0 0
          %2168 = vmatprep.mubr.bf16.mxu0 0
          %2169 = vmatmul.mubr.bf16.gmra.mrb[0].mxu0 %v1640
          %v2170 = vpop.f32.mrb[0].mxu0
          %v2171 = vadd.f32 0.0, %v2170
          %v2172 = vpop.f32.mrb[0].mxu0
          %v2173 = vpop.f32.mrb[0].mxu0
          %v2174 = vadd.f32 0.0, %v2173
          %v2175 = vpop.f32.mrb[0].mxu0
          %2176 = vmatprep.mubr.bf16.mxu0 0
          %2177 = vmatmul.mubr.bf16.gmra.mrb[0].mxu0 %v1642
          %v2178 = vpop.f32.mrb[0].mxu0
          %v2179 = vadd.f32 0.0, %v2178
          %v2180 = vpop.f32.mrb[0].mxu0
          %v2181 = vpop.f32.mrb[0].mxu0
          %v2182 = vadd.f32 0.0, %v2181
          %v2183 = vpop.f32.mrb[0].mxu0
          %2184 = vmatprep.mubr.bf16.mxu0 0
          %2185 = vmatmul.mubr.bf16.gmra.mrb[0].mxu0 %v1644
          %v2186 = vpop.f32.mrb[0].mxu0
          %v2187 = vadd.f32 0.0, %v2186
          %v2188 = vpop.f32.mrb[0].mxu0
          %v2189 = vpop.f32.mrb[0].mxu0
          %v2190 = vadd.f32 0.0, %v2189
          %v2191 = vpop.f32.mrb[0].mxu0
          %2192 = vmatprep.mubr.bf16.mxu0 0
          %2193 = vmatmul.mubr.bf16.gmra.mrb[0].mxu0 %v1646
          %v2194 = vpop.f32.mrb[0].mxu0
          %v2195 = vadd.f32 0.0, %v2194
          %v2196 = vpop.f32.mrb[0].mxu0
          %v2197 = vpop.f32.mrb[0].mxu0
          %v2198 = vadd.f32 0.0, %v2197
          %v2199 = vpop.f32.mrb[0].mxu0
          %2200 = vmatprep.mubr.bf16.mxu0 0
          %2201 = vmatmul.mubr.bf16.gmra.mrb[0].mxu0 %v1648
          %v2202 = vpop.f32.mrb[0].mxu0
          %v2203 = vadd.f32 0.0, %v2202
          %v2204 = vpop.f32.mrb[0].mxu0
          %v2205 = vpop.f32.mrb[0].mxu0
          %v2206 = vadd.f32 0.0, %v2205
          %v2207 = vpop.f32.mrb[0].mxu0
          %2208 = vmatprep.mubr.bf16.mxu0 0
          %2209 = vmatmul.mubr.bf16.gmra.mrb[0].mxu0 %v1650
          %v2210 = vpop.f32.mrb[0].mxu0
          %v2211 = vadd.f32 0.0, %v2210
          %v2212 = vpop.f32.mrb[0].mxu0
          %v2213 = vpop.f32.mrb[0].mxu0
          %v2214 = vadd.f32 0.0, %v2213
          %v2215 = vpop.f32.mrb[0].mxu0
          %2216 = vmatprep.mubr.bf16.mxu0 0
          %2217 = vmatmul.mubr.bf16.gmra.mrb[0].mxu0 %v1652
          %v2218 = vpop.f32.mrb[0].mxu0
          %v2219 = vadd.f32 0.0, %v2218
          %v2220 = vpop.f32.mrb[0].mxu0
          %v2221 = vpop.f32.mrb[0].mxu0
          %v2222 = vadd.f32 0.0, %v2221
          %v2223 = vpop.f32.mrb[0].mxu0
          %2224 = vmatprep.mubr.bf16.mxu0 0
          %2225 = vmatmul.mubr.bf16.gmra.mrb[0].mxu0 %v1654
          %v2226 = vpop.f32.mrb[0].mxu0
          %v2227 = vadd.f32 0.0, %v2226
          %v2228 = vpop.f32.mrb[0].mxu0
          %v2229 = vpop.f32.mrb[0].mxu0
          %v2230 = vadd.f32 0.0, %v2229
          %v2231 = vpop.f32.mrb[0].mxu0
          %2232 = vmatprep.mubr.bf16.mxu0 0
          %2233 = vmatmul.mubr.bf16.gmra.mrb[0].mxu0 %v1656
          %v2234 = vpop.f32.mrb[0].mxu0
          %v2235 = vadd.f32 0.0, %v2234
          %v2236 = vpop.f32.mrb[0].mxu0
          %v2237 = vpop.f32.mrb[0].mxu0
          %v2238 = vadd.f32 0.0, %v2237
          %v2239 = vpop.f32.mrb[0].mxu0
          %2240 = vmatprep.mubr.bf16.mxu0 0
          %2241 = vmatmul.mubr.bf16.gmra.mrb[0].mxu0 %v1658
          %v2242 = vpop.f32.mrb[0].mxu0
          %v2243 = vadd.f32 0.0, %v2242
          %v2244 = vpop.f32.mrb[0].mxu0
          %v2245 = vpop.f32.mrb[0].mxu0
          %v2246 = vadd.f32 0.0, %v2245
          %v2247 = vpop.f32.mrb[0].mxu0
          %2248 = vmatprep.mubr.bf16.mxu0 0
          %2249 = vmatmul.mubr.bf16.gmra.mrb[0].mxu0 %v1660
          %v2250 = vpop.f32.mrb[0].mxu0
          %v2251 = vadd.f32 0.0, %v2250
          %v2252 = vpop.f32.mrb[0].mxu0
          %v2253 = vpop.f32.mrb[0].mxu0
          %v2254 = vadd.f32 0.0, %v2253
          %v2255 = vpop.f32.mrb[0].mxu0
          %2256 = vmatprep.mubr.bf16.mxu0 0
          %2257 = vmatmul.mubr.bf16.gmra.mrb[0].mxu0 %v1662
          %v2258 = vpop.f32.mrb[0].mxu0
          %v2259 = vadd.f32 0.0, %v2258
          %v2260 = vpop.f32.mrb[0].mxu0
          %v2261 = vpop.f32.mrb[0].mxu0
          %v2262 = vadd.f32 0.0, %v2261
          %v2263 = vpop.f32.mrb[0].mxu0
          %2264 = vmatprep.mubr.bf16.mxu0 0
          %2265 = vmatmul.mubr.bf16.gmra.mrb[0].mxu0 %v1664
          %v2266 = vpop.f32.mrb[0].mxu0
          %v2267 = vadd.f32 0.0, %v2266
          %v2268 = vpop.f32.mrb[0].mxu0
          %v2269 = vpop.f32.mrb[0].mxu0
          %v2270 = vadd.f32 0.0, %v2269
          %v2271 = vpop.f32.mrb[0].mxu0
          %2272 = vmatprep.mubr.bf16.mxu0 0
          %2273 = vmatmul.mubr.bf16.gmra.mrb[0].mxu0 %v1666
          %v2274 = vpop.f32.mrb[0].mxu0
          %v2275 = vadd.f32 0.0, %v2274
          %v2276 = vpop.f32.mrb[0].mxu0
          %v2277 = vpop.f32.mrb[0].mxu0
          %v2278 = vadd.f32 0.0, %v2277
          %v2279 = vpop.f32.mrb[0].mxu0
          %2280 = vmatprep.mubr.bf16.mxu0 0
          %2281 = vmatmul.mubr.bf16.gmra.mrb[0].mxu0 %v1903
          %v2282 = vpop.f32.mrb[0].mxu0
          %v2283 = vadd.f32 0.0, %v2282
          %v2284 = vpop.f32.mrb[0].mxu0
          %v2285 = vpop.f32.mrb[0].mxu0
          %v2286 = vadd.f32 0.0, %v2285
          %v2287 = vpop.f32.mrb[0].mxu0
          %2288 = vmatprep.mubr.bf16.mxu0 0
          %2289 = vmatmul.mubr.bf16.gmra.mrb[0].mxu0 %v2134
          %v2290 = vpop.f32.mrb[0].mxu0
          %v2291 = vadd.f32 0.0, %v2290
          %v2292 = vpop.f32.mrb[0].mxu0
          %v2293 = vpop.f32.mrb[0].mxu0
          %v2294 = vadd.f32 0.0, %v2293
          %v2295 = vpop.f32.mrb[0].mxu0
          %2296 = vdwg.mxu0
          %v2297 = vadd.f32 %v2066, %v2171
          %v2298 = vadd.f32 %v2067, %v2174
          %v2299 = vadd.f32 %v2068, %v2179
          %v2300 = vadd.f32 %v2069, %v2182
          %v2301 = vadd.f32 %v2070, %v2187
          %v2302 = vadd.f32 %v2071, %v2190
          %v2303 = vadd.f32 %v2072, %v2195
          %v2304 = vadd.f32 %v2073, %v2198
          %v2305 = vadd.f32 %v2074, %v2203
          %v2306 = vadd.f32 %v2075, %v2206
          %v2307 = vadd.f32 %v2076, %v2211
          %v2308 = vadd.f32 %v2077, %v2214
          %v2309 = vadd.f32 %v2078, %v2219
          %v2310 = vadd.f32 %v2079, %v2222
          %v2311 = vadd.f32 %v2080, %v2227
          %v2312 = vadd.f32 %v2081, %v2230
          %v2313 = vadd.f32 %v2082, %v2235
          %v2314 = vadd.f32 %v2083, %v2238
          %v2315 = vadd.f32 %v2084, %v2243
          %v2316 = vadd.f32 %v2085, %v2246
          %v2317 = vadd.f32 %v2086, %v2251
          %v2318 = vadd.f32 %v2087, %v2254
          %v2319 = vadd.f32 %v2088, %v2259
          %v2320 = vadd.f32 %v2089, %v2262
          %v2321 = vadd.f32 %v2090, %v2267
          %v2322 = vadd.f32 %v2091, %v2270
          %v2323 = vadd.f32 %v2092, %v2275
          %v2324 = vadd.f32 %v2093, %v2278
          %v2325 = vadd.f32 %v2094, %v2283
          %v2326 = vadd.f32 %v2095, %v2286
          %v2327 = vadd.f32 %v2096, %v2291
          %v2328 = vadd.f32 %v2097, %v2294
          %v2329 = vmax.f32 %v2297, 0.0
          %v2330 = vmax.f32 %v2298, 0.0
          %v2331 = vmax.f32 %v2299, 0.0
          %v2332 = vmax.f32 %v2300, 0.0
          %v2333 = vmax.f32 %v2301, 0.0
          %v2334 = vmax.f32 %v2302, 0.0
          %v2335 = vmax.f32 %v2303, 0.0
          %v2336 = vmax.f32 %v2304, 0.0
          %v2337 = vmax.f32 %v2305, 0.0
          %v2338 = vmax.f32 %v2306, 0.0
          %v2339 = vmax.f32 %v2307, 0.0
          %v2340 = vmax.f32 %v2308, 0.0
          %v2341 = vmax.f32 %v2309, 0.0
          %v2342 = vmax.f32 %v2310, 0.0
          %v2343 = vmax.f32 %v2311, 0.0
          %v2344 = vmax.f32 %v2312, 0.0
          %v2345 = vmax.f32 %v2313, 0.0
          %v2346 = vmax.f32 %v2314, 0.0
          %v2347 = vmax.f32 %v2315, 0.0
          %v2348 = vmax.f32 %v2316, 0.0
          %v2349 = vmax.f32 %v2317, 0.0
          %v2350 = vmax.f32 %v2318, 0.0
          %v2351 = vmax.f32 %v2319, 0.0
          %v2352 = vmax.f32 %v2320, 0.0
          %v2353 = vmax.f32 %v2321, 0.0
          %v2354 = vmax.f32 %v2322, 0.0
          %v2355 = vmax.f32 %v2323, 0.0
          %v2356 = vmax.f32 %v2324, 0.0
          %v2357 = vmax.f32 %v2325, 0.0
          %v2358 = vmax.f32 %v2326, 0.0
          %v2359 = vmax.f32 %v2327, 0.0
          %v2360 = vmax.f32 %v2328, 0.0
          %s2361 = sadd.s32 %s404, 1
          %v2362 = vpack.c.bf16 %v2330, %v2329
          %v2363 = vpack.c.bf16 %v2332, %v2331
          %v2364 = vpack.c.bf16 %v2334, %v2333
          %v2365 = vpack.c.bf16 %v2336, %v2335
          %v2366 = vpack.c.bf16 %v2338, %v2337
          %v2367 = vpack.c.bf16 %v2340, %v2339
          %v2368 = vpack.c.bf16 %v2342, %v2341
          %v2369 = vpack.c.bf16 %v2344, %v2343
          %v2370 = vpack.c.bf16 %v2346, %v2345
          %v2371 = vpack.c.bf16 %v2348, %v2347
          %v2372 = vpack.c.bf16 %v2350, %v2349
          %v2373 = vpack.c.bf16 %v2352, %v2351
          %v2374 = vpack.c.bf16 %v2354, %v2353
          %v2375 = vpack.c.bf16 %v2356, %v2355
          %v2376 = vpack.c.bf16 %v2358, %v2357
          %v2377 = vpack.c.bf16 %v2360, %v2359
          %v2394 = vunpack.c.l.b16 %v2362
          %v2395 = vunpack.c.h.b16 %v2362
          %v2396 = vunpack.c.l.b16 %v2363
          %v2397 = vunpack.c.h.b16 %v2363
          %v2398 = vunpack.c.l.b16 %v2364
          %v2399 = vunpack.c.h.b16 %v2364
          %v2400 = vunpack.c.l.b16 %v2365
          %v2401 = vunpack.c.h.b16 %v2365
          %v2402 = vunpack.c.l.b16 %v2366
          %v2403 = vunpack.c.h.b16 %v2366
          %v2404 = vunpack.c.l.b16 %v2367
          %v2405 = vunpack.c.h.b16 %v2367
          %v2406 = vunpack.c.l.b16 %v2368
          %v2407 = vunpack.c.h.b16 %v2368
          %v2408 = vunpack.c.l.b16 %v2369
          %v2409 = vunpack.c.h.b16 %v2369
          %v2410 = vunpack.c.l.b16 %v2370
          %v2411 = vunpack.c.h.b16 %v2370
          %v2412 = vunpack.c.l.b16 %v2371
          %v2413 = vunpack.c.h.b16 %v2371
          %v2414 = vunpack.c.l.b16 %v2372
          %v2415 = vunpack.c.h.b16 %v2372
          %v2416 = vunpack.c.l.b16 %v2373
          %v2417 = vunpack.c.h.b16 %v2373
          %v2418 = vunpack.c.l.b16 %v2374
          %v2419 = vunpack.c.h.b16 %v2374
          %v2420 = vunpack.c.l.b16 %v2375
          %v2421 = vunpack.c.h.b16 %v2375
          %v2422 = vunpack.c.l.b16 %v2376
          %v2423 = vunpack.c.h.b16 %v2376
          %v2424 = vunpack.c.l.b16 %v2377
          %v2425 = vunpack.c.h.b16 %v2377
          %v2426 = vpack.c.b16 %v2394, %v2394
          %v2427 = vpack.c.b16 %v2395, %v2395
          %v2428 = vpack.c.b16 %v2396, %v2396
          %v2429 = vpack.c.b16 %v2397, %v2397
          %v2430 = vpack.c.b16 %v2398, %v2398
          %v2431 = vpack.c.b16 %v2399, %v2399
          %v2432 = vpack.c.b16 %v2400, %v2400
          %v2433 = vpack.c.b16 %v2401, %v2401
          %v2434 = vpack.c.b16 %v2402, %v2402
          %v2435 = vpack.c.b16 %v2403, %v2403
          %v2436 = vpack.c.b16 %v2404, %v2404
          %v2437 = vpack.c.b16 %v2405, %v2405
          %v2438 = vpack.c.b16 %v2406, %v2406
          %v2439 = vpack.c.b16 %v2407, %v2407
          %v2440 = vpack.c.b16 %v2408, %v2408
          %v2441 = vpack.c.b16 %v2409, %v2409
          %v2442 = vpack.c.b16 %v2410, %v2410
          %v2443 = vpack.c.b16 %v2411, %v2411
          %v2444 = vpack.c.b16 %v2412, %v2412
          %v2445 = vpack.c.b16 %v2413, %v2413
          %v2446 = vpack.c.b16 %v2414, %v2414
          %v2447 = vpack.c.b16 %v2415, %v2415
          %v2448 = vpack.c.b16 %v2416, %v2416
          %v2449 = vpack.c.b16 %v2417, %v2417
          %v2450 = vpack.c.b16 %v2418, %v2418
          %v2451 = vpack.c.b16 %v2419, %v2419
          %v2452 = vpack.c.b16 %v2420, %v2420
          %v2453 = vpack.c.b16 %v2421, %v2421
          %v2454 = vpack.c.b16 %v2422, %v2422
          %v2455 = vpack.c.b16 %v2423, %v2423
          %v2456 = vpack.c.b16 %v2424, %v2424
          %v2457 = vpack.c.b16 %v2425, %v2425
          %v2459 = vshrl.u32 %v2426, 16
          %v2461 = vrot.slane %v2459, 7
          %v2462 = vshll.u32 %v2426, 16
          %v2464 = vor.u32 %v2461, %v2462
          %v2465 = vrot.slane %v2461, 4
          %v2467 = vshrl.u32 %v2427, 16
          %v2469 = vrot.slane %v2467, 7
          %v2470 = vshll.u32 %v2427, 16
          %v2472 = vor.u32 %v2469, %v2470
          %v2473 = vsel %vm503, %v2465, %v2472
          %v2474 = vrot.slane %v2469, 4
          %v2476 = vshrl.u32 %v2428, 16
          %v2478 = vrot.slane %v2476, 7
          %v2479 = vshll.u32 %v2428, 16
          %v2481 = vor.u32 %v2478, %v2479
          %v2482 = vrot.slane %v2478, 4
          %v2484 = vshrl.u32 %v2429, 16
          %v2486 = vrot.slane %v2484, 7
          %v2487 = vshll.u32 %v2429, 16
          %v2489 = vor.u32 %v2486, %v2487
          %v2490 = vsel %vm503, %v2482, %v2489
          %v2491 = vrot.slane %v2486, 4
          %v2493 = vshrl.u32 %v2430, 16
          %v2495 = vrot.slane %v2493, 7
          %v2496 = vshll.u32 %v2430, 16
          %v2498 = vor.u32 %v2495, %v2496
          %v2499 = vrot.slane %v2495, 4
          %v2501 = vshrl.u32 %v2431, 16
          %v2503 = vrot.slane %v2501, 7
          %v2504 = vshll.u32 %v2431, 16
          %v2506 = vor.u32 %v2503, %v2504
          %v2507 = vsel %vm503, %v2499, %v2506
          %v2508 = vrot.slane %v2503, 4
          %v2510 = vshrl.u32 %v2432, 16
          %v2512 = vrot.slane %v2510, 7
          %v2513 = vshll.u32 %v2432, 16
          %v2515 = vor.u32 %v2512, %v2513
          %v2516 = vrot.slane %v2512, 4
          %v2518 = vshrl.u32 %v2433, 16
          %v2520 = vrot.slane %v2518, 7
          %v2521 = vshll.u32 %v2433, 16
          %v2523 = vor.u32 %v2520, %v2521
          %v2524 = vsel %vm503, %v2516, %v2523
          %v2525 = vrot.slane %v2520, 4
          %v2527 = vshrl.u32 %v2434, 16
          %v2529 = vrot.slane %v2527, 7
          %v2530 = vshll.u32 %v2434, 16
          %v2532 = vor.u32 %v2529, %v2530
          %v2533 = vrot.slane %v2529, 4
          %v2535 = vshrl.u32 %v2435, 16
          %v2537 = vrot.slane %v2535, 7
          %v2538 = vshll.u32 %v2435, 16
          %v2540 = vor.u32 %v2537, %v2538
          %v2541 = vsel %vm503, %v2533, %v2540
          %v2542 = vrot.slane %v2537, 4
          %v2544 = vshrl.u32 %v2436, 16
          %v2546 = vrot.slane %v2544, 7
          %v2547 = vshll.u32 %v2436, 16
          %v2549 = vor.u32 %v2546, %v2547
          %v2550 = vrot.slane %v2546, 4
          %v2552 = vshrl.u32 %v2437, 16
          %v2554 = vrot.slane %v2552, 7
          %v2555 = vshll.u32 %v2437, 16
          %v2557 = vor.u32 %v2554, %v2555
          %v2558 = vsel %vm503, %v2550, %v2557
          %v2559 = vrot.slane %v2554, 4
          %v2561 = vshrl.u32 %v2438, 16
          %v2563 = vrot.slane %v2561, 7
          %v2564 = vshll.u32 %v2438, 16
          %v2566 = vor.u32 %v2563, %v2564
          %v2567 = vrot.slane %v2563, 4
          %v2569 = vshrl.u32 %v2439, 16
          %v2571 = vrot.slane %v2569, 7
          %v2572 = vshll.u32 %v2439, 16
          %v2574 = vor.u32 %v2571, %v2572
          %v2575 = vsel %vm503, %v2567, %v2574
          %v2576 = vrot.slane %v2571, 4
          %v2578 = vshrl.u32 %v2440, 16
          %v2580 = vrot.slane %v2578, 7
          %v2581 = vshll.u32 %v2440, 16
          %v2583 = vor.u32 %v2580, %v2581
          %v2584 = vrot.slane %v2580, 4
          %v2586 = vshrl.u32 %v2441, 16
          %v2588 = vrot.slane %v2586, 7
          %v2589 = vshll.u32 %v2441, 16
          %v2591 = vor.u32 %v2588, %v2589
          %v2592 = vsel %vm503, %v2584, %v2591
          %v2593 = vrot.slane %v2588, 4
          %v2595 = vshrl.u32 %v2442, 16
          %v2597 = vrot.slane %v2595, 7
          %v2598 = vshll.u32 %v2442, 16
          %v2600 = vor.u32 %v2597, %v2598
          %v2601 = vrot.slane %v2597, 4
          %v2603 = vshrl.u32 %v2443, 16
          %v2605 = vrot.slane %v2603, 7
          %v2606 = vshll.u32 %v2443, 16
          %v2608 = vor.u32 %v2605, %v2606
          %v2609 = vsel %vm503, %v2601, %v2608
          %v2610 = vrot.slane %v2605, 4
          %v2612 = vshrl.u32 %v2444, 16
          %v2614 = vrot.slane %v2612, 7
          %v2615 = vshll.u32 %v2444, 16
          %v2617 = vor.u32 %v2614, %v2615
          %v2618 = vrot.slane %v2614, 4
          %v2620 = vshrl.u32 %v2445, 16
          %v2622 = vrot.slane %v2620, 7
          %v2623 = vshll.u32 %v2445, 16
          %v2625 = vor.u32 %v2622, %v2623
          %v2626 = vsel %vm503, %v2618, %v2625
          %v2627 = vrot.slane %v2622, 4
          %v2629 = vshrl.u32 %v2446, 16
          %v2631 = vrot.slane %v2629, 7
          %v2632 = vshll.u32 %v2446, 16
          %v2634 = vor.u32 %v2631, %v2632
          %v2635 = vrot.slane %v2631, 4
          %v2637 = vshrl.u32 %v2447, 16
          %v2639 = vrot.slane %v2637, 7
          %v2640 = vshll.u32 %v2447, 16
          %v2642 = vor.u32 %v2639, %v2640
          %v2643 = vsel %vm503, %v2635, %v2642
          %v2644 = vrot.slane %v2639, 4
          %v2646 = vshrl.u32 %v2448, 16
          %v2648 = vrot.slane %v2646, 7
          %v2649 = vshll.u32 %v2448, 16
          %v2651 = vor.u32 %v2648, %v2649
          %v2652 = vrot.slane %v2648, 4
          %v2654 = vshrl.u32 %v2449, 16
          %v2656 = vrot.slane %v2654, 7
          %v2657 = vshll.u32 %v2449, 16
          %v2659 = vor.u32 %v2656, %v2657
          %v2660 = vsel %vm503, %v2652, %v2659
          %v2661 = vrot.slane %v2656, 4
          %v2663 = vshrl.u32 %v2450, 16
          %v2665 = vrot.slane %v2663, 7
          %v2666 = vshll.u32 %v2450, 16
          %v2668 = vor.u32 %v2665, %v2666
          %v2669 = vrot.slane %v2665, 4
          %v2671 = vshrl.u32 %v2451, 16
          %v2673 = vrot.slane %v2671, 7
          %v2674 = vshll.u32 %v2451, 16
          %v2676 = vor.u32 %v2673, %v2674
          %v2677 = vsel %vm503, %v2669, %v2676
          %v2678 = vrot.slane %v2673, 4
          %v2680 = vshrl.u32 %v2452, 16
          %v2682 = vrot.slane %v2680, 7
          %v2683 = vshll.u32 %v2452, 16
          %v2685 = vor.u32 %v2682, %v2683
          %v2686 = vrot.slane %v2682, 4
          %v2688 = vshrl.u32 %v2453, 16
          %v2690 = vrot.slane %v2688, 7
          %v2691 = vshll.u32 %v2453, 16
          %v2693 = vor.u32 %v2690, %v2691
          %v2694 = vsel %vm503, %v2686, %v2693
          %v2695 = vrot.slane %v2690, 4
          %v2697 = vshrl.u32 %v2454, 16
          %v2699 = vrot.slane %v2697, 7
          %v2700 = vshll.u32 %v2454, 16
          %v2702 = vor.u32 %v2699, %v2700
          %v2703 = vrot.slane %v2699, 4
          %v2705 = vshrl.u32 %v2455, 16
          %v2707 = vrot.slane %v2705, 7
          %v2708 = vshll.u32 %v2455, 16
          %v2710 = vor.u32 %v2707, %v2708
          %v2711 = vsel %vm503, %v2703, %v2710
          %v2712 = vrot.slane %v2707, 4
          %v2714 = vshrl.u32 %v2456, 16
          %v2716 = vrot.slane %v2714, 7
          %v2717 = vshll.u32 %v2456, 16
          %v2719 = vor.u32 %v2716, %v2717
          %v2720 = vrot.slane %v2716, 4
          %v2722 = vshrl.u32 %v2457, 16
          %v2724 = vrot.slane %v2722, 7
          %v2725 = vshll.u32 %v2457, 16
          %v2727 = vor.u32 %v2724, %v2725
          %v2728 = vsel %vm503, %v2720, %v2727
          %v2729 = vrot.slane %v2724, 4
          %v2778 = vld [vmem:[%s824] sm:$0xf]
          %v2779 = vsel %vm827, %v2464, %v2778
          %2780 = vst [vmem:[%s824] sm:$0xf] %v2779
          %2781 = vst.msk [vmem:[%s824 + $0x4] sm:$0xf] %vm278, %v2473
          %v2782 = vld [vmem:[%s824 + $0x8] sm:$0x1]
          %v2783 = vsel %vm833, %v2474, %v2782
          %2784 = vst [vmem:[%s824 + $0x8] sm:$0x1] %v2783
          %v2785 = vld [vmem:[%s824 + $0xc] sm:$0xf]
          %v2786 = vsel %vm827, %v2481, %v2785
          %2787 = vst [vmem:[%s824 + $0xc] sm:$0xf] %v2786
          %2788 = vst.msk [vmem:[%s824 + $0x10] sm:$0xf] %vm278, %v2490
          %v2789 = vld [vmem:[%s824 + $0x14] sm:$0x1]
          %v2790 = vsel %vm833, %v2491, %v2789
          %2791 = vst [vmem:[%s824 + $0x14] sm:$0x1] %v2790
          %v2792 = vld [vmem:[%s824 + $0x18] sm:$0xf]
          %v2793 = vsel %vm827, %v2498, %v2792
          %2794 = vst [vmem:[%s824 + $0x18] sm:$0xf] %v2793
          %2795 = vst.msk [vmem:[%s824 + $0x1c] sm:$0xf] %vm278, %v2507
          %v2796 = vld [vmem:[%s824 + $0x20] sm:$0x1]
          %v2797 = vsel %vm833, %v2508, %v2796
          %2798 = vst [vmem:[%s824 + $0x20] sm:$0x1] %v2797
          %v2799 = vld [vmem:[%s824 + $0x24] sm:$0xf]
          %v2800 = vsel %vm827, %v2515, %v2799
          %2801 = vst [vmem:[%s824 + $0x24] sm:$0xf] %v2800
          %2802 = vst.msk [vmem:[%s824 + $0x28] sm:$0xf] %vm278, %v2524
          %v2803 = vld [vmem:[%s824 + $0x2c] sm:$0x1]
          %v2804 = vsel %vm833, %v2525, %v2803
          %2805 = vst [vmem:[%s824 + $0x2c] sm:$0x1] %v2804
          %v2806 = vld [vmem:[%s824 + $0x30] sm:$0xf]
          %v2807 = vsel %vm827, %v2532, %v2806
          %2808 = vst [vmem:[%s824 + $0x30] sm:$0xf] %v2807
          %2809 = vst.msk [vmem:[%s824 + $0x34] sm:$0xf] %vm278, %v2541
          %v2810 = vld [vmem:[%s824 + $0x38] sm:$0x1]
          %v2811 = vsel %vm833, %v2542, %v2810
          %2812 = vst [vmem:[%s824 + $0x38] sm:$0x1] %v2811
          %v2813 = vld [vmem:[%s824 + $0x3c] sm:$0xf]
          %v2814 = vsel %vm827, %v2549, %v2813
          %2815 = vst [vmem:[%s824 + $0x3c] sm:$0xf] %v2814
          %2816 = vst.msk [vmem:[%s824 + $0x40] sm:$0xf] %vm278, %v2558
          %v2817 = vld [vmem:[%s824 + $0x44] sm:$0x1]
          %v2818 = vsel %vm833, %v2559, %v2817
          %2819 = vst [vmem:[%s824 + $0x44] sm:$0x1] %v2818
          %v2820 = vld [vmem:[%s824 + $0x48] sm:$0xf]
          %v2821 = vsel %vm827, %v2566, %v2820
          %2822 = vst [vmem:[%s824 + $0x48] sm:$0xf] %v2821
          %2823 = vst.msk [vmem:[%s824 + $0x4c] sm:$0xf] %vm278, %v2575
          %v2824 = vld [vmem:[%s824 + $0x50] sm:$0x1]
          %v2825 = vsel %vm833, %v2576, %v2824
          %2826 = vst [vmem:[%s824 + $0x50] sm:$0x1] %v2825
          %v2827 = vld [vmem:[%s824 + $0x54] sm:$0xf]
          %v2828 = vsel %vm827, %v2583, %v2827
          %2829 = vst [vmem:[%s824 + $0x54] sm:$0xf] %v2828
          %2830 = vst.msk [vmem:[%s824 + $0x58] sm:$0xf] %vm278, %v2592
          %v2831 = vld [vmem:[%s824 + $0x5c] sm:$0x1]
          %v2832 = vsel %vm833, %v2593, %v2831
          %2833 = vst [vmem:[%s824 + $0x5c] sm:$0x1] %v2832
          %v2834 = vld [vmem:[%s824 + $0x60] sm:$0xf]
          %v2835 = vsel %vm827, %v2600, %v2834
          %2836 = vst [vmem:[%s824 + $0x60] sm:$0xf] %v2835
          %2837 = vst.msk [vmem:[%s824 + $0x64] sm:$0xf] %vm278, %v2609
          %v2838 = vld [vmem:[%s824 + $0x68] sm:$0x1]
          %v2839 = vsel %vm833, %v2610, %v2838
          %2840 = vst [vmem:[%s824 + $0x68] sm:$0x1] %v2839
          %v2841 = vld [vmem:[%s824 + $0x6c] sm:$0xf]
          %v2842 = vsel %vm827, %v2617, %v2841
          %2843 = vst [vmem:[%s824 + $0x6c] sm:$0xf] %v2842
          %2844 = vst.msk [vmem:[%s824 + $0x70] sm:$0xf] %vm278, %v2626
          %v2845 = vld [vmem:[%s824 + $0x74] sm:$0x1]
          %v2846 = vsel %vm833, %v2627, %v2845
          %2847 = vst [vmem:[%s824 + $0x74] sm:$0x1] %v2846
          %v2848 = vld [vmem:[%s824 + $0x78] sm:$0xf]
          %v2849 = vsel %vm827, %v2634, %v2848
          %2850 = vst [vmem:[%s824 + $0x78] sm:$0xf] %v2849
          %2851 = vst.msk [vmem:[%s824 + $0x7c] sm:$0xf] %vm278, %v2643
          %v2852 = vld [vmem:[%s824 + $0x80] sm:$0x1]
          %v2853 = vsel %vm833, %v2644, %v2852
          %2854 = vst [vmem:[%s824 + $0x80] sm:$0x1] %v2853
          %v2855 = vld [vmem:[%s824 + $0x84] sm:$0xf]
          %v2856 = vsel %vm827, %v2651, %v2855
          %2857 = vst [vmem:[%s824 + $0x84] sm:$0xf] %v2856
          %2858 = vst.msk [vmem:[%s824 + $0x88] sm:$0xf] %vm278, %v2660
          %v2859 = vld [vmem:[%s824 + $0x8c] sm:$0x1]
          %v2860 = vsel %vm833, %v2661, %v2859
          %2861 = vst [vmem:[%s824 + $0x8c] sm:$0x1] %v2860
          %v2862 = vld [vmem:[%s824 + $0x90] sm:$0xf]
          %v2863 = vsel %vm827, %v2668, %v2862
          %2864 = vst [vmem:[%s824 + $0x90] sm:$0xf] %v2863
          %2865 = vst.msk [vmem:[%s824 + $0x94] sm:$0xf] %vm278, %v2677
          %v2866 = vld [vmem:[%s824 + $0x98] sm:$0x1]
          %v2867 = vsel %vm833, %v2678, %v2866
          %2868 = vst [vmem:[%s824 + $0x98] sm:$0x1] %v2867
          %v2869 = vld [vmem:[%s824 + $0x9c] sm:$0xf]
          %v2870 = vsel %vm827, %v2685, %v2869
          %2871 = vst [vmem:[%s824 + $0x9c] sm:$0xf] %v2870
          %2872 = vst.msk [vmem:[%s824 + $0xa0] sm:$0xf] %vm278, %v2694
          %v2873 = vld [vmem:[%s824 + $0xa4] sm:$0x1]
          %v2874 = vsel %vm833, %v2695, %v2873
          %2875 = vst [vmem:[%s824 + $0xa4] sm:$0x1] %v2874
          %v2876 = vld [vmem:[%s824 + $0xa8] sm:$0xf]
          %v2877 = vsel %vm827, %v2702, %v2876
          %2878 = vst [vmem:[%s824 + $0xa8] sm:$0xf] %v2877
          %2879 = vst.msk [vmem:[%s824 + $0xac] sm:$0xf] %vm278, %v2711
          %v2880 = vld [vmem:[%s824 + $0xb0] sm:$0x1]
          %v2881 = vsel %vm833, %v2712, %v2880
          %2882 = vst [vmem:[%s824 + $0xb0] sm:$0x1] %v2881
          %v2883 = vld [vmem:[%s824 + $0xb4] sm:$0xf]
          %v2884 = vsel %vm827, %v2719, %v2883
          %2885 = vst [vmem:[%s824 + $0xb4] sm:$0xf] %v2884
          %2886 = vst.msk [vmem:[%s824 + $0xb8] sm:$0xf] %vm278, %v2728
          %v2887 = vld [vmem:[%s824 + $0xbc] sm:$0x1]
          %v2888 = vsel %vm833, %v2729, %v2887
          %2889 = vst [vmem:[%s824 + $0xbc] sm:$0x1] %v2888
          %v2890 = vld [vmem:[#allocation2] sm:$0xf]
          %v2891 = vld [vmem:[#allocation2 + $0x4] sm:$0xf]
          %v2892 = vld [vmem:[#allocation2 + $0x8] sm:$0x1]
          %v2893 = vld [vmem:[#allocation2 + $0xc] sm:$0xf]
          %v2894 = vld [vmem:[#allocation2 + $0x10] sm:$0xf]
          %v2895 = vld [vmem:[#allocation2 + $0x14] sm:$0x1]
          %v2896 = vld [vmem:[#allocation2 + $0x18] sm:$0xf]
          %v2897 = vld [vmem:[#allocation2 + $0x1c] sm:$0xf]
          %v2898 = vld [vmem:[#allocation2 + $0x20] sm:$0x1]
          %v2899 = vld [vmem:[#allocation2 + $0x24] sm:$0xf]
          %v2900 = vld [vmem:[#allocation2 + $0x28] sm:$0xf]
          %v2901 = vld [vmem:[#allocation2 + $0x2c] sm:$0x1]
          %v2902 = vld [vmem:[#allocation2 + $0x30] sm:$0xf]
          %v2903 = vld [vmem:[#allocation2 + $0x34] sm:$0xf]
          %v2904 = vld [vmem:[#allocation2 + $0x38] sm:$0x1]
          %v2905 = vld [vmem:[#allocation2 + $0x3c] sm:$0xf]
          %v2906 = vld [vmem:[#allocation2 + $0x40] sm:$0xf]
          %v2907 = vld [vmem:[#allocation2 + $0x44] sm:$0x1]
          %v2908 = vld [vmem:[#allocation2 + $0x48] sm:$0xf]
          %v2909 = vld [vmem:[#allocation2 + $0x4c] sm:$0xf]
          %v2910 = vld [vmem:[#allocation2 + $0x50] sm:$0x1]
          %v2911 = vld [vmem:[#allocation2 + $0x54] sm:$0xf]
          %v2912 = vld [vmem:[#allocation2 + $0x58] sm:$0xf]
          %v2913 = vld [vmem:[#allocation2 + $0x5c] sm:$0x1]
          %v2914 = vld [vmem:[#allocation2 + $0x60] sm:$0xf]
          %v2915 = vld [vmem:[#allocation2 + $0x64] sm:$0xf]
          %v2916 = vld [vmem:[#allocation2 + $0x68] sm:$0x1]
          %v2917 = vld [vmem:[#allocation2 + $0x6c] sm:$0xf]
          %v2918 = vld [vmem:[#allocation2 + $0x70] sm:$0xf]
          %v2919 = vld [vmem:[#allocation2 + $0x74] sm:$0x1]
          %v2920 = vld [vmem:[#allocation2 + $0x78] sm:$0xf]
          %v2921 = vld [vmem:[#allocation2 + $0x7c] sm:$0xf]
          %v2922 = vld [vmem:[#allocation2 + $0x80] sm:$0x1]
          %v2923 = vld [vmem:[#allocation2 + $0x84] sm:$0xf]
          %v2924 = vld [vmem:[#allocation2 + $0x88] sm:$0xf]
          %v2925 = vld [vmem:[#allocation2 + $0x8c] sm:$0x1]
          %v2926 = vld [vmem:[#allocation2 + $0x90] sm:$0xf]
          %v2927 = vld [vmem:[#allocation2 + $0x94] sm:$0xf]
          %v2928 = vld [vmem:[#allocation2 + $0x98] sm:$0x1]
          %v2929 = vld [vmem:[#allocation2 + $0x9c] sm:$0xf]
          %v2930 = vld [vmem:[#allocation2 + $0xa0] sm:$0xf]
          %v2931 = vld [vmem:[#allocation2 + $0xa4] sm:$0x1]
          %v2932 = vld [vmem:[#allocation2 + $0xa8] sm:$0xf]
          %v2933 = vld [vmem:[#allocation2 + $0xac] sm:$0xf]
          %v2934 = vld [vmem:[#allocation2 + $0xb0] sm:$0x1]
          %v2935 = vld [vmem:[#allocation2 + $0xb4] sm:$0xf]
          %v2936 = vld [vmem:[#allocation2 + $0xb8] sm:$0xf]
          %v2937 = vld [vmem:[#allocation2 + $0xbc] sm:$0x1]
          %v2938 = vld [vmem:[#allocation2 + $0xc0] sm:$0xf]
          %v2939 = vld [vmem:[#allocation2 + $0xc4] sm:$0xf]
          %v2940 = vld [vmem:[#allocation2 + $0xc8] sm:$0x1]
          %v2941 = vld [vmem:[#allocation2 + $0xcc] sm:$0xf]
          %v2942 = vld [vmem:[#allocation2 + $0xd0] sm:$0xf]
          %v2943 = vld [vmem:[#allocation2 + $0xd4] sm:$0x1]
          %v2980 = vunpack.c.l.b16 %v2890
          %v2981 = vunpack.c.l.b16 %v2891
          %v2982 = vunpack.c.l.b16 %v2893
          %v2983 = vunpack.c.l.b16 %v2894
          %v2984 = vunpack.c.l.b16 %v2896
          %v2985 = vunpack.c.l.b16 %v2897
          %v2986 = vunpack.c.l.b16 %v2899
          %v2987 = vunpack.c.l.b16 %v2900
          %v2988 = vunpack.c.l.b16 %v2902
          %v2989 = vunpack.c.l.b16 %v2903
          %v2990 = vunpack.c.l.b16 %v2905
          %v2991 = vunpack.c.l.b16 %v2906
          %v2992 = vunpack.c.l.b16 %v2908
          %v2993 = vunpack.c.l.b16 %v2909
          %v2994 = vunpack.c.l.b16 %v2911
          %v2995 = vunpack.c.l.b16 %v2912
          %v2996 = vunpack.c.l.b16 %v2914
          %v2997 = vunpack.c.l.b16 %v2915
          %v2998 = vunpack.c.l.b16 %v2917
          %v2999 = vunpack.c.l.b16 %v2918
          %v3000 = vunpack.c.l.b16 %v2920
          %v3001 = vunpack.c.l.b16 %v2921
          %v3002 = vunpack.c.l.b16 %v2923
          %v3003 = vunpack.c.l.b16 %v2924
          %v3004 = vunpack.c.l.b16 %v2926
          %v3005 = vunpack.c.l.b16 %v2927
          %v3006 = vunpack.c.l.b16 %v2929
          %v3007 = vunpack.c.l.b16 %v2930
          %v3008 = vunpack.c.l.b16 %v2932
          %v3009 = vunpack.c.l.b16 %v2933
          %v3010 = vunpack.c.l.b16 %v2935
          %v3011 = vunpack.c.l.b16 %v2936
          %v3012 = vunpack.c.l.b16 %v2938
          %v3013 = vunpack.c.l.b16 %v2939
          %v3014 = vunpack.c.l.b16 %v2941
          %v3015 = vunpack.c.l.b16 %v2942
          %v3016 = vpack.c.b16 %v2981, %v2980
          %v3017 = vpack.c.b16 %v2983, %v2982
          %v3018 = vpack.c.b16 %v2985, %v2984
          %v3019 = vpack.c.b16 %v2987, %v2986
          %v3020 = vpack.c.b16 %v2989, %v2988
          %v3021 = vpack.c.b16 %v2991, %v2990
          %v3022 = vpack.c.b16 %v2993, %v2992
          %v3023 = vpack.c.b16 %v2995, %v2994
          %v3024 = vpack.c.b16 %v2997, %v2996
          %v3025 = vpack.c.b16 %v2999, %v2998
          %v3026 = vpack.c.b16 %v3001, %v3000
          %v3027 = vpack.c.b16 %v3003, %v3002
          %v3028 = vpack.c.b16 %v3005, %v3004
          %v3029 = vpack.c.b16 %v3007, %v3006
          %v3030 = vpack.c.b16 %v3009, %v3008
          %v3031 = vpack.c.b16 %v3011, %v3010
          %v3032 = vpack.c.b16 %v3013, %v3012
          %v3033 = vpack.c.b16 %v3015, %v3014
          %v3052 = vunpack.c.l.b16 %v2892
          %v3053 = vunpack.c.l.b16 %v2895
          %v3054 = vunpack.c.l.b16 %v2898
          %v3055 = vunpack.c.l.b16 %v2901
          %v3056 = vunpack.c.l.b16 %v2904
          %v3057 = vunpack.c.l.b16 %v2907
          %v3058 = vunpack.c.l.b16 %v2910
          %v3059 = vunpack.c.l.b16 %v2913
          %v3060 = vunpack.c.l.b16 %v2916
          %v3061 = vunpack.c.l.b16 %v2919
          %v3062 = vunpack.c.l.b16 %v2922
          %v3063 = vunpack.c.l.b16 %v2925
          %v3064 = vunpack.c.l.b16 %v2928
          %v3065 = vunpack.c.l.b16 %v2931
          %v3066 = vunpack.c.l.b16 %v2934
          %v3067 = vunpack.c.l.b16 %v2937
          %v3068 = vunpack.c.l.b16 %v2940
          %v3069 = vunpack.c.l.b16 %v2943
          %v3070 = vpack.c.b16 %v3052, %v3052
          %v3071 = vpack.c.b16 %v3053, %v3053
          %v3072 = vpack.c.b16 %v3054, %v3054
          %v3073 = vpack.c.b16 %v3055, %v3055
          %v3074 = vpack.c.b16 %v3056, %v3056
          %v3075 = vpack.c.b16 %v3057, %v3057
          %v3076 = vpack.c.b16 %v3058, %v3058
          %v3077 = vpack.c.b16 %v3059, %v3059
          %v3078 = vpack.c.b16 %v3060, %v3060
          %v3079 = vpack.c.b16 %v3061, %v3061
          %v3080 = vpack.c.b16 %v3062, %v3062
          %v3081 = vpack.c.b16 %v3063, %v3063
          %v3082 = vpack.c.b16 %v3064, %v3064
          %v3083 = vpack.c.b16 %v3065, %v3065
          %v3084 = vpack.c.b16 %v3066, %v3066
          %v3085 = vpack.c.b16 %v3067, %v3067
          %v3086 = vpack.c.b16 %v3068, %v3068
          %v3087 = vpack.c.b16 %v3069, %v3069
          %v3089 = vshrl.u32 %v3016, 16
          %v3091 = vshll.u32 %v3016, 16
          %v3093 = vrot.slane %v3091, 1
          %v3094 = vor.u32 %v3089, %v3093
          %v3096 = vshll.u32 %v3070, 16
          %v3098 = vrot.slane %v3096, 1
          %v3099 = vsel %vm1140, %v3094, %v3098
          %v3101 = vshrl.u32 %v3017, 16
          %v3103 = vshll.u32 %v3017, 16
          %v3105 = vrot.slane %v3103, 1
          %v3106 = vor.u32 %v3101, %v3105
          %v3108 = vshll.u32 %v3071, 16
          %v3110 = vrot.slane %v3108, 1
          %v3111 = vsel %vm1140, %v3106, %v3110
          %v3113 = vshrl.u32 %v3018, 16
          %v3115 = vshll.u32 %v3018, 16
          %v3117 = vrot.slane %v3115, 1
          %v3118 = vor.u32 %v3113, %v3117
          %v3120 = vshll.u32 %v3072, 16
          %v3122 = vrot.slane %v3120, 1
          %v3123 = vsel %vm1140, %v3118, %v3122
          %v3125 = vshrl.u32 %v3019, 16
          %v3127 = vshll.u32 %v3019, 16
          %v3129 = vrot.slane %v3127, 1
          %v3130 = vor.u32 %v3125, %v3129
          %v3132 = vshll.u32 %v3073, 16
          %v3134 = vrot.slane %v3132, 1
          %v3135 = vsel %vm1140, %v3130, %v3134
          %v3137 = vshrl.u32 %v3020, 16
          %v3139 = vshll.u32 %v3020, 16
          %v3141 = vrot.slane %v3139, 1
          %v3142 = vor.u32 %v3137, %v3141
          %v3144 = vshll.u32 %v3074, 16
          %v3146 = vrot.slane %v3144, 1
          %v3147 = vsel %vm1140, %v3142, %v3146
          %v3149 = vshrl.u32 %v3021, 16
          %v3151 = vshll.u32 %v3021, 16
          %v3153 = vrot.slane %v3151, 1
          %v3154 = vor.u32 %v3149, %v3153
          %v3156 = vshll.u32 %v3075, 16
          %v3158 = vrot.slane %v3156, 1
          %v3159 = vsel %vm1140, %v3154, %v3158
          %v3161 = vshrl.u32 %v3022, 16
          %v3163 = vshll.u32 %v3022, 16
          %v3165 = vrot.slane %v3163, 1
          %v3166 = vor.u32 %v3161, %v3165
          %v3168 = vshll.u32 %v3076, 16
          %v3170 = vrot.slane %v3168, 1
          %v3171 = vsel %vm1140, %v3166, %v3170
          %v3173 = vshrl.u32 %v3023, 16
          %v3175 = vshll.u32 %v3023, 16
          %v3177 = vrot.slane %v3175, 1
          %v3178 = vor.u32 %v3173, %v3177
          %v3180 = vshll.u32 %v3077, 16
          %v3182 = vrot.slane %v3180, 1
          %v3183 = vsel %vm1140, %v3178, %v3182
          %v3185 = vshrl.u32 %v3024, 16
          %v3187 = vshll.u32 %v3024, 16
          %v3189 = vrot.slane %v3187, 1
          %v3190 = vor.u32 %v3185, %v3189
          %v3192 = vshll.u32 %v3078, 16
          %v3194 = vrot.slane %v3192, 1
          %v3195 = vsel %vm1140, %v3190, %v3194
          %v3197 = vshrl.u32 %v3025, 16
          %v3199 = vshll.u32 %v3025, 16
          %v3201 = vrot.slane %v3199, 1
          %v3202 = vor.u32 %v3197, %v3201
          %v3204 = vshll.u32 %v3079, 16
          %v3206 = vrot.slane %v3204, 1
          %v3207 = vsel %vm1140, %v3202, %v3206
          %v3209 = vshrl.u32 %v3026, 16
          %v3211 = vshll.u32 %v3026, 16
          %v3213 = vrot.slane %v3211, 1
          %v3214 = vor.u32 %v3209, %v3213
          %v3216 = vshll.u32 %v3080, 16
          %v3218 = vrot.slane %v3216, 1
          %v3219 = vsel %vm1140, %v3214, %v3218
          %v3221 = vshrl.u32 %v3027, 16
          %v3223 = vshll.u32 %v3027, 16
          %v3225 = vrot.slane %v3223, 1
          %v3226 = vor.u32 %v3221, %v3225
          %v3228 = vshll.u32 %v3081, 16
          %v3230 = vrot.slane %v3228, 1
          %v3231 = vsel %vm1140, %v3226, %v3230
          %v3233 = vshrl.u32 %v3028, 16
          %v3235 = vshll.u32 %v3028, 16
          %v3237 = vrot.slane %v3235, 1
          %v3238 = vor.u32 %v3233, %v3237
          %v3240 = vshll.u32 %v3082, 16
          %v3242 = vrot.slane %v3240, 1
          %v3243 = vsel %vm1140, %v3238, %v3242
          %v3245 = vshrl.u32 %v3029, 16
          %v3247 = vshll.u32 %v3029, 16
          %v3249 = vrot.slane %v3247, 1
          %v3250 = vor.u32 %v3245, %v3249
          %v3252 = vshll.u32 %v3083, 16
          %v3254 = vrot.slane %v3252, 1
          %v3255 = vsel %vm1140, %v3250, %v3254
          %v3257 = vshrl.u32 %v3030, 16
          %v3259 = vshll.u32 %v3030, 16
          %v3261 = vrot.slane %v3259, 1
          %v3262 = vor.u32 %v3257, %v3261
          %v3264 = vshll.u32 %v3084, 16
          %v3266 = vrot.slane %v3264, 1
          %v3267 = vsel %vm1140, %v3262, %v3266
          %v3269 = vshrl.u32 %v3031, 16
          %v3271 = vshll.u32 %v3031, 16
          %v3273 = vrot.slane %v3271, 1
          %v3274 = vor.u32 %v3269, %v3273
          %v3276 = vshll.u32 %v3085, 16
          %v3278 = vrot.slane %v3276, 1
          %v3279 = vsel %vm1140, %v3274, %v3278
          %v3281 = vshrl.u32 %v3032, 16
          %v3283 = vshll.u32 %v3032, 16
          %v3285 = vrot.slane %v3283, 1
          %v3286 = vor.u32 %v3281, %v3285
          %v3288 = vshll.u32 %v3086, 16
          %v3290 = vrot.slane %v3288, 1
          %v3291 = vsel %vm1140, %v3286, %v3290
          %v3293 = vshrl.u32 %v3033, 16
          %v3295 = vshll.u32 %v3033, 16
          %v3297 = vrot.slane %v3295, 1
          %v3298 = vor.u32 %v3293, %v3297
          %v3300 = vshll.u32 %v3087, 16
          %v3302 = vrot.slane %v3300, 1
          %v3303 = vsel %vm1140, %v3298, %v3302
          %3304 = vrot.lane.b32.xlu0 %v3099, 32
          %v3305 = vpop.permute.xlu0 %3304
          %3306 = vrot.lane.b32.xlu0 %v3111, 32
          %v3307 = vpop.permute.xlu0 %3306
          %3308 = vrot.lane.b32.xlu0 %v3123, 32
          %v3309 = vpop.permute.xlu0 %3308
          %3310 = vrot.lane.b32.xlu0 %v3135, 32
          %v3311 = vpop.permute.xlu0 %3310
          %3312 = vrot.lane.b32.xlu0 %v3147, 32
          %v3313 = vpop.permute.xlu0 %3312
          %3314 = vrot.lane.b32.xlu0 %v3159, 32
          %v3315 = vpop.permute.xlu0 %3314
          %3316 = vrot.lane.b32.xlu0 %v3171, 32
          %v3317 = vpop.permute.xlu0 %3316
          %3318 = vrot.lane.b32.xlu0 %v3183, 32
          %v3319 = vpop.permute.xlu0 %3318
          %3320 = vrot.lane.b32.xlu0 %v3195, 32
          %v3321 = vpop.permute.xlu0 %3320
          %3322 = vrot.lane.b32.xlu0 %v3207, 32
          %v3323 = vpop.permute.xlu0 %3322
          %3324 = vrot.lane.b32.xlu0 %v3219, 32
          %v3325 = vpop.permute.xlu0 %3324
          %3326 = vrot.lane.b32.xlu0 %v3231, 32
          %v3327 = vpop.permute.xlu0 %3326
          %3328 = vrot.lane.b32.xlu0 %v3243, 32
          %v3329 = vpop.permute.xlu0 %3328
          %3330 = vrot.lane.b32.xlu0 %v3255, 32
          %v3331 = vpop.permute.xlu0 %3330
          %3332 = vrot.lane.b32.xlu0 %v3267, 32
          %v3333 = vpop.permute.xlu0 %3332
          %3334 = vrot.lane.b32.xlu0 %v3279, 32
          %v3335 = vpop.permute.xlu0 %3334
          %3336 = vrot.lane.b32.xlu0 %v3291, 32
          %v3337 = vpop.permute.xlu0 %3336
          %3338 = vrot.lane.b32.xlu0 %v3303, 32
          %v3339 = vpop.permute.xlu0 %3338
          %v3340 = vrot.slane %v3016, 1
          %v3341 = vrot.slane %v3070, 1
          %v3342 = vsel %vm1393, %v3340, %v3341
          %v3343 = vrot.slane %v3017, 1
          %v3344 = vrot.slane %v3071, 1
          %v3345 = vsel %vm1393, %v3343, %v3344
          %v3346 = vrot.slane %v3018, 1
          %v3347 = vrot.slane %v3072, 1
          %v3348 = vsel %vm1393, %v3346, %v3347
          %v3349 = vrot.slane %v3019, 1
          %v3350 = vrot.slane %v3073, 1
          %v3351 = vsel %vm1393, %v3349, %v3350
          %v3352 = vrot.slane %v3020, 1
          %v3353 = vrot.slane %v3074, 1
          %v3354 = vsel %vm1393, %v3352, %v3353
          %v3355 = vrot.slane %v3021, 1
          %v3356 = vrot.slane %v3075, 1
          %v3357 = vsel %vm1393, %v3355, %v3356
          %v3358 = vrot.slane %v3022, 1
          %v3359 = vrot.slane %v3076, 1
          %v3360 = vsel %vm1393, %v3358, %v3359
          %v3361 = vrot.slane %v3023, 1
          %v3362 = vrot.slane %v3077, 1
          %v3363 = vsel %vm1393, %v3361, %v3362
          %v3364 = vrot.slane %v3024, 1
          %v3365 = vrot.slane %v3078, 1
          %v3366 = vsel %vm1393, %v3364, %v3365
          %v3367 = vrot.slane %v3025, 1
          %v3368 = vrot.slane %v3079, 1
          %v3369 = vsel %vm1393, %v3367, %v3368
          %v3370 = vrot.slane %v3026, 1
          %v3371 = vrot.slane %v3080, 1
          %v3372 = vsel %vm1393, %v3370, %v3371
          %v3373 = vrot.slane %v3027, 1
          %v3374 = vrot.slane %v3081, 1
          %v3375 = vsel %vm1393, %v3373, %v3374
          %v3376 = vrot.slane %v3028, 1
          %v3377 = vrot.slane %v3082, 1
          %v3378 = vsel %vm1393, %v3376, %v3377
          %v3379 = vrot.slane %v3029, 1
          %v3380 = vrot.slane %v3083, 1
          %v3381 = vsel %vm1393, %v3379, %v3380
          %v3382 = vrot.slane %v3030, 1
          %v3383 = vrot.slane %v3084, 1
          %v3384 = vsel %vm1393, %v3382, %v3383
          %v3385 = vrot.slane %v3031, 1
          %v3386 = vrot.slane %v3085, 1
          %v3387 = vsel %vm1393, %v3385, %v3386
          %v3388 = vrot.slane %v3032, 1
          %v3389 = vrot.slane %v3086, 1
          %v3390 = vsel %vm1393, %v3388, %v3389
          %v3391 = vrot.slane %v3033, 1
          %v3392 = vrot.slane %v3087, 1
          %v3393 = vsel %vm1393, %v3391, %v3392
          %3394 = vrot.lane.b32.xlu0 %v3342, 64
          %v3395 = vpop.permute.xlu0 %3394
          %3396 = vrot.lane.b32.xlu0 %v3345, 64
          %v3397 = vpop.permute.xlu0 %3396
          %3398 = vrot.lane.b32.xlu0 %v3348, 64
          %v3399 = vpop.permute.xlu0 %3398
          %3400 = vrot.lane.b32.xlu0 %v3351, 64
          %v3401 = vpop.permute.xlu0 %3400
          %3402 = vrot.lane.b32.xlu0 %v3354, 64
          %v3403 = vpop.permute.xlu0 %3402
          %3404 = vrot.lane.b32.xlu0 %v3357, 64
          %v3405 = vpop.permute.xlu0 %3404
          %3406 = vrot.lane.b32.xlu0 %v3360, 64
          %v3407 = vpop.permute.xlu0 %3406
          %3408 = vrot.lane.b32.xlu0 %v3363, 64
          %v3409 = vpop.permute.xlu0 %3408
          %3410 = vrot.lane.b32.xlu0 %v3366, 64
          %v3411 = vpop.permute.xlu0 %3410
          %3412 = vrot.lane.b32.xlu0 %v3369, 64
          %v3413 = vpop.permute.xlu0 %3412
          %3414 = vrot.lane.b32.xlu0 %v3372, 64
          %v3415 = vpop.permute.xlu0 %3414
          %3416 = vrot.lane.b32.xlu0 %v3375, 64
          %v3417 = vpop.permute.xlu0 %3416
          %3418 = vrot.lane.b32.xlu0 %v3378, 64
          %v3419 = vpop.permute.xlu0 %3418
          %3420 = vrot.lane.b32.xlu0 %v3381, 64
          %v3421 = vpop.permute.xlu0 %3420
          %3422 = vrot.lane.b32.xlu0 %v3384, 64
          %v3423 = vpop.permute.xlu0 %3422
          %3424 = vrot.lane.b32.xlu0 %v3387, 64
          %v3425 = vpop.permute.xlu0 %3424
          %3426 = vrot.lane.b32.xlu0 %v3390, 64
          %v3427 = vpop.permute.xlu0 %3426
          %3428 = vrot.lane.b32.xlu0 %v3393, 64
          %v3429 = vpop.permute.xlu0 %3428
          %v3431 = vsel %vm1484, %v3016, %v3305
          %v3433 = vsel %vm1484, %v3017, %v3307
          %v3435 = vsel %vm1484, %v3018, %v3309
          %v3437 = vsel %vm1484, %v3019, %v3311
          %v3439 = vsel %vm1484, %v3020, %v3313
          %v3441 = vsel %vm1484, %v3021, %v3315
          %v3443 = vsel %vm1484, %v3022, %v3317
          %v3445 = vsel %vm1484, %v3023, %v3319
          %v3447 = vsel %vm1484, %v3024, %v3321
          %v3449 = vsel %vm1484, %v3025, %v3323
          %v3451 = vsel %vm1484, %v3026, %v3325
          %v3453 = vsel %vm1484, %v3027, %v3327
          %v3455 = vsel %vm1484, %v3028, %v3329
          %v3457 = vsel %vm1484, %v3029, %v3331
          %v3459 = vsel %vm1484, %v3030, %v3333
          %v3461 = vsel %vm1484, %v3031, %v3335
          %v3463 = vsel %vm1484, %v3032, %v3337
          %v3465 = vsel %vm1484, %v3033, %v3339
          %v3467 = vsel %vm1521, %v3431, %v3395
          %v3469 = vsel %vm1521, %v3433, %v3397
          %v3471 = vsel %vm1521, %v3435, %v3399
          %v3473 = vsel %vm1521, %v3437, %v3401
          %v3475 = vsel %vm1521, %v3439, %v3403
          %v3477 = vsel %vm1521, %v3441, %v3405
          %v3479 = vsel %vm1521, %v3443, %v3407
          %v3481 = vsel %vm1521, %v3445, %v3409
          %v3483 = vsel %vm1521, %v3447, %v3411
          %v3485 = vsel %vm1521, %v3449, %v3413
          %v3487 = vsel %vm1521, %v3451, %v3415
          %v3489 = vsel %vm1521, %v3453, %v3417
          %v3491 = vsel %vm1521, %v3455, %v3419
          %v3493 = vsel %vm1521, %v3457, %v3421
          %v3495 = vsel %vm1521, %v3459, %v3423
          %v3497 = vsel %vm1521, %v3461, %v3425
          %v3499 = vsel %vm1521, %v3463, %v3427
          %v3501 = vsel %vm1521, %v3465, %v3429
          %s3502 = smul.u32 %s2361, 36
          %s3503 = smul.addr %s3502, 4
          %s3504 = scalar_lea.vmem %s1, %s3503
          %v3505 = vld [vmem:[%s3504] sm:$0xf]
          %v3506 = vld [vmem:[%s3504 + $0x4] sm:$0xf]
          %v3507 = vld [vmem:[%s3504 + $0x8] sm:$0xf]
          %v3508 = vld [vmem:[%s3504 + $0xc] sm:$0xf]
          %v3509 = vld [vmem:[%s3504 + $0x10] sm:$0xf]
          %v3510 = vld [vmem:[%s3504 + $0x14] sm:$0xf]
          %v3511 = vld [vmem:[%s3504 + $0x18] sm:$0xf]
          %v3512 = vld [vmem:[%s3504 + $0x1c] sm:$0xf]
          %v3513 = vld [vmem:[%s3504 + $0x20] sm:$0xf]
          %v3514 = vld [vmem:[%s3504 + $0x24] sm:$0xf]
          %v3515 = vld [vmem:[%s3504 + $0x28] sm:$0xf]
          %v3516 = vld [vmem:[%s3504 + $0x2c] sm:$0xf]
          %v3517 = vld [vmem:[%s3504 + $0x30] sm:$0xf]
          %v3518 = vld [vmem:[%s3504 + $0x34] sm:$0xf]
          %v3519 = vld [vmem:[%s3504 + $0x38] sm:$0xf]
          %v3520 = vld [vmem:[%s3504 + $0x3c] sm:$0xf]
          %v3521 = vld [vmem:[%s3504 + $0x40] sm:$0xf]
          %v3522 = vld [vmem:[%s3504 + $0x44] sm:$0xf]
          %v3523 = vld [vmem:[%s3504 + $0x48] sm:$0xf]
          %v3524 = vld [vmem:[%s3504 + $0x4c] sm:$0xf]
          %v3525 = vld [vmem:[%s3504 + $0x50] sm:$0xf]
          %v3526 = vld [vmem:[%s3504 + $0x54] sm:$0xf]
          %v3527 = vld [vmem:[%s3504 + $0x58] sm:$0xf]
          %v3528 = vld [vmem:[%s3504 + $0x5c] sm:$0xf]
          %v3529 = vld [vmem:[%s3504 + $0x60] sm:$0xf]
          %v3530 = vld [vmem:[%s3504 + $0x64] sm:$0xf]
          %v3531 = vld [vmem:[%s3504 + $0x68] sm:$0xf]
          %v3532 = vld [vmem:[%s3504 + $0x6c] sm:$0xf]
          %v3533 = vld [vmem:[%s3504 + $0x70] sm:$0xf]
          %v3534 = vld [vmem:[%s3504 + $0x74] sm:$0xf]
          %v3535 = vld [vmem:[%s3504 + $0x78] sm:$0xf]
          %v3536 = vld [vmem:[%s3504 + $0x7c] sm:$0xf]
          %v3537 = vld [vmem:[%s3504 + $0x80] sm:$0xf]
          %v3538 = vld [vmem:[%s3504 + $0x84] sm:$0xf]
          %v3539 = vld [vmem:[%s3504 + $0x88] sm:$0xf]
          %v3540 = vld [vmem:[%s3504 + $0x8c] sm:$0xf]
          %s3541 = scalar_lea.vmem %s2, %s2361
          %v3542 = vld [vmem:[%s3541] sm:$0x1]
          %v3555 = vunpack.c.l.b16 %v3505
          %v3556 = vunpack.c.l.b16 %v3506
          %v3557 = vunpack.c.l.b16 %v3507
          %v3558 = vunpack.c.l.b16 %v3508
          %v3559 = vunpack.c.l.b16 %v3509
          %v3560 = vunpack.c.l.b16 %v3510
          %v3561 = vunpack.c.l.b16 %v3511
          %v3562 = vunpack.c.l.b16 %v3512
          %v3563 = vunpack.c.l.b16 %v3513
          %v3564 = vunpack.c.l.b16 %v3514
          %v3565 = vunpack.c.l.b16 %v3515
          %v3566 = vunpack.c.l.b16 %v3516
          %v3567 = vpack.c.b16 %v3556, %v3555
          %v3568 = vpack.c.b16 %v3558, %v3557
          %v3569 = vpack.c.b16 %v3560, %v3559
          %v3570 = vpack.c.b16 %v3562, %v3561
          %v3571 = vpack.c.b16 %v3564, %v3563
          %v3572 = vpack.c.b16 %v3566, %v3565
          %v3579 = vsel %vm1635, %v3467, 0
          %v3581 = vsel %vm1635, %v3469, 0
          %v3583 = vsel %vm1635, %v3471, 0
          %v3585 = vsel %vm1635, %v3473, 0
          %v3587 = vsel %vm1635, %v3475, 0
          %v3589 = vsel %vm1635, %v3477, 0
          %v3591 = vsel %vm1635, %v3479, 0
          %v3593 = vsel %vm1635, %v3481, 0
          %v3595 = vsel %vm1635, %v3483, 0
          %v3597 = vsel %vm1635, %v3485, 0
          %v3599 = vsel %vm1635, %v3487, 0
          %v3601 = vsel %vm1635, %v3489, 0
          %v3603 = vsel %vm1635, %v3491, 0
          %v3605 = vsel %vm1635, %v3493, 0
          %v3607 = vsel %vm1635, %v3495, 0
          %v3609 = vsel %vm1635, %v3497, 0
          %3611 = vmatprep.subr.bf16.mxu0 0
          %3612 = vmatpush1.bf16.msra.mxu0 %v3567
          %3613 = vmatprep.subr.bf16.mxu0 0
          %3614 = vmatpush1.bf16.msra.mxu0 %v3568
          %3615 = vmatprep.subr.bf16.mxu0 0
          %3616 = vmatpush1.bf16.msra.mxu0 %v3569
          %3617 = vmatprep.subr.bf16.mxu0 0
          %3618 = vmatpush1.bf16.msra.mxu0 %v3570
          %3619 = vmatprep.subr.bf16.mxu0 0
          %3620 = vmatpush1.bf16.msra.mxu0 %v3571
          %3621 = vmatprep.subr.bf16.mxu0 0
          %3622 = vmatpush1.bf16.msra.mxu0 %v3572
          %3623 = vmatprep.subr.bf16.mxu0 0
          %3624 = vmatpush1.bf16.msra.mxu0 0
          %3625 = vmatprep.subr.bf16.mxu0 0
          %3626 = vmatpush1.bf16.msra.mxu0 0
          %3627 = vmatprep.subr.bf16.mxu0 0
          %3628 = vmatpush1.bf16.msra.mxu0 0
          %3629 = vmatprep.subr.bf16.mxu0 0
          %3630 = vmatpush1.bf16.msra.mxu0 0
          %3631 = vmatprep.subr.bf16.mxu0 0
          %3632 = vmatpush1.bf16.msra.mxu0 0
          %3633 = vmatprep.subr.bf16.mxu0 0
          %3634 = vmatpush1.bf16.msra.mxu0 0
          %3635 = vmatprep.subr.bf16.mxu0 0
          %3636 = vmatpush1.bf16.msra.mxu0 0
          %3637 = vmatprep.subr.bf16.mxu0 0
          %3638 = vmatpush1.bf16.msra.mxu0 0
          %3639 = vmatprep.subr.bf16.mxu0 0
          %3640 = vmatpush1.bf16.msra.mxu0 0
          %3641 = vmatprep.subr.bf16.mxu0 0
          %3642 = vmatpush1.bf16.msra.mxu0 0
          %3643 = vmatprep.mubr.bf16.mxu0 0
          %3644 = vmatmul.mubr.bf16.gmra.mrb[0].mxu0 %v3579
          %v3645 = vpop.f32.mrb[0].mxu0
          %v3646 = vadd.f32 0.0, %v3645
          %v3647 = vpop.f32.mrb[0].mxu0
          %v3648 = vpop.f32.mrb[0].mxu0
          %v3649 = vadd.f32 0.0, %v3648
          %v3650 = vpop.f32.mrb[0].mxu0
          %3651 = vmatprep.mubr.bf16.mxu0 0
          %3652 = vmatmul.mubr.bf16.gmra.mrb[0].mxu0 %v3581
          %v3653 = vpop.f32.mrb[0].mxu0
          %v3654 = vadd.f32 0.0, %v3653
          %v3655 = vpop.f32.mrb[0].mxu0
          %v3656 = vpop.f32.mrb[0].mxu0
          %v3657 = vadd.f32 0.0, %v3656
          %v3658 = vpop.f32.mrb[0].mxu0
          %3659 = vmatprep.mubr.bf16.mxu0 0
          %3660 = vmatmul.mubr.bf16.gmra.mrb[0].mxu0 %v3583
          %v3661 = vpop.f32.mrb[0].mxu0
          %v3662 = vadd.f32 0.0, %v3661
          %v3663 = vpop.f32.mrb[0].mxu0
          %v3664 = vpop.f32.mrb[0].mxu0
          %v3665 = vadd.f32 0.0, %v3664
          %v3666 = vpop.f32.mrb[0].mxu0
          %3667 = vmatprep.mubr.bf16.mxu0 0
          %3668 = vmatmul.mubr.bf16.gmra.mrb[0].mxu0 %v3585
          %v3669 = vpop.f32.mrb[0].mxu0
          %v3670 = vadd.f32 0.0, %v3669
          %v3671 = vpop.f32.mrb[0].mxu0
          %v3672 = vpop.f32.mrb[0].mxu0
          %v3673 = vadd.f32 0.0, %v3672
          %v3674 = vpop.f32.mrb[0].mxu0
          %3675 = vmatprep.mubr.bf16.mxu0 0
          %3676 = vmatmul.mubr.bf16.gmra.mrb[0].mxu0 %v3587
          %v3677 = vpop.f32.mrb[0].mxu0
          %v3678 = vadd.f32 0.0, %v3677
          %v3679 = vpop.f32.mrb[0].mxu0
          %v3680 = vpop.f32.mrb[0].mxu0
          %v3681 = vadd.f32 0.0, %v3680
          %v3682 = vpop.f32.mrb[0].mxu0
          %3683 = vmatprep.mubr.bf16.mxu0 0
          %3684 = vmatmul.mubr.bf16.gmra.mrb[0].mxu0 %v3589
          %v3685 = vpop.f32.mrb[0].mxu0
          %v3686 = vadd.f32 0.0, %v3685
          %v3687 = vpop.f32.mrb[0].mxu0
          %v3688 = vpop.f32.mrb[0].mxu0
          %v3689 = vadd.f32 0.0, %v3688
          %v3690 = vpop.f32.mrb[0].mxu0
          %3691 = vmatprep.mubr.bf16.mxu0 0
          %3692 = vmatmul.mubr.bf16.gmra.mrb[0].mxu0 %v3591
          %v3693 = vpop.f32.mrb[0].mxu0
          %v3694 = vadd.f32 0.0, %v3693
          %v3695 = vpop.f32.mrb[0].mxu0
          %v3696 = vpop.f32.mrb[0].mxu0
          %v3697 = vadd.f32 0.0, %v3696
          %v3698 = vpop.f32.mrb[0].mxu0
          %3699 = vmatprep.mubr.bf16.mxu0 0
          %3700 = vmatmul.mubr.bf16.gmra.mrb[0].mxu0 %v3593
          %v3701 = vpop.f32.mrb[0].mxu0
          %v3702 = vadd.f32 0.0, %v3701
          %v3703 = vpop.f32.mrb[0].mxu0
          %v3704 = vpop.f32.mrb[0].mxu0
          %v3705 = vadd.f32 0.0, %v3704
          %v3706 = vpop.f32.mrb[0].mxu0
          %3707 = vmatprep.mubr.bf16.mxu0 0
          %3708 = vmatmul.mubr.bf16.gmra.mrb[0].mxu0 %v3595
          %v3709 = vpop.f32.mrb[0].mxu0
          %v3710 = vadd.f32 0.0, %v3709
          %v3711 = vpop.f32.mrb[0].mxu0
          %v3712 = vpop.f32.mrb[0].mxu0
          %v3713 = vadd.f32 0.0, %v3712
          %v3714 = vpop.f32.mrb[0].mxu0
          %3715 = vmatprep.mubr.bf16.mxu0 0
          %3716 = vmatmul.mubr.bf16.gmra.mrb[0].mxu0 %v3597
          %v3717 = vpop.f32.mrb[0].mxu0
          %v3718 = vadd.f32 0.0, %v3717
          %v3719 = vpop.f32.mrb[0].mxu0
          %v3720 = vpop.f32.mrb[0].mxu0
          %v3721 = vadd.f32 0.0, %v3720
          %v3722 = vpop.f32.mrb[0].mxu0
          %3723 = vmatprep.mubr.bf16.mxu0 0
          %3724 = vmatmul.mubr.bf16.gmra.mrb[0].mxu0 %v3599
          %v3725 = vpop.f32.mrb[0].mxu0
          %v3726 = vadd.f32 0.0, %v3725
          %v3727 = vpop.f32.mrb[0].mxu0
          %v3728 = vpop.f32.mrb[0].mxu0
          %v3729 = vadd.f32 0.0, %v3728
          %v3730 = vpop.f32.mrb[0].mxu0
          %3731 = vmatprep.mubr.bf16.mxu0 0
          %3732 = vmatmul.mubr.bf16.gmra.mrb[0].mxu0 %v3601
          %v3733 = vpop.f32.mrb[0].mxu0
          %v3734 = vadd.f32 0.0, %v3733
          %v3735 = vpop.f32.mrb[0].mxu0
          %v3736 = vpop.f32.mrb[0].mxu0
          %v3737 = vadd.f32 0.0, %v3736
          %v3738 = vpop.f32.mrb[0].mxu0
          %3739 = vmatprep.mubr.bf16.mxu0 0
          %3740 = vmatmul.mubr.bf16.gmra.mrb[0].mxu0 %v3603
          %v3741 = vpop.f32.mrb[0].mxu0
          %v3742 = vadd.f32 0.0, %v3741
          %v3743 = vpop.f32.mrb[0].mxu0
          %v3744 = vpop.f32.mrb[0].mxu0
          %v3745 = vadd.f32 0.0, %v3744
          %v3746 = vpop.f32.mrb[0].mxu0
          %3747 = vmatprep.mubr.bf16.mxu0 0
          %3748 = vmatmul.mubr.bf16.gmra.mrb[0].mxu0 %v3605
          %v3749 = vpop.f32.mrb[0].mxu0
          %v3750 = vadd.f32 0.0, %v3749
          %v3751 = vpop.f32.mrb[0].mxu0
          %v3752 = vpop.f32.mrb[0].mxu0
          %v3753 = vadd.f32 0.0, %v3752
          %v3754 = vpop.f32.mrb[0].mxu0
          %3755 = vmatprep.mubr.bf16.mxu0 0
          %3756 = vmatmul.mubr.bf16.gmra.mrb[0].mxu0 %v3607
          %v3757 = vpop.f32.mrb[0].mxu0
          %v3758 = vadd.f32 0.0, %v3757
          %v3759 = vpop.f32.mrb[0].mxu0
          %v3760 = vpop.f32.mrb[0].mxu0
          %v3761 = vadd.f32 0.0, %v3760
          %v3762 = vpop.f32.mrb[0].mxu0
          %3763 = vmatprep.mubr.bf16.mxu0 0
          %3764 = vmatmul.mubr.bf16.gmra.mrb[0].mxu0 %v3609
          %v3765 = vpop.f32.mrb[0].mxu0
          %v3766 = vadd.f32 0.0, %v3765
          %v3767 = vpop.f32.mrb[0].mxu0
          %v3768 = vpop.f32.mrb[0].mxu0
          %v3769 = vadd.f32 0.0, %v3768
          %v3770 = vpop.f32.mrb[0].mxu0
          %3771 = vdwg.mxu0
          %v3773 = vlaneseq
          %v3774 = vshrl.u32 %v3773, 7
          %v3775 = vsub.s32 0, %v3774
          %v3776 = vrot.slane %v3542, %v3775
          %v3778 = vadd.f32 %v3776, %v3646
          %v3779 = vadd.f32 %v3776, %v3649
          %v3780 = vadd.f32 %v3776, %v3654
          %v3781 = vadd.f32 %v3776, %v3657
          %v3782 = vadd.f32 %v3776, %v3662
          %v3783 = vadd.f32 %v3776, %v3665
          %v3784 = vadd.f32 %v3776, %v3670
          %v3785 = vadd.f32 %v3776, %v3673
          %v3786 = vadd.f32 %v3776, %v3678
          %v3787 = vadd.f32 %v3776, %v3681
          %v3788 = vadd.f32 %v3776, %v3686
          %v3789 = vadd.f32 %v3776, %v3689
          %v3790 = vadd.f32 %v3776, %v3694
          %v3791 = vadd.f32 %v3776, %v3697
          %v3792 = vadd.f32 %v3776, %v3702
          %v3793 = vadd.f32 %v3776, %v3705
          %v3794 = vadd.f32 %v3776, %v3710
          %v3795 = vadd.f32 %v3776, %v3713
          %v3796 = vadd.f32 %v3776, %v3718
          %v3797 = vadd.f32 %v3776, %v3721
          %v3798 = vadd.f32 %v3776, %v3726
          %v3799 = vadd.f32 %v3776, %v3729
          %v3800 = vadd.f32 %v3776, %v3734
          %v3801 = vadd.f32 %v3776, %v3737
          %v3802 = vadd.f32 %v3776, %v3742
          %v3803 = vadd.f32 %v3776, %v3745
          %v3804 = vadd.f32 %v3776, %v3750
          %v3805 = vadd.f32 %v3776, %v3753
          %v3806 = vadd.f32 %v3776, %v3758
          %v3807 = vadd.f32 %v3776, %v3761
          %v3808 = vadd.f32 %v3776, %v3766
          %v3809 = vadd.f32 %v3776, %v3769
          %v3822 = vunpack.c.l.b16 %v3517
          %v3823 = vunpack.c.l.b16 %v3518
          %v3824 = vunpack.c.l.b16 %v3519
          %v3825 = vunpack.c.l.b16 %v3520
          %v3826 = vunpack.c.l.b16 %v3521
          %v3827 = vunpack.c.l.b16 %v3522
          %v3828 = vunpack.c.l.b16 %v3523
          %v3829 = vunpack.c.l.b16 %v3524
          %v3830 = vunpack.c.l.b16 %v3525
          %v3831 = vunpack.c.l.b16 %v3526
          %v3832 = vunpack.c.l.b16 %v3527
          %v3833 = vunpack.c.l.b16 %v3528
          %v3834 = vpack.c.b16 %v3823, %v3822
          %v3835 = vpack.c.b16 %v3825, %v3824
          %v3836 = vpack.c.b16 %v3827, %v3826
          %v3837 = vpack.c.b16 %v3829, %v3828
          %v3838 = vpack.c.b16 %v3831, %v3830
          %v3839 = vpack.c.b16 %v3833, %v3832
          %v3846 = vsel %vm1635, %v3499, 0
          %3848 = vmatprep.subr.bf16.mxu0 0
          %3849 = vmatpush1.bf16.msra.mxu0 %v3834
          %3850 = vmatprep.subr.bf16.mxu0 0
          %3851 = vmatpush1.bf16.msra.mxu0 %v3835
          %3852 = vmatprep.subr.bf16.mxu0 0
          %3853 = vmatpush1.bf16.msra.mxu0 %v3836
          %3854 = vmatprep.subr.bf16.mxu0 0
          %3855 = vmatpush1.bf16.msra.mxu0 %v3837
          %3856 = vmatprep.subr.bf16.mxu0 0
          %3857 = vmatpush1.bf16.msra.mxu0 %v3838
          %3858 = vmatprep.subr.bf16.mxu0 0
          %3859 = vmatpush1.bf16.msra.mxu0 %v3839
          %3860 = vmatprep.subr.bf16.mxu0 0
          %3861 = vmatpush1.bf16.msra.mxu0 0
          %3862 = vmatprep.subr.bf16.mxu0 0
          %3863 = vmatpush1.bf16.msra.mxu0 0
          %3864 = vmatprep.subr.bf16.mxu0 0
          %3865 = vmatpush1.bf16.msra.mxu0 0
          %3866 = vmatprep.subr.bf16.mxu0 0
          %3867 = vmatpush1.bf16.msra.mxu0 0
          %3868 = vmatprep.subr.bf16.mxu0 0
          %3869 = vmatpush1.bf16.msra.mxu0 0
          %3870 = vmatprep.subr.bf16.mxu0 0
          %3871 = vmatpush1.bf16.msra.mxu0 0
          %3872 = vmatprep.subr.bf16.mxu0 0
          %3873 = vmatpush1.bf16.msra.mxu0 0
          %3874 = vmatprep.subr.bf16.mxu0 0
          %3875 = vmatpush1.bf16.msra.mxu0 0
          %3876 = vmatprep.subr.bf16.mxu0 0
          %3877 = vmatpush1.bf16.msra.mxu0 0
          %3878 = vmatprep.subr.bf16.mxu0 0
          %3879 = vmatpush1.bf16.msra.mxu0 0
          %3880 = vmatprep.mubr.bf16.mxu0 0
          %3881 = vmatmul.mubr.bf16.gmra.mrb[0].mxu0 %v3581
          %v3882 = vpop.f32.mrb[0].mxu0
          %v3883 = vadd.f32 0.0, %v3882
          %v3884 = vpop.f32.mrb[0].mxu0
          %v3885 = vpop.f32.mrb[0].mxu0
          %v3886 = vadd.f32 0.0, %v3885
          %v3887 = vpop.f32.mrb[0].mxu0
          %3888 = vmatprep.mubr.bf16.mxu0 0
          %3889 = vmatmul.mubr.bf16.gmra.mrb[0].mxu0 %v3583
          %v3890 = vpop.f32.mrb[0].mxu0
          %v3891 = vadd.f32 0.0, %v3890
          %v3892 = vpop.f32.mrb[0].mxu0
          %v3893 = vpop.f32.mrb[0].mxu0
          %v3894 = vadd.f32 0.0, %v3893
          %v3895 = vpop.f32.mrb[0].mxu0
          %3896 = vmatprep.mubr.bf16.mxu0 0
          %3897 = vmatmul.mubr.bf16.gmra.mrb[0].mxu0 %v3585
          %v3898 = vpop.f32.mrb[0].mxu0
          %v3899 = vadd.f32 0.0, %v3898
          %v3900 = vpop.f32.mrb[0].mxu0
          %v3901 = vpop.f32.mrb[0].mxu0
          %v3902 = vadd.f32 0.0, %v3901
          %v3903 = vpop.f32.mrb[0].mxu0
          %3904 = vmatprep.mubr.bf16.mxu0 0
          %3905 = vmatmul.mubr.bf16.gmra.mrb[0].mxu0 %v3587
          %v3906 = vpop.f32.mrb[0].mxu0
          %v3907 = vadd.f32 0.0, %v3906
          %v3908 = vpop.f32.mrb[0].mxu0
          %v3909 = vpop.f32.mrb[0].mxu0
          %v3910 = vadd.f32 0.0, %v3909
          %v3911 = vpop.f32.mrb[0].mxu0
          %3912 = vmatprep.mubr.bf16.mxu0 0
          %3913 = vmatmul.mubr.bf16.gmra.mrb[0].mxu0 %v3589
          %v3914 = vpop.f32.mrb[0].mxu0
          %v3915 = vadd.f32 0.0, %v3914
          %v3916 = vpop.f32.mrb[0].mxu0
          %v3917 = vpop.f32.mrb[0].mxu0
          %v3918 = vadd.f32 0.0, %v3917
          %v3919 = vpop.f32.mrb[0].mxu0
          %3920 = vmatprep.mubr.bf16.mxu0 0
          %3921 = vmatmul.mubr.bf16.gmra.mrb[0].mxu0 %v3591
          %v3922 = vpop.f32.mrb[0].mxu0
          %v3923 = vadd.f32 0.0, %v3922
          %v3924 = vpop.f32.mrb[0].mxu0
          %v3925 = vpop.f32.mrb[0].mxu0
          %v3926 = vadd.f32 0.0, %v3925
          %v3927 = vpop.f32.mrb[0].mxu0
          %3928 = vmatprep.mubr.bf16.mxu0 0
          %3929 = vmatmul.mubr.bf16.gmra.mrb[0].mxu0 %v3593
          %v3930 = vpop.f32.mrb[0].mxu0
          %v3931 = vadd.f32 0.0, %v3930
          %v3932 = vpop.f32.mrb[0].mxu0
          %v3933 = vpop.f32.mrb[0].mxu0
          %v3934 = vadd.f32 0.0, %v3933
          %v3935 = vpop.f32.mrb[0].mxu0
          %3936 = vmatprep.mubr.bf16.mxu0 0
          %3937 = vmatmul.mubr.bf16.gmra.mrb[0].mxu0 %v3595
          %v3938 = vpop.f32.mrb[0].mxu0
          %v3939 = vadd.f32 0.0, %v3938
          %v3940 = vpop.f32.mrb[0].mxu0
          %v3941 = vpop.f32.mrb[0].mxu0
          %v3942 = vadd.f32 0.0, %v3941
          %v3943 = vpop.f32.mrb[0].mxu0
          %3944 = vmatprep.mubr.bf16.mxu0 0
          %3945 = vmatmul.mubr.bf16.gmra.mrb[0].mxu0 %v3597
          %v3946 = vpop.f32.mrb[0].mxu0
          %v3947 = vadd.f32 0.0, %v3946
          %v3948 = vpop.f32.mrb[0].mxu0
          %v3949 = vpop.f32.mrb[0].mxu0
          %v3950 = vadd.f32 0.0, %v3949
          %v3951 = vpop.f32.mrb[0].mxu0
          %3952 = vmatprep.mubr.bf16.mxu0 0
          %3953 = vmatmul.mubr.bf16.gmra.mrb[0].mxu0 %v3599
          %v3954 = vpop.f32.mrb[0].mxu0
          %v3955 = vadd.f32 0.0, %v3954
          %v3956 = vpop.f32.mrb[0].mxu0
          %v3957 = vpop.f32.mrb[0].mxu0
          %v3958 = vadd.f32 0.0, %v3957
          %v3959 = vpop.f32.mrb[0].mxu0
          %3960 = vmatprep.mubr.bf16.mxu0 0
          %3961 = vmatmul.mubr.bf16.gmra.mrb[0].mxu0 %v3601
          %v3962 = vpop.f32.mrb[0].mxu0
          %v3963 = vadd.f32 0.0, %v3962
          %v3964 = vpop.f32.mrb[0].mxu0
          %v3965 = vpop.f32.mrb[0].mxu0
          %v3966 = vadd.f32 0.0, %v3965
          %v3967 = vpop.f32.mrb[0].mxu0
          %3968 = vmatprep.mubr.bf16.mxu0 0
          %3969 = vmatmul.mubr.bf16.gmra.mrb[0].mxu0 %v3603
          %v3970 = vpop.f32.mrb[0].mxu0
          %v3971 = vadd.f32 0.0, %v3970
          %v3972 = vpop.f32.mrb[0].mxu0
          %v3973 = vpop.f32.mrb[0].mxu0
          %v3974 = vadd.f32 0.0, %v3973
          %v3975 = vpop.f32.mrb[0].mxu0
          %3976 = vmatprep.mubr.bf16.mxu0 0
          %3977 = vmatmul.mubr.bf16.gmra.mrb[0].mxu0 %v3605
          %v3978 = vpop.f32.mrb[0].mxu0
          %v3979 = vadd.f32 0.0, %v3978
          %v3980 = vpop.f32.mrb[0].mxu0
          %v3981 = vpop.f32.mrb[0].mxu0
          %v3982 = vadd.f32 0.0, %v3981
          %v3983 = vpop.f32.mrb[0].mxu0
          %3984 = vmatprep.mubr.bf16.mxu0 0
          %3985 = vmatmul.mubr.bf16.gmra.mrb[0].mxu0 %v3607
          %v3986 = vpop.f32.mrb[0].mxu0
          %v3987 = vadd.f32 0.0, %v3986
          %v3988 = vpop.f32.mrb[0].mxu0
          %v3989 = vpop.f32.mrb[0].mxu0
          %v3990 = vadd.f32 0.0, %v3989
          %v3991 = vpop.f32.mrb[0].mxu0
          %3992 = vmatprep.mubr.bf16.mxu0 0
          %3993 = vmatmul.mubr.bf16.gmra.mrb[0].mxu0 %v3609
          %v3994 = vpop.f32.mrb[0].mxu0
          %v3995 = vadd.f32 0.0, %v3994
          %v3996 = vpop.f32.mrb[0].mxu0
          %v3997 = vpop.f32.mrb[0].mxu0
          %v3998 = vadd.f32 0.0, %v3997
          %v3999 = vpop.f32.mrb[0].mxu0
          %4000 = vmatprep.mubr.bf16.mxu0 0
          %4001 = vmatmul.mubr.bf16.gmra.mrb[0].mxu0 %v3846
          %v4002 = vpop.f32.mrb[0].mxu0
          %v4003 = vadd.f32 0.0, %v4002
          %v4004 = vpop.f32.mrb[0].mxu0
          %v4005 = vpop.f32.mrb[0].mxu0
          %v4006 = vadd.f32 0.0, %v4005
          %v4007 = vpop.f32.mrb[0].mxu0
          %4008 = vdwg.mxu0
          %v4009 = vadd.f32 %v3778, %v3883
          %v4010 = vadd.f32 %v3779, %v3886
          %v4011 = vadd.f32 %v3780, %v3891
          %v4012 = vadd.f32 %v3781, %v3894
          %v4013 = vadd.f32 %v3782, %v3899
          %v4014 = vadd.f32 %v3783, %v3902
          %v4015 = vadd.f32 %v3784, %v3907
          %v4016 = vadd.f32 %v3785, %v3910
          %v4017 = vadd.f32 %v3786, %v3915
          %v4018 = vadd.f32 %v3787, %v3918
          %v4019 = vadd.f32 %v3788, %v3923
          %v4020 = vadd.f32 %v3789, %v3926
          %v4021 = vadd.f32 %v3790, %v3931
          %v4022 = vadd.f32 %v3791, %v3934
          %v4023 = vadd.f32 %v3792, %v3939
          %v4024 = vadd.f32 %v3793, %v3942
          %v4025 = vadd.f32 %v3794, %v3947
          %v4026 = vadd.f32 %v3795, %v3950
          %v4027 = vadd.f32 %v3796, %v3955
          %v4028 = vadd.f32 %v3797, %v3958
          %v4029 = vadd.f32 %v3798, %v3963
          %v4030 = vadd.f32 %v3799, %v3966
          %v4031 = vadd.f32 %v3800, %v3971
          %v4032 = vadd.f32 %v3801, %v3974
          %v4033 = vadd.f32 %v3802, %v3979
          %v4034 = vadd.f32 %v3803, %v3982
          %v4035 = vadd.f32 %v3804, %v3987
          %v4036 = vadd.f32 %v3805, %v3990
          %v4037 = vadd.f32 %v3806, %v3995
          %v4038 = vadd.f32 %v3807, %v3998
          %v4039 = vadd.f32 %v3808, %v4003
          %v4040 = vadd.f32 %v3809, %v4006
          %v4053 = vunpack.c.l.b16 %v3529
          %v4054 = vunpack.c.l.b16 %v3530
          %v4055 = vunpack.c.l.b16 %v3531
          %v4056 = vunpack.c.l.b16 %v3532
          %v4057 = vunpack.c.l.b16 %v3533
          %v4058 = vunpack.c.l.b16 %v3534
          %v4059 = vunpack.c.l.b16 %v3535
          %v4060 = vunpack.c.l.b16 %v3536
          %v4061 = vunpack.c.l.b16 %v3537
          %v4062 = vunpack.c.l.b16 %v3538
          %v4063 = vunpack.c.l.b16 %v3539
          %v4064 = vunpack.c.l.b16 %v3540
          %v4065 = vpack.c.b16 %v4054, %v4053
          %v4066 = vpack.c.b16 %v4056, %v4055
          %v4067 = vpack.c.b16 %v4058, %v4057
          %v4068 = vpack.c.b16 %v4060, %v4059
          %v4069 = vpack.c.b16 %v4062, %v4061
          %v4070 = vpack.c.b16 %v4064, %v4063
          %v4077 = vsel %vm1635, %v3501, 0
          %4079 = vmatprep.subr.bf16.mxu0 0
          %4080 = vmatpush1.bf16.msra.mxu0 %v4065
          %4081 = vmatprep.subr.bf16.mxu0 0
          %4082 = vmatpush1.bf16.msra.mxu0 %v4066
          %4083 = vmatprep.subr.bf16.mxu0 0
          %4084 = vmatpush1.bf16.msra.mxu0 %v4067
          %4085 = vmatprep.subr.bf16.mxu0 0
          %4086 = vmatpush1.bf16.msra.mxu0 %v4068
          %4087 = vmatprep.subr.bf16.mxu0 0
          %4088 = vmatpush1.bf16.msra.mxu0 %v4069
          %4089 = vmatprep.subr.bf16.mxu0 0
          %4090 = vmatpush1.bf16.msra.mxu0 %v4070
          %4091 = vmatprep.subr.bf16.mxu0 0
          %4092 = vmatpush1.bf16.msra.mxu0 0
          %4093 = vmatprep.subr.bf16.mxu0 0
          %4094 = vmatpush1.bf16.msra.mxu0 0
          %4095 = vmatprep.subr.bf16.mxu0 0
          %4096 = vmatpush1.bf16.msra.mxu0 0
          %4097 = vmatprep.subr.bf16.mxu0 0
          %4098 = vmatpush1.bf16.msra.mxu0 0
          %4099 = vmatprep.subr.bf16.mxu0 0
          %4100 = vmatpush1.bf16.msra.mxu0 0
          %4101 = vmatprep.subr.bf16.mxu0 0
          %4102 = vmatpush1.bf16.msra.mxu0 0
          %4103 = vmatprep.subr.bf16.mxu0 0
          %4104 = vmatpush1.bf16.msra.mxu0 0
          %4105 = vmatprep.subr.bf16.mxu0 0
          %4106 = vmatpush1.bf16.msra.mxu0 0
          %4107 = vmatprep.subr.bf16.mxu0 0
          %4108 = vmatpush1.bf16.msra.mxu0 0
          %4109 = vmatprep.subr.bf16.mxu0 0
          %4110 = vmatpush1.bf16.msra.mxu0 0
          %4111 = vmatprep.mubr.bf16.mxu0 0
          %4112 = vmatmul.mubr.bf16.gmra.mrb[0].mxu0 %v3583
          %v4113 = vpop.f32.mrb[0].mxu0
          %v4114 = vadd.f32 0.0, %v4113
          %v4115 = vpop.f32.mrb[0].mxu0
          %v4116 = vpop.f32.mrb[0].mxu0
          %v4117 = vadd.f32 0.0, %v4116
          %v4118 = vpop.f32.mrb[0].mxu0
          %4119 = vmatprep.mubr.bf16.mxu0 0
          %4120 = vmatmul.mubr.bf16.gmra.mrb[0].mxu0 %v3585
          %v4121 = vpop.f32.mrb[0].mxu0
          %v4122 = vadd.f32 0.0, %v4121
          %v4123 = vpop.f32.mrb[0].mxu0
          %v4124 = vpop.f32.mrb[0].mxu0
          %v4125 = vadd.f32 0.0, %v4124
          %v4126 = vpop.f32.mrb[0].mxu0
          %4127 = vmatprep.mubr.bf16.mxu0 0
          %4128 = vmatmul.mubr.bf16.gmra.mrb[0].mxu0 %v3587
          %v4129 = vpop.f32.mrb[0].mxu0
          %v4130 = vadd.f32 0.0, %v4129
          %v4131 = vpop.f32.mrb[0].mxu0
          %v4132 = vpop.f32.mrb[0].mxu0
          %v4133 = vadd.f32 0.0, %v4132
          %v4134 = vpop.f32.mrb[0].mxu0
          %4135 = vmatprep.mubr.bf16.mxu0 0
          %4136 = vmatmul.mubr.bf16.gmra.mrb[0].mxu0 %v3589
          %v4137 = vpop.f32.mrb[0].mxu0
          %v4138 = vadd.f32 0.0, %v4137
          %v4139 = vpop.f32.mrb[0].mxu0
          %v4140 = vpop.f32.mrb[0].mxu0
          %v4141 = vadd.f32 0.0, %v4140
          %v4142 = vpop.f32.mrb[0].mxu0
          %4143 = vmatprep.mubr.bf16.mxu0 0
          %4144 = vmatmul.mubr.bf16.gmra.mrb[0].mxu0 %v3591
          %v4145 = vpop.f32.mrb[0].mxu0
          %v4146 = vadd.f32 0.0, %v4145
          %v4147 = vpop.f32.mrb[0].mxu0
          %v4148 = vpop.f32.mrb[0].mxu0
          %v4149 = vadd.f32 0.0, %v4148
          %v4150 = vpop.f32.mrb[0].mxu0
          %4151 = vmatprep.mubr.bf16.mxu0 0
          %4152 = vmatmul.mubr.bf16.gmra.mrb[0].mxu0 %v3593
          %v4153 = vpop.f32.mrb[0].mxu0
          %v4154 = vadd.f32 0.0, %v4153
          %v4155 = vpop.f32.mrb[0].mxu0
          %v4156 = vpop.f32.mrb[0].mxu0
          %v4157 = vadd.f32 0.0, %v4156
          %v4158 = vpop.f32.mrb[0].mxu0
          %4159 = vmatprep.mubr.bf16.mxu0 0
          %4160 = vmatmul.mubr.bf16.gmra.mrb[0].mxu0 %v3595
          %v4161 = vpop.f32.mrb[0].mxu0
          %v4162 = vadd.f32 0.0, %v4161
          %v4163 = vpop.f32.mrb[0].mxu0
          %v4164 = vpop.f32.mrb[0].mxu0
          %v4165 = vadd.f32 0.0, %v4164
          %v4166 = vpop.f32.mrb[0].mxu0
          %4167 = vmatprep.mubr.bf16.mxu0 0
          %4168 = vmatmul.mubr.bf16.gmra.mrb[0].mxu0 %v3597
          %v4169 = vpop.f32.mrb[0].mxu0
          %v4170 = vadd.f32 0.0, %v4169
          %v4171 = vpop.f32.mrb[0].mxu0
          %v4172 = vpop.f32.mrb[0].mxu0
          %v4173 = vadd.f32 0.0, %v4172
          %v4174 = vpop.f32.mrb[0].mxu0
          %4175 = vmatprep.mubr.bf16.mxu0 0
          %4176 = vmatmul.mubr.bf16.gmra.mrb[0].mxu0 %v3599
          %v4177 = vpop.f32.mrb[0].mxu0
          %v4178 = vadd.f32 0.0, %v4177
          %v4179 = vpop.f32.mrb[0].mxu0
          %v4180 = vpop.f32.mrb[0].mxu0
          %v4181 = vadd.f32 0.0, %v4180
          %v4182 = vpop.f32.mrb[0].mxu0
          %4183 = vmatprep.mubr.bf16.mxu0 0
          %4184 = vmatmul.mubr.bf16.gmra.mrb[0].mxu0 %v3601
          %v4185 = vpop.f32.mrb[0].mxu0
          %v4186 = vadd.f32 0.0, %v4185
          %v4187 = vpop.f32.mrb[0].mxu0
          %v4188 = vpop.f32.mrb[0].mxu0
          %v4189 = vadd.f32 0.0, %v4188
          %v4190 = vpop.f32.mrb[0].mxu0
          %4191 = vmatprep.mubr.bf16.mxu0 0
          %4192 = vmatmul.mubr.bf16.gmra.mrb[0].mxu0 %v3603
          %v4193 = vpop.f32.mrb[0].mxu0
          %v4194 = vadd.f32 0.0, %v4193
          %v4195 = vpop.f32.mrb[0].mxu0
          %v4196 = vpop.f32.mrb[0].mxu0
          %v4197 = vadd.f32 0.0, %v4196
          %v4198 = vpop.f32.mrb[0].mxu0
          %4199 = vmatprep.mubr.bf16.mxu0 0
          %4200 = vmatmul.mubr.bf16.gmra.mrb[0].mxu0 %v3605
          %v4201 = vpop.f32.mrb[0].mxu0
          %v4202 = vadd.f32 0.0, %v4201
          %v4203 = vpop.f32.mrb[0].mxu0
          %v4204 = vpop.f32.mrb[0].mxu0
          %v4205 = vadd.f32 0.0, %v4204
          %v4206 = vpop.f32.mrb[0].mxu0
          %4207 = vmatprep.mubr.bf16.mxu0 0
          %4208 = vmatmul.mubr.bf16.gmra.mrb[0].mxu0 %v3607
          %v4209 = vpop.f32.mrb[0].mxu0
          %v4210 = vadd.f32 0.0, %v4209
          %v4211 = vpop.f32.mrb[0].mxu0
          %v4212 = vpop.f32.mrb[0].mxu0
          %v4213 = vadd.f32 0.0, %v4212
          %v4214 = vpop.f32.mrb[0].mxu0
          %4215 = vmatprep.mubr.bf16.mxu0 0
          %4216 = vmatmul.mubr.bf16.gmra.mrb[0].mxu0 %v3609
          %v4217 = vpop.f32.mrb[0].mxu0
          %v4218 = vadd.f32 0.0, %v4217
          %v4219 = vpop.f32.mrb[0].mxu0
          %v4220 = vpop.f32.mrb[0].mxu0
          %v4221 = vadd.f32 0.0, %v4220
          %v4222 = vpop.f32.mrb[0].mxu0
          %4223 = vmatprep.mubr.bf16.mxu0 0
          %4224 = vmatmul.mubr.bf16.gmra.mrb[0].mxu0 %v3846
          %v4225 = vpop.f32.mrb[0].mxu0
          %v4226 = vadd.f32 0.0, %v4225
          %v4227 = vpop.f32.mrb[0].mxu0
          %v4228 = vpop.f32.mrb[0].mxu0
          %v4229 = vadd.f32 0.0, %v4228
          %v4230 = vpop.f32.mrb[0].mxu0
          %4231 = vmatprep.mubr.bf16.mxu0 0
          %4232 = vmatmul.mubr.bf16.gmra.mrb[0].mxu0 %v4077
          %v4233 = vpop.f32.mrb[0].mxu0
          %v4234 = vadd.f32 0.0, %v4233
          %v4235 = vpop.f32.mrb[0].mxu0
          %v4236 = vpop.f32.mrb[0].mxu0
          %v4237 = vadd.f32 0.0, %v4236
          %v4238 = vpop.f32.mrb[0].mxu0
          %4239 = vdwg.mxu0
          %v4240 = vadd.f32 %v4009, %v4114
          %v4241 = vadd.f32 %v4010, %v4117
          %v4242 = vadd.f32 %v4011, %v4122
          %v4243 = vadd.f32 %v4012, %v4125
          %v4244 = vadd.f32 %v4013, %v4130
          %v4245 = vadd.f32 %v4014, %v4133
          %v4246 = vadd.f32 %v4015, %v4138
          %v4247 = vadd.f32 %v4016, %v4141
          %v4248 = vadd.f32 %v4017, %v4146
          %v4249 = vadd.f32 %v4018, %v4149
          %v4250 = vadd.f32 %v4019, %v4154
          %v4251 = vadd.f32 %v4020, %v4157
          %v4252 = vadd.f32 %v4021, %v4162
          %v4253 = vadd.f32 %v4022, %v4165
          %v4254 = vadd.f32 %v4023, %v4170
          %v4255 = vadd.f32 %v4024, %v4173
          %v4256 = vadd.f32 %v4025, %v4178
          %v4257 = vadd.f32 %v4026, %v4181
          %v4258 = vadd.f32 %v4027, %v4186
          %v4259 = vadd.f32 %v4028, %v4189
          %v4260 = vadd.f32 %v4029, %v4194
          %v4261 = vadd.f32 %v4030, %v4197
          %v4262 = vadd.f32 %v4031, %v4202
          %v4263 = vadd.f32 %v4032, %v4205
          %v4264 = vadd.f32 %v4033, %v4210
          %v4265 = vadd.f32 %v4034, %v4213
          %v4266 = vadd.f32 %v4035, %v4218
          %v4267 = vadd.f32 %v4036, %v4221
          %v4268 = vadd.f32 %v4037, %v4226
          %v4269 = vadd.f32 %v4038, %v4229
          %v4270 = vadd.f32 %v4039, %v4234
          %v4271 = vadd.f32 %v4040, %v4237
          %v4272 = vsel %vm1484, %v4240, 0.0
          %v4273 = vsel %vm1484, %v4241, 0.0
          %v4274 = vadd.f32 %v4272, %v4273
          %v4275 = vsel %vm1484, %v4242, 0.0
          %v4276 = vadd.f32 %v4274, %v4275
          %v4277 = vsel %vm1484, %v4243, 0.0
          %v4278 = vadd.f32 %v4276, %v4277
          %v4279 = vsel %vm1484, %v4244, 0.0
          %v4280 = vadd.f32 %v4278, %v4279
          %v4281 = vsel %vm1484, %v4245, 0.0
          %v4282 = vadd.f32 %v4280, %v4281
          %v4283 = vsel %vm1484, %v4246, 0.0
          %v4284 = vadd.f32 %v4282, %v4283
          %v4285 = vsel %vm1484, %v4247, 0.0
          %v4286 = vadd.f32 %v4284, %v4285
          %v4287 = vsel %vm1484, %v4248, 0.0
          %v4288 = vadd.f32 %v4286, %v4287
          %v4289 = vsel %vm1484, %v4249, 0.0
          %v4290 = vadd.f32 %v4288, %v4289
          %v4291 = vsel %vm1484, %v4250, 0.0
          %v4292 = vadd.f32 %v4290, %v4291
          %v4293 = vsel %vm1484, %v4251, 0.0
          %v4294 = vadd.f32 %v4292, %v4293
          %v4295 = vsel %vm1484, %v4252, 0.0
          %v4296 = vadd.f32 %v4294, %v4295
          %v4297 = vsel %vm1484, %v4253, 0.0
          %v4298 = vadd.f32 %v4296, %v4297
          %v4299 = vsel %vm1484, %v4254, 0.0
          %v4300 = vadd.f32 %v4298, %v4299
          %v4301 = vsel %vm1484, %v4255, 0.0
          %v4302 = vadd.f32 %v4300, %v4301
          %v4303 = vsel %vm1484, %v4256, 0.0
          %v4304 = vadd.f32 %v4302, %v4303
          %v4305 = vsel %vm1484, %v4257, 0.0
          %v4306 = vadd.f32 %v4304, %v4305
          %v4307 = vsel %vm1484, %v4258, 0.0
          %v4308 = vadd.f32 %v4306, %v4307
          %v4309 = vsel %vm1484, %v4259, 0.0
          %v4310 = vadd.f32 %v4308, %v4309
          %v4311 = vsel %vm1484, %v4260, 0.0
          %v4312 = vadd.f32 %v4310, %v4311
          %v4313 = vsel %vm1484, %v4261, 0.0
          %v4314 = vadd.f32 %v4312, %v4313
          %v4315 = vsel %vm1484, %v4262, 0.0
          %v4316 = vadd.f32 %v4314, %v4315
          %v4317 = vsel %vm1484, %v4263, 0.0
          %v4318 = vadd.f32 %v4316, %v4317
          %v4319 = vsel %vm1484, %v4264, 0.0
          %v4320 = vadd.f32 %v4318, %v4319
          %v4321 = vsel %vm1484, %v4265, 0.0
          %v4322 = vadd.f32 %v4320, %v4321
          %v4323 = vsel %vm1484, %v4266, 0.0
          %v4324 = vadd.f32 %v4322, %v4323
          %v4325 = vsel %vm1484, %v4267, 0.0
          %v4326 = vadd.f32 %v4324, %v4325
          %v4327 = vsel %vm1484, %v4268, 0.0
          %v4328 = vadd.f32 %v4326, %v4327
          %v4329 = vsel %vm1484, %v4269, 0.0
          %v4330 = vadd.f32 %v4328, %v4329
          %v4331 = vsel %vm1484, %v4270, 0.0
          %v4332 = vadd.f32 %v4330, %v4331
          %v4333 = vsel %vm1484, %v4271, 0.0
          %v4334 = vadd.f32 %v4332, %v4333
          %v4335 = vrot.slane %v4334, 4
          %v4336 = vadd.f32 %v4334, %v4335
          %v4337 = vrot.slane %v4336, 2
          %v4338 = vadd.f32 %v4336, %v4337
          %v4339 = vrot.slane %v4338, 1
          %v4340 = vadd.f32 %v4338, %v4339
          %v4341 = vrcp.pop 256.0
          %v4342 = vmul.f32 %v4340, %v4341
          %s4343 = smul.u32 %s367, 32
          %s4344 = scalar_lea.vmem %s3, %s4343
          %v4345 = vld [vmem:[%s4344] sm:$0xff]
          %v4346 = vld [vmem:[%s4344 + $0x8] sm:$0xff]
          %v4347 = vld [vmem:[%s4344 + $0x10] sm:$0xff]
          %v4348 = vld [vmem:[%s4344 + $0x18] sm:$0xff]
          %s4349 = scalar_lea.vmem %s4, %s367
          %v4350 = vld [vmem:[%s4349] sm:$0x1]
          %v4352 = vsel %vm1484, %v4342, 0
          %4354 = vmatprep.subr.mxu0 0.0
          %4355 = vmatpush1.msra.mxu0 %v4345
          %4356 = vmatprep.subr.mxu0 0.0
          %4357 = vmatpush1.msra.mxu0 %v4346
          %4358 = vmatprep.subr.mxu0 0.0
          %4359 = vmatpush1.msra.mxu0 %v4347
          %4360 = vmatprep.subr.mxu0 0.0
          %4361 = vmatpush1.msra.mxu0 %v4348
          %4362 = vmatprep.subr.mxu0 0.0
          %4363 = vmatpush1.msra.mxu0 0.0
          %4364 = vmatprep.subr.mxu0 0.0
          %4365 = vmatpush1.msra.mxu0 0.0
          %4366 = vmatprep.subr.mxu0 0.0
          %4367 = vmatpush1.msra.mxu0 0.0
          %4368 = vmatprep.subr.mxu0 0.0
          %4369 = vmatpush1.msra.mxu0 0.0
          %4370 = vmatprep.subr.mxu0 0.0
          %4371 = vmatpush1.msra.mxu0 0.0
          %4372 = vmatprep.subr.mxu0 0.0
          %4373 = vmatpush1.msra.mxu0 0.0
          %4374 = vmatprep.subr.mxu0 0.0
          %4375 = vmatpush1.msra.mxu0 0.0
          %4376 = vmatprep.subr.mxu0 0.0
          %4377 = vmatpush1.msra.mxu0 0.0
          %4378 = vmatprep.subr.mxu0 0.0
          %4379 = vmatpush1.msra.mxu0 0.0
          %4380 = vmatprep.subr.mxu0 0.0
          %4381 = vmatpush1.msra.mxu0 0.0
          %4382 = vmatprep.subr.mxu0 0.0
          %4383 = vmatpush1.msra.mxu0 0.0
          %4384 = vmatprep.subr.mxu0 0.0
          %4385 = vmatpush1.msra.mxu0 0.0
          %4386 = vmatprep.subr.mxu0 0.0
          %4387 = vmatpush1.msra.mxu0 0.0
          %4388 = vmatprep.subr.mxu0 0.0
          %4389 = vmatpush1.msra.mxu0 0.0
          %4390 = vmatprep.subr.mxu0 0.0
          %4391 = vmatpush1.msra.mxu0 0.0
          %4392 = vmatprep.subr.mxu0 0.0
          %4393 = vmatpush1.msra.mxu0 0.0
          %4394 = vmatprep.subr.mxu0 0.0
          %4395 = vmatpush1.msra.mxu0 0.0
          %4396 = vmatprep.subr.mxu0 0.0
          %4397 = vmatpush1.msra.mxu0 0.0
          %4398 = vmatprep.subr.mxu0 0.0
          %4399 = vmatpush1.msra.mxu0 0.0
          %4400 = vmatprep.subr.mxu0 0.0
          %4401 = vmatpush1.msra.mxu0 0.0
          %4402 = vmatprep.subr.mxu0 0.0
          %4403 = vmatpush1.msra.mxu0 0.0
          %4404 = vmatprep.subr.mxu0 0.0
          %4405 = vmatpush1.msra.mxu0 0.0
          %4406 = vmatprep.subr.mxu0 0.0
          %4407 = vmatpush1.msra.mxu0 0.0
          %4408 = vmatprep.subr.mxu0 0.0
          %4409 = vmatpush1.msra.mxu0 0.0
          %4410 = vmatprep.subr.mxu0 0.0
          %4411 = vmatpush1.msra.mxu0 0.0
          %4412 = vmatprep.subr.mxu0 0.0
          %4413 = vmatpush1.msra.mxu0 0.0
          %4414 = vmatprep.subr.mxu0 0.0
          %4415 = vmatpush1.msra.mxu0 0.0
          %4416 = vmatprep.subr.mxu0 0.0
          %4417 = vmatpush1.msra.mxu0 0.0
          %4418 = vmatprep.mubr.f32.mxu0 0.0
          %4419 = vmatmul.mubr.f32.gmra.mrb[0].mxu0 %v4352
          %v4420 = vpop.f32.mrb[0].mxu0
          %v4421 = vadd.f32 %v4350, %v4420
          %v4422 = vpop.f32.mrb[0].mxu0
          %4423 = vdwg.mxu0
          %v4424 = vmax.f32 %v4421, 0.0
          %s4425 = smul.u32 %s367, 8
          %s4426 = scalar_lea.vmem %s5, %s4425
          %v4427 = vld [vmem:[%s4426] sm:$0xff]
          %s4428 = scalar_lea.vmem %s6, %s367
          %v4429 = vld [vmem:[%s4428] sm:$0x1]
          %vm4430 = vcmask 64512
          %v4432 = vsel %vm4430, %v4424, 0
          %4434 = vmatprep.subr.mxu0 0.0
          %4435 = vmatpush1.msra.mxu0 %v4427
          %4436 = vmatprep.subr.mxu0 0.0
          %4437 = vmatpush1.msra.mxu0 0.0
          %4438 = vmatprep.subr.mxu0 0.0
          %4439 = vmatpush1.msra.mxu0 0.0
          %4440 = vmatprep.subr.mxu0 0.0
          %4441 = vmatpush1.msra.mxu0 0.0
          %4442 = vmatprep.subr.mxu0 0.0
          %4443 = vmatpush1.msra.mxu0 0.0
          %4444 = vmatprep.subr.mxu0 0.0
          %4445 = vmatpush1.msra.mxu0 0.0
          %4446 = vmatprep.subr.mxu0 0.0
          %4447 = vmatpush1.msra.mxu0 0.0
          %4448 = vmatprep.subr.mxu0 0.0
          %4449 = vmatpush1.msra.mxu0 0.0
          %4450 = vmatprep.subr.mxu0 0.0
          %4451 = vmatpush1.msra.mxu0 0.0
          %4452 = vmatprep.subr.mxu0 0.0
          %4453 = vmatpush1.msra.mxu0 0.0
          %4454 = vmatprep.subr.mxu0 0.0
          %4455 = vmatpush1.msra.mxu0 0.0
          %4456 = vmatprep.subr.mxu0 0.0
          %4457 = vmatpush1.msra.mxu0 0.0
          %4458 = vmatprep.subr.mxu0 0.0
          %4459 = vmatpush1.msra.mxu0 0.0
          %4460 = vmatprep.subr.mxu0 0.0
          %4461 = vmatpush1.msra.mxu0 0.0
          %4462 = vmatprep.subr.mxu0 0.0
          %4463 = vmatpush1.msra.mxu0 0.0
          %4464 = vmatprep.subr.mxu0 0.0
          %4465 = vmatpush1.msra.mxu0 0.0
          %4466 = vmatprep.subr.mxu0 0.0
          %4467 = vmatpush1.msra.mxu0 0.0
          %4468 = vmatprep.subr.mxu0 0.0
          %4469 = vmatpush1.msra.mxu0 0.0
          %4470 = vmatprep.subr.mxu0 0.0
          %4471 = vmatpush1.msra.mxu0 0.0
          %4472 = vmatprep.subr.mxu0 0.0
          %4473 = vmatpush1.msra.mxu0 0.0
          %4474 = vmatprep.subr.mxu0 0.0
          %4475 = vmatpush1.msra.mxu0 0.0
          %4476 = vmatprep.subr.mxu0 0.0
          %4477 = vmatpush1.msra.mxu0 0.0
          %4478 = vmatprep.subr.mxu0 0.0
          %4479 = vmatpush1.msra.mxu0 0.0
          %4480 = vmatprep.subr.mxu0 0.0
          %4481 = vmatpush1.msra.mxu0 0.0
          %4482 = vmatprep.subr.mxu0 0.0
          %4483 = vmatpush1.msra.mxu0 0.0
          %4484 = vmatprep.subr.mxu0 0.0
          %4485 = vmatpush1.msra.mxu0 0.0
          %4486 = vmatprep.subr.mxu0 0.0
          %4487 = vmatpush1.msra.mxu0 0.0
          %4488 = vmatprep.subr.mxu0 0.0
          %4489 = vmatpush1.msra.mxu0 0.0
          %4490 = vmatprep.subr.mxu0 0.0
          %4491 = vmatpush1.msra.mxu0 0.0
          %4492 = vmatprep.subr.mxu0 0.0
          %4493 = vmatpush1.msra.mxu0 0.0
          %4494 = vmatprep.subr.mxu0 0.0
          %4495 = vmatpush1.msra.mxu0 0.0
          %4496 = vmatprep.subr.mxu0 0.0
          %4497 = vmatpush1.msra.mxu0 0.0
          %4498 = vmatprep.mubr.f32.mxu0 0.0
          %4499 = vmatmul.mubr.f32.gmra.mrb[0].mxu0 %v4432
          %v4500 = vpop.f32.mrb[0].mxu0
          %v4501 = vadd.f32 %v4429, %v4500
          %v4502 = vpop.f32.mrb[0].mxu0
          %4503 = vdwg.mxu0
          %v4504 = vxor.u32 %v4501, 2147483648
          %v4505 = vmul.f32 %v4504, 1.442695
          %v4506 = vpow.pop %v4505
          %v4507 = vadd.f32 %v4506, 1.0
          %v4508 = vrcp.pop %v4507
          %v4509 = vmul.f32 1.0, %v4508
          %v4510 = vlaneseq
          %v4511 = vshrl.u32 %v4510, 7
          %v4512 = vsub.s32 0, %v4511
          %v4513 = vrot.slane %v4509, %v4512
          %v4514 = vmul.f32 %v4240, %v4513
          %v4515 = vmul.f32 %v4241, %v4513
          %v4516 = vmul.f32 %v4242, %v4513
          %v4517 = vmul.f32 %v4243, %v4513
          %v4518 = vmul.f32 %v4244, %v4513
          %v4519 = vmul.f32 %v4245, %v4513
          %v4520 = vmul.f32 %v4246, %v4513
          %v4521 = vmul.f32 %v4247, %v4513
          %v4522 = vmul.f32 %v4248, %v4513
          %v4523 = vmul.f32 %v4249, %v4513
          %v4524 = vmul.f32 %v4250, %v4513
          %v4525 = vmul.f32 %v4251, %v4513
          %v4526 = vmul.f32 %v4252, %v4513
          %v4527 = vmul.f32 %v4253, %v4513
          %v4528 = vmul.f32 %v4254, %v4513
          %v4529 = vmul.f32 %v4255, %v4513
          %v4530 = vmul.f32 %v4256, %v4513
          %v4531 = vmul.f32 %v4257, %v4513
          %v4532 = vmul.f32 %v4258, %v4513
          %v4533 = vmul.f32 %v4259, %v4513
          %v4534 = vmul.f32 %v4260, %v4513
          %v4535 = vmul.f32 %v4261, %v4513
          %v4536 = vmul.f32 %v4262, %v4513
          %v4537 = vmul.f32 %v4263, %v4513
          %v4538 = vmul.f32 %v4264, %v4513
          %v4539 = vmul.f32 %v4265, %v4513
          %v4540 = vmul.f32 %v4266, %v4513
          %v4541 = vmul.f32 %v4267, %v4513
          %v4542 = vmul.f32 %v4268, %v4513
          %v4543 = vmul.f32 %v4269, %v4513
          %v4544 = vmul.f32 %v4270, %v4513
          %v4545 = vmul.f32 %v4271, %v4513
          %v4546 = vadd.f32 %v4514, %v372
          %v4547 = vadd.f32 %v4515, %v373
          %v4548 = vadd.f32 %v4516, %v374
          %v4549 = vadd.f32 %v4517, %v375
          %v4550 = vadd.f32 %v4518, %v376
          %v4551 = vadd.f32 %v4519, %v377
          %v4552 = vadd.f32 %v4520, %v378
          %v4553 = vadd.f32 %v4521, %v379
          %v4554 = vadd.f32 %v4522, %v380
          %v4555 = vadd.f32 %v4523, %v381
          %v4556 = vadd.f32 %v4524, %v382
          %v4557 = vadd.f32 %v4525, %v383
          %v4558 = vadd.f32 %v4526, %v384
          %v4559 = vadd.f32 %v4527, %v385
          %v4560 = vadd.f32 %v4528, %v386
          %v4561 = vadd.f32 %v4529, %v387
          %v4562 = vadd.f32 %v4530, %v388
          %v4563 = vadd.f32 %v4531, %v389
          %v4564 = vadd.f32 %v4532, %v390
          %v4565 = vadd.f32 %v4533, %v391
          %v4566 = vadd.f32 %v4534, %v392
          %v4567 = vadd.f32 %v4535, %v393
          %v4568 = vadd.f32 %v4536, %v394
          %v4569 = vadd.f32 %v4537, %v395
          %v4570 = vadd.f32 %v4538, %v396
          %v4571 = vadd.f32 %v4539, %v397
          %v4572 = vadd.f32 %v4540, %v398
          %v4573 = vadd.f32 %v4541, %v399
          %v4574 = vadd.f32 %v4542, %v400
          %v4575 = vadd.f32 %v4543, %v401
          %v4576 = vadd.f32 %v4544, %v402
          %v4577 = vadd.f32 %v4545, %v403
        $region53: #{tpu_custom_call.1} parent=47 // loop_footer
          %s371 = sadd.s32 1, %s367
        $region54: #{tpu_custom_call.1} parent=47 // loop_footer_branch
          %366 = sbr.rel target = $region50
        $region55: #{tpu_custom_call.1} parent=47 // loop_exit
          _
        %v4578 = vpack.c.bf16 %v373, %v372
        %v4579 = vpack.c.bf16 %v375, %v374
        %v4580 = vpack.c.bf16 %v377, %v376
        %v4581 = vpack.c.bf16 %v379, %v378
        %v4582 = vpack.c.bf16 %v381, %v380
        %v4583 = vpack.c.bf16 %v383, %v382
        %v4584 = vpack.c.bf16 %v385, %v384
        %v4585 = vpack.c.bf16 %v387, %v386
        %v4586 = vpack.c.bf16 %v389, %v388
        %v4587 = vpack.c.bf16 %v391, %v390
        %v4588 = vpack.c.bf16 %v393, %v392
        %v4589 = vpack.c.bf16 %v395, %v394
        %v4590 = vpack.c.bf16 %v397, %v396
        %v4591 = vpack.c.bf16 %v399, %v398
        %v4592 = vpack.c.bf16 %v401, %v400
        %v4593 = vpack.c.bf16 %v403, %v402
        %v4610 = vunpack.c.l.b16 %v4578
        %v4611 = vunpack.c.h.b16 %v4578
        %v4612 = vunpack.c.l.b16 %v4579
        %v4613 = vunpack.c.h.b16 %v4579
        %v4614 = vunpack.c.l.b16 %v4580
        %v4615 = vunpack.c.h.b16 %v4580
        %v4616 = vunpack.c.l.b16 %v4581
        %v4617 = vunpack.c.h.b16 %v4581
        %v4618 = vunpack.c.l.b16 %v4582
        %v4619 = vunpack.c.h.b16 %v4582
        %v4620 = vunpack.c.l.b16 %v4583
        %v4621 = vunpack.c.h.b16 %v4583
        %v4622 = vunpack.c.l.b16 %v4584
        %v4623 = vunpack.c.h.b16 %v4584
        %v4624 = vunpack.c.l.b16 %v4585
        %v4625 = vunpack.c.h.b16 %v4585
        %v4626 = vunpack.c.l.b16 %v4586
        %v4627 = vunpack.c.h.b16 %v4586
        %v4628 = vunpack.c.l.b16 %v4587
        %v4629 = vunpack.c.h.b16 %v4587
        %v4630 = vunpack.c.l.b16 %v4588
        %v4631 = vunpack.c.h.b16 %v4588
        %v4632 = vunpack.c.l.b16 %v4589
        %v4633 = vunpack.c.h.b16 %v4589
        %v4634 = vunpack.c.l.b16 %v4590
        %v4635 = vunpack.c.h.b16 %v4590
        %v4636 = vunpack.c.l.b16 %v4591
        %v4637 = vunpack.c.h.b16 %v4591
        %v4638 = vunpack.c.l.b16 %v4592
        %v4639 = vunpack.c.h.b16 %v4592
        %v4640 = vunpack.c.l.b16 %v4593
        %v4641 = vunpack.c.h.b16 %v4593
        %v4642 = vpack.c.b16 %v4610, %v4610
        %v4643 = vpack.c.b16 %v4611, %v4611
        %v4644 = vpack.c.b16 %v4612, %v4612
        %v4645 = vpack.c.b16 %v4613, %v4613
        %v4646 = vpack.c.b16 %v4614, %v4614
        %v4647 = vpack.c.b16 %v4615, %v4615
        %v4648 = vpack.c.b16 %v4616, %v4616
        %v4649 = vpack.c.b16 %v4617, %v4617
        %v4650 = vpack.c.b16 %v4618, %v4618
        %v4651 = vpack.c.b16 %v4619, %v4619
        %v4652 = vpack.c.b16 %v4620, %v4620
        %v4653 = vpack.c.b16 %v4621, %v4621
        %v4654 = vpack.c.b16 %v4622, %v4622
        %v4655 = vpack.c.b16 %v4623, %v4623
        %v4656 = vpack.c.b16 %v4624, %v4624
        %v4657 = vpack.c.b16 %v4625, %v4625
        %v4658 = vpack.c.b16 %v4626, %v4626
        %v4659 = vpack.c.b16 %v4627, %v4627
        %v4660 = vpack.c.b16 %v4628, %v4628
        %v4661 = vpack.c.b16 %v4629, %v4629
        %v4662 = vpack.c.b16 %v4630, %v4630
        %v4663 = vpack.c.b16 %v4631, %v4631
        %v4664 = vpack.c.b16 %v4632, %v4632
        %v4665 = vpack.c.b16 %v4633, %v4633
        %v4666 = vpack.c.b16 %v4634, %v4634
        %v4667 = vpack.c.b16 %v4635, %v4635
        %v4668 = vpack.c.b16 %v4636, %v4636
        %v4669 = vpack.c.b16 %v4637, %v4637
        %v4670 = vpack.c.b16 %v4638, %v4638
        %v4671 = vpack.c.b16 %v4639, %v4639
        %v4672 = vpack.c.b16 %v4640, %v4640
        %v4673 = vpack.c.b16 %v4641, %v4641
        %vm4674 = vsmask.f32 256
        %vm4675 = vsmask.f32 4368
        %vm4676 = vmor %vm4674, %vm4675
        %v4678 = vshrl.u32 %v4642, 16
        %v4680 = vrot.slane %v4678, 7
        %v4681 = vshll.u32 %v4642, 16
        %v4683 = vor.u32 %v4680, %v4681
        %v4684 = vrot.slane %v4680, 4
        %v4686 = vshrl.u32 %v4643, 16
        %v4688 = vrot.slane %v4686, 7
        %v4689 = vshll.u32 %v4643, 16
        %v4691 = vor.u32 %v4688, %v4689
        %v4692 = vsel %vm4676, %v4684, %v4691
        %v4693 = vrot.slane %v4688, 4
        %v4695 = vshrl.u32 %v4644, 16
        %v4697 = vrot.slane %v4695, 7
        %v4698 = vshll.u32 %v4644, 16
        %v4700 = vor.u32 %v4697, %v4698
        %v4701 = vrot.slane %v4697, 4
        %v4703 = vshrl.u32 %v4645, 16
        %v4705 = vrot.slane %v4703, 7
        %v4706 = vshll.u32 %v4645, 16
        %v4708 = vor.u32 %v4705, %v4706
        %v4709 = vsel %vm4676, %v4701, %v4708
        %v4710 = vrot.slane %v4705, 4
        %v4712 = vshrl.u32 %v4646, 16
        %v4714 = vrot.slane %v4712, 7
        %v4715 = vshll.u32 %v4646, 16
        %v4717 = vor.u32 %v4714, %v4715
        %v4718 = vrot.slane %v4714, 4
        %v4720 = vshrl.u32 %v4647, 16
        %v4722 = vrot.slane %v4720, 7
        %v4723 = vshll.u32 %v4647, 16
        %v4725 = vor.u32 %v4722, %v4723
        %v4726 = vsel %vm4676, %v4718, %v4725
        %v4727 = vrot.slane %v4722, 4
        %v4729 = vshrl.u32 %v4648, 16
        %v4731 = vrot.slane %v4729, 7
        %v4732 = vshll.u32 %v4648, 16
        %v4734 = vor.u32 %v4731, %v4732
        %v4735 = vrot.slane %v4731, 4
        %v4737 = vshrl.u32 %v4649, 16
        %v4739 = vrot.slane %v4737, 7
        %v4740 = vshll.u32 %v4649, 16
        %v4742 = vor.u32 %v4739, %v4740
        %v4743 = vsel %vm4676, %v4735, %v4742
        %v4744 = vrot.slane %v4739, 4
        %v4746 = vshrl.u32 %v4650, 16
        %v4748 = vrot.slane %v4746, 7
        %v4749 = vshll.u32 %v4650, 16
        %v4751 = vor.u32 %v4748, %v4749
        %v4752 = vrot.slane %v4748, 4
        %v4754 = vshrl.u32 %v4651, 16
        %v4756 = vrot.slane %v4754, 7
        %v4757 = vshll.u32 %v4651, 16
        %v4759 = vor.u32 %v4756, %v4757
        %v4760 = vsel %vm4676, %v4752, %v4759
        %v4761 = vrot.slane %v4756, 4
        %v4763 = vshrl.u32 %v4652, 16
        %v4765 = vrot.slane %v4763, 7
        %v4766 = vshll.u32 %v4652, 16
        %v4768 = vor.u32 %v4765, %v4766
        %v4769 = vrot.slane %v4765, 4
        %v4771 = vshrl.u32 %v4653, 16
        %v4773 = vrot.slane %v4771, 7
        %v4774 = vshll.u32 %v4653, 16
        %v4776 = vor.u32 %v4773, %v4774
        %v4777 = vsel %vm4676, %v4769, %v4776
        %v4778 = vrot.slane %v4773, 4
        %v4780 = vshrl.u32 %v4654, 16
        %v4782 = vrot.slane %v4780, 7
        %v4783 = vshll.u32 %v4654, 16
        %v4785 = vor.u32 %v4782, %v4783
        %v4786 = vrot.slane %v4782, 4
        %v4788 = vshrl.u32 %v4655, 16
        %v4790 = vrot.slane %v4788, 7
        %v4791 = vshll.u32 %v4655, 16
        %v4793 = vor.u32 %v4790, %v4791
        %v4794 = vsel %vm4676, %v4786, %v4793
        %v4795 = vrot.slane %v4790, 4
        %v4797 = vshrl.u32 %v4656, 16
        %v4799 = vrot.slane %v4797, 7
        %v4800 = vshll.u32 %v4656, 16
        %v4802 = vor.u32 %v4799, %v4800
        %v4803 = vrot.slane %v4799, 4
        %v4805 = vshrl.u32 %v4657, 16
        %v4807 = vrot.slane %v4805, 7
        %v4808 = vshll.u32 %v4657, 16
        %v4810 = vor.u32 %v4807, %v4808
        %v4811 = vsel %vm4676, %v4803, %v4810
        %v4812 = vrot.slane %v4807, 4
        %v4814 = vshrl.u32 %v4658, 16
        %v4816 = vrot.slane %v4814, 7
        %v4817 = vshll.u32 %v4658, 16
        %v4819 = vor.u32 %v4816, %v4817
        %v4820 = vrot.slane %v4816, 4
        %v4822 = vshrl.u32 %v4659, 16
        %v4824 = vrot.slane %v4822, 7
        %v4825 = vshll.u32 %v4659, 16
        %v4827 = vor.u32 %v4824, %v4825
        %v4828 = vsel %vm4676, %v4820, %v4827
        %v4829 = vrot.slane %v4824, 4
        %v4831 = vshrl.u32 %v4660, 16
        %v4833 = vrot.slane %v4831, 7
        %v4834 = vshll.u32 %v4660, 16
        %v4836 = vor.u32 %v4833, %v4834
        %v4837 = vrot.slane %v4833, 4
        %v4839 = vshrl.u32 %v4661, 16
        %v4841 = vrot.slane %v4839, 7
        %v4842 = vshll.u32 %v4661, 16
        %v4844 = vor.u32 %v4841, %v4842
        %v4845 = vsel %vm4676, %v4837, %v4844
        %v4846 = vrot.slane %v4841, 4
        %v4848 = vshrl.u32 %v4662, 16
        %v4850 = vrot.slane %v4848, 7
        %v4851 = vshll.u32 %v4662, 16
        %v4853 = vor.u32 %v4850, %v4851
        %v4854 = vrot.slane %v4850, 4
        %v4856 = vshrl.u32 %v4663, 16
        %v4858 = vrot.slane %v4856, 7
        %v4859 = vshll.u32 %v4663, 16
        %v4861 = vor.u32 %v4858, %v4859
        %v4862 = vsel %vm4676, %v4854, %v4861
        %v4863 = vrot.slane %v4858, 4
        %v4865 = vshrl.u32 %v4664, 16
        %v4867 = vrot.slane %v4865, 7
        %v4868 = vshll.u32 %v4664, 16
        %v4870 = vor.u32 %v4867, %v4868
        %v4871 = vrot.slane %v4867, 4
        %v4873 = vshrl.u32 %v4665, 16
        %v4875 = vrot.slane %v4873, 7
        %v4876 = vshll.u32 %v4665, 16
        %v4878 = vor.u32 %v4875, %v4876
        %v4879 = vsel %vm4676, %v4871, %v4878
        %v4880 = vrot.slane %v4875, 4
        %v4882 = vshrl.u32 %v4666, 16
        %v4884 = vrot.slane %v4882, 7
        %v4885 = vshll.u32 %v4666, 16
        %v4887 = vor.u32 %v4884, %v4885
        %v4888 = vrot.slane %v4884, 4
        %v4890 = vshrl.u32 %v4667, 16
        %v4892 = vrot.slane %v4890, 7
        %v4893 = vshll.u32 %v4667, 16
        %v4895 = vor.u32 %v4892, %v4893
        %v4896 = vsel %vm4676, %v4888, %v4895
        %v4897 = vrot.slane %v4892, 4
        %v4899 = vshrl.u32 %v4668, 16
        %v4901 = vrot.slane %v4899, 7
        %v4902 = vshll.u32 %v4668, 16
        %v4904 = vor.u32 %v4901, %v4902
        %v4905 = vrot.slane %v4901, 4
        %v4907 = vshrl.u32 %v4669, 16
        %v4909 = vrot.slane %v4907, 7
        %v4910 = vshll.u32 %v4669, 16
        %v4912 = vor.u32 %v4909, %v4910
        %v4913 = vsel %vm4676, %v4905, %v4912
        %v4914 = vrot.slane %v4909, 4
        %v4916 = vshrl.u32 %v4670, 16
        %v4918 = vrot.slane %v4916, 7
        %v4919 = vshll.u32 %v4670, 16
        %v4921 = vor.u32 %v4918, %v4919
        %v4922 = vrot.slane %v4918, 4
        %v4924 = vshrl.u32 %v4671, 16
        %v4926 = vrot.slane %v4924, 7
        %v4927 = vshll.u32 %v4671, 16
        %v4929 = vor.u32 %v4926, %v4927
        %v4930 = vsel %vm4676, %v4922, %v4929
        %v4931 = vrot.slane %v4926, 4
        %v4933 = vshrl.u32 %v4672, 16
        %v4935 = vrot.slane %v4933, 7
        %v4936 = vshll.u32 %v4672, 16
        %v4938 = vor.u32 %v4935, %v4936
        %v4939 = vrot.slane %v4935, 4
        %v4941 = vshrl.u32 %v4673, 16
        %v4943 = vrot.slane %v4941, 7
        %v4944 = vshll.u32 %v4673, 16
        %v4946 = vor.u32 %v4943, %v4944
        %v4947 = vsel %vm4676, %v4939, %v4946
        %v4948 = vrot.slane %v4943, 4
        %s4997 = scalar_lea.vmem [#allocation2], 12
        %vm4998 = vcmask 257024
        %vm4999 = vsmask.f32 7938
        %vm5000 = vmand %vm4998, %vm4999
        %v5001 = vld [vmem:[%s4997] sm:$0xf]
        %v5002 = vsel %vm5000, %v4683, %v5001
        %5003 = vst [vmem:[%s4997] sm:$0xf] %v5002
        %5004 = vst.msk [vmem:[%s4997 + $0x4] sm:$0xf] %vm278, %v4692
        %vm5005 = vcmask 253952
        %vm5006 = vmand %vm5005, %vm4674
        %v5007 = vld [vmem:[%s4997 + $0x8] sm:$0x1]
        %v5008 = vsel %vm5006, %v4693, %v5007
        %5009 = vst [vmem:[%s4997 + $0x8] sm:$0x1] %v5008
        %v5010 = vld [vmem:[%s4997 + $0xc] sm:$0xf]
        %v5011 = vsel %vm5000, %v4700, %v5010
        %5012 = vst [vmem:[%s4997 + $0xc] sm:$0xf] %v5011
        %5013 = vst.msk [vmem:[%s4997 + $0x10] sm:$0xf] %vm278, %v4709
        %v5014 = vld [vmem:[%s4997 + $0x14] sm:$0x1]
        %v5015 = vsel %vm5006, %v4710, %v5014
        %5016 = vst [vmem:[%s4997 + $0x14] sm:$0x1] %v5015
        %v5017 = vld [vmem:[%s4997 + $0x18] sm:$0xf]
        %v5018 = vsel %vm5000, %v4717, %v5017
        %5019 = vst [vmem:[%s4997 + $0x18] sm:$0xf] %v5018
        %5020 = vst.msk [vmem:[%s4997 + $0x1c] sm:$0xf] %vm278, %v4726
        %v5021 = vld [vmem:[%s4997 + $0x20] sm:$0x1]
        %v5022 = vsel %vm5006, %v4727, %v5021
        %5023 = vst [vmem:[%s4997 + $0x20] sm:$0x1] %v5022
        %v5024 = vld [vmem:[%s4997 + $0x24] sm:$0xf]
        %v5025 = vsel %vm5000, %v4734, %v5024
        %5026 = vst [vmem:[%s4997 + $0x24] sm:$0xf] %v5025
        %5027 = vst.msk [vmem:[%s4997 + $0x28] sm:$0xf] %vm278, %v4743
        %v5028 = vld [vmem:[%s4997 + $0x2c] sm:$0x1]
        %v5029 = vsel %vm5006, %v4744, %v5028
        %5030 = vst [vmem:[%s4997 + $0x2c] sm:$0x1] %v5029
        %v5031 = vld [vmem:[%s4997 + $0x30] sm:$0xf]
        %v5032 = vsel %vm5000, %v4751, %v5031
        %5033 = vst [vmem:[%s4997 + $0x30] sm:$0xf] %v5032
        %5034 = vst.msk [vmem:[%s4997 + $0x34] sm:$0xf] %vm278, %v4760
        %v5035 = vld [vmem:[%s4997 + $0x38] sm:$0x1]
        %v5036 = vsel %vm5006, %v4761, %v5035
        %5037 = vst [vmem:[%s4997 + $0x38] sm:$0x1] %v5036
        %v5038 = vld [vmem:[%s4997 + $0x3c] sm:$0xf]
        %v5039 = vsel %vm5000, %v4768, %v5038
        %5040 = vst [vmem:[%s4997 + $0x3c] sm:$0xf] %v5039
        %5041 = vst.msk [vmem:[%s4997 + $0x40] sm:$0xf] %vm278, %v4777
        %v5042 = vld [vmem:[%s4997 + $0x44] sm:$0x1]
        %v5043 = vsel %vm5006, %v4778, %v5042
        %5044 = vst [vmem:[%s4997 + $0x44] sm:$0x1] %v5043
        %v5045 = vld [vmem:[%s4997 + $0x48] sm:$0xf]
        %v5046 = vsel %vm5000, %v4785, %v5045
        %5047 = vst [vmem:[%s4997 + $0x48] sm:$0xf] %v5046
        %5048 = vst.msk [vmem:[%s4997 + $0x4c] sm:$0xf] %vm278, %v4794
        %v5049 = vld [vmem:[%s4997 + $0x50] sm:$0x1]
        %v5050 = vsel %vm5006, %v4795, %v5049
        %5051 = vst [vmem:[%s4997 + $0x50] sm:$0x1] %v5050
        %v5052 = vld [vmem:[%s4997 + $0x54] sm:$0xf]
        %v5053 = vsel %vm5000, %v4802, %v5052
        %5054 = vst [vmem:[%s4997 + $0x54] sm:$0xf] %v5053
        %5055 = vst.msk [vmem:[%s4997 + $0x58] sm:$0xf] %vm278, %v4811
        %v5056 = vld [vmem:[%s4997 + $0x5c] sm:$0x1]
        %v5057 = vsel %vm5006, %v4812, %v5056
        %5058 = vst [vmem:[%s4997 + $0x5c] sm:$0x1] %v5057
        %v5059 = vld [vmem:[%s4997 + $0x60] sm:$0xf]
        %v5060 = vsel %vm5000, %v4819, %v5059
        %5061 = vst [vmem:[%s4997 + $0x60] sm:$0xf] %v5060
        %5062 = vst.msk [vmem:[%s4997 + $0x64] sm:$0xf] %vm278, %v4828
        %v5063 = vld [vmem:[%s4997 + $0x68] sm:$0x1]
        %v5064 = vsel %vm5006, %v4829, %v5063
        %5065 = vst [vmem:[%s4997 + $0x68] sm:$0x1] %v5064
        %v5066 = vld [vmem:[%s4997 + $0x6c] sm:$0xf]
        %v5067 = vsel %vm5000, %v4836, %v5066
        %5068 = vst [vmem:[%s4997 + $0x6c] sm:$0xf] %v5067
        %5069 = vst.msk [vmem:[%s4997 + $0x70] sm:$0xf] %vm278, %v4845
        %v5070 = vld [vmem:[%s4997 + $0x74] sm:$0x1]
        %v5071 = vsel %vm5006, %v4846, %v5070
        %5072 = vst [vmem:[%s4997 + $0x74] sm:$0x1] %v5071
        %v5073 = vld [vmem:[%s4997 + $0x78] sm:$0xf]
        %v5074 = vsel %vm5000, %v4853, %v5073
        %5075 = vst [vmem:[%s4997 + $0x78] sm:$0xf] %v5074
        %5076 = vst.msk [vmem:[%s4997 + $0x7c] sm:$0xf] %vm278, %v4862
        %v5077 = vld [vmem:[%s4997 + $0x80] sm:$0x1]
        %v5078 = vsel %vm5006, %v4863, %v5077
        %5079 = vst [vmem:[%s4997 + $0x80] sm:$0x1] %v5078
        %v5080 = vld [vmem:[%s4997 + $0x84] sm:$0xf]
        %v5081 = vsel %vm5000, %v4870, %v5080
        %5082 = vst [vmem:[%s4997 + $0x84] sm:$0xf] %v5081
        %5083 = vst.msk [vmem:[%s4997 + $0x88] sm:$0xf] %vm278, %v4879
        %v5084 = vld [vmem:[%s4997 + $0x8c] sm:$0x1]
        %v5085 = vsel %vm5006, %v4880, %v5084
        %5086 = vst [vmem:[%s4997 + $0x8c] sm:$0x1] %v5085
        %v5087 = vld [vmem:[%s4997 + $0x90] sm:$0xf]
        %v5088 = vsel %vm5000, %v4887, %v5087
        %5089 = vst [vmem:[%s4997 + $0x90] sm:$0xf] %v5088
        %5090 = vst.msk [vmem:[%s4997 + $0x94] sm:$0xf] %vm278, %v4896
        %v5091 = vld [vmem:[%s4997 + $0x98] sm:$0x1]
        %v5092 = vsel %vm5006, %v4897, %v5091
        %5093 = vst [vmem:[%s4997 + $0x98] sm:$0x1] %v5092
        %v5094 = vld [vmem:[%s4997 + $0x9c] sm:$0xf]
        %v5095 = vsel %vm5000, %v4904, %v5094
        %5096 = vst [vmem:[%s4997 + $0x9c] sm:$0xf] %v5095
        %5097 = vst.msk [vmem:[%s4997 + $0xa0] sm:$0xf] %vm278, %v4913
        %v5098 = vld [vmem:[%s4997 + $0xa4] sm:$0x1]
        %v5099 = vsel %vm5006, %v4914, %v5098
        %5100 = vst [vmem:[%s4997 + $0xa4] sm:$0x1] %v5099
        %v5101 = vld [vmem:[%s4997 + $0xa8] sm:$0xf]
        %v5102 = vsel %vm5000, %v4921, %v5101
        %5103 = vst [vmem:[%s4997 + $0xa8] sm:$0xf] %v5102
        %5104 = vst.msk [vmem:[%s4997 + $0xac] sm:$0xf] %vm278, %v4930
        %v5105 = vld [vmem:[%s4997 + $0xb0] sm:$0x1]
        %v5106 = vsel %vm5006, %v4931, %v5105
        %5107 = vst [vmem:[%s4997 + $0xb0] sm:$0x1] %v5106
        %v5108 = vld [vmem:[%s4997 + $0xb4] sm:$0xf]
        %v5109 = vsel %vm5000, %v4938, %v5108
        %5110 = vst [vmem:[%s4997 + $0xb4] sm:$0xf] %v5109
        %5111 = vst.msk [vmem:[%s4997 + $0xb8] sm:$0xf] %vm278, %v4947
        %v5112 = vld [vmem:[%s4997 + $0xbc] sm:$0x1]
        %v5113 = vsel %vm5006, %v4948, %v5112
        %5114 = vst [vmem:[%s4997 + $0xbc] sm:$0x1] %v5113
        %v5115 = vld [vmem:[#allocation2] sm:$0xf]
        %v5116 = vld [vmem:[#allocation2 + $0x4] sm:$0xf]
        %v5117 = vld [vmem:[#allocation2 + $0x8] sm:$0x1]
        %v5118 = vld [vmem:[#allocation2 + $0xc] sm:$0xf]
        %v5119 = vld [vmem:[#allocation2 + $0x10] sm:$0xf]
        %v5120 = vld [vmem:[#allocation2 + $0x14] sm:$0x1]
        %v5121 = vld [vmem:[#allocation2 + $0x18] sm:$0xf]
        %v5122 = vld [vmem:[#allocation2 + $0x1c] sm:$0xf]
        %v5123 = vld [vmem:[#allocation2 + $0x20] sm:$0x1]
        %v5124 = vld [vmem:[#allocation2 + $0x24] sm:$0xf]
        %v5125 = vld [vmem:[#allocation2 + $0x28] sm:$0xf]
        %v5126 = vld [vmem:[#allocation2 + $0x2c] sm:$0x1]
        %v5127 = vld [vmem:[#allocation2 + $0x30] sm:$0xf]
        %v5128 = vld [vmem:[#allocation2 + $0x34] sm:$0xf]
        %v5129 = vld [vmem:[#allocation2 + $0x38] sm:$0x1]
        %v5130 = vld [vmem:[#allocation2 + $0x3c] sm:$0xf]
        %v5131 = vld [vmem:[#allocation2 + $0x40] sm:$0xf]
        %v5132 = vld [vmem:[#allocation2 + $0x44] sm:$0x1]
        %v5133 = vld [vmem:[#allocation2 + $0x48] sm:$0xf]
        %v5134 = vld [vmem:[#allocation2 + $0x4c] sm:$0xf]
        %v5135 = vld [vmem:[#allocation2 + $0x50] sm:$0x1]
        %v5136 = vld [vmem:[#allocation2 + $0x54] sm:$0xf]
        %v5137 = vld [vmem:[#allocation2 + $0x58] sm:$0xf]
        %v5138 = vld [vmem:[#allocation2 + $0x5c] sm:$0x1]
        %v5139 = vld [vmem:[#allocation2 + $0x60] sm:$0xf]
        %v5140 = vld [vmem:[#allocation2 + $0x64] sm:$0xf]
        %v5141 = vld [vmem:[#allocation2 + $0x68] sm:$0x1]
        %v5142 = vld [vmem:[#allocation2 + $0x6c] sm:$0xf]
        %v5143 = vld [vmem:[#allocation2 + $0x70] sm:$0xf]
        %v5144 = vld [vmem:[#allocation2 + $0x74] sm:$0x1]
        %v5145 = vld [vmem:[#allocation2 + $0x78] sm:$0xf]
        %v5146 = vld [vmem:[#allocation2 + $0x7c] sm:$0xf]
        %v5147 = vld [vmem:[#allocation2 + $0x80] sm:$0x1]
        %v5148 = vld [vmem:[#allocation2 + $0x84] sm:$0xf]
        %v5149 = vld [vmem:[#allocation2 + $0x88] sm:$0xf]
        %v5150 = vld [vmem:[#allocation2 + $0x8c] sm:$0x1]
        %v5151 = vld [vmem:[#allocation2 + $0x90] sm:$0xf]
        %v5152 = vld [vmem:[#allocation2 + $0x94] sm:$0xf]
        %v5153 = vld [vmem:[#allocation2 + $0x98] sm:$0x1]
        %v5154 = vld [vmem:[#allocation2 + $0x9c] sm:$0xf]
        %v5155 = vld [vmem:[#allocation2 + $0xa0] sm:$0xf]
        %v5156 = vld [vmem:[#allocation2 + $0xa4] sm:$0x1]
        %v5157 = vld [vmem:[#allocation2 + $0xa8] sm:$0xf]
        %v5158 = vld [vmem:[#allocation2 + $0xac] sm:$0xf]
        %v5159 = vld [vmem:[#allocation2 + $0xb0] sm:$0x1]
        %v5160 = vld [vmem:[#allocation2 + $0xb4] sm:$0xf]
        %v5161 = vld [vmem:[#allocation2 + $0xb8] sm:$0xf]
        %v5162 = vld [vmem:[#allocation2 + $0xbc] sm:$0x1]
        %v5163 = vld [vmem:[#allocation2 + $0xc0] sm:$0xf]
        %v5164 = vld [vmem:[#allocation2 + $0xc4] sm:$0xf]
        %v5165 = vld [vmem:[#allocation2 + $0xc8] sm:$0x1]
        %v5166 = vld [vmem:[#allocation2 + $0xcc] sm:$0xf]
        %v5167 = vld [vmem:[#allocation2 + $0xd0] sm:$0xf]
        %v5168 = vld [vmem:[#allocation2 + $0xd4] sm:$0x1]
        %v5205 = vunpack.c.l.b16 %v5115
        %v5206 = vunpack.c.l.b16 %v5116
        %v5207 = vunpack.c.l.b16 %v5118
        %v5208 = vunpack.c.l.b16 %v5119
        %v5209 = vunpack.c.l.b16 %v5121
        %v5210 = vunpack.c.l.b16 %v5122
        %v5211 = vunpack.c.l.b16 %v5124
        %v5212 = vunpack.c.l.b16 %v5125
        %v5213 = vunpack.c.l.b16 %v5127
        %v5214 = vunpack.c.l.b16 %v5128
        %v5215 = vunpack.c.l.b16 %v5130
        %v5216 = vunpack.c.l.b16 %v5131
        %v5217 = vunpack.c.l.b16 %v5133
        %v5218 = vunpack.c.l.b16 %v5134
        %v5219 = vunpack.c.l.b16 %v5136
        %v5220 = vunpack.c.l.b16 %v5137
        %v5221 = vunpack.c.l.b16 %v5139
        %v5222 = vunpack.c.l.b16 %v5140
        %v5223 = vunpack.c.l.b16 %v5142
        %v5224 = vunpack.c.l.b16 %v5143
        %v5225 = vunpack.c.l.b16 %v5145
        %v5226 = vunpack.c.l.b16 %v5146
        %v5227 = vunpack.c.l.b16 %v5148
        %v5228 = vunpack.c.l.b16 %v5149
        %v5229 = vunpack.c.l.b16 %v5151
        %v5230 = vunpack.c.l.b16 %v5152
        %v5231 = vunpack.c.l.b16 %v5154
        %v5232 = vunpack.c.l.b16 %v5155
        %v5233 = vunpack.c.l.b16 %v5157
        %v5234 = vunpack.c.l.b16 %v5158
        %v5235 = vunpack.c.l.b16 %v5160
        %v5236 = vunpack.c.l.b16 %v5161
        %v5237 = vunpack.c.l.b16 %v5163
        %v5238 = vunpack.c.l.b16 %v5164
        %v5239 = vunpack.c.l.b16 %v5166
        %v5240 = vunpack.c.l.b16 %v5167
        %v5241 = vpack.c.b16 %v5206, %v5205
        %v5242 = vpack.c.b16 %v5208, %v5207
        %v5243 = vpack.c.b16 %v5210, %v5209
        %v5244 = vpack.c.b16 %v5212, %v5211
        %v5245 = vpack.c.b16 %v5214, %v5213
        %v5246 = vpack.c.b16 %v5216, %v5215
        %v5247 = vpack.c.b16 %v5218, %v5217
        %v5248 = vpack.c.b16 %v5220, %v5219
        %v5249 = vpack.c.b16 %v5222, %v5221
        %v5250 = vpack.c.b16 %v5224, %v5223
        %v5251 = vpack.c.b16 %v5226, %v5225
        %v5252 = vpack.c.b16 %v5228, %v5227
        %v5253 = vpack.c.b16 %v5230, %v5229
        %v5254 = vpack.c.b16 %v5232, %v5231
        %v5255 = vpack.c.b16 %v5234, %v5233
        %v5256 = vpack.c.b16 %v5236, %v5235
        %v5257 = vpack.c.b16 %v5238, %v5237
        %v5258 = vpack.c.b16 %v5240, %v5239
        %v5277 = vunpack.c.l.b16 %v5117
        %v5278 = vunpack.c.l.b16 %v5120
        %v5279 = vunpack.c.l.b16 %v5123
        %v5280 = vunpack.c.l.b16 %v5126
        %v5281 = vunpack.c.l.b16 %v5129
        %v5282 = vunpack.c.l.b16 %v5132
        %v5283 = vunpack.c.l.b16 %v5135
        %v5284 = vunpack.c.l.b16 %v5138
        %v5285 = vunpack.c.l.b16 %v5141
        %v5286 = vunpack.c.l.b16 %v5144
        %v5287 = vunpack.c.l.b16 %v5147
        %v5288 = vunpack.c.l.b16 %v5150
        %v5289 = vunpack.c.l.b16 %v5153
        %v5290 = vunpack.c.l.b16 %v5156
        %v5291 = vunpack.c.l.b16 %v5159
        %v5292 = vunpack.c.l.b16 %v5162
        %v5293 = vunpack.c.l.b16 %v5165
        %v5294 = vunpack.c.l.b16 %v5168
        %v5295 = vpack.c.b16 %v5277, %v5277
        %v5296 = vpack.c.b16 %v5278, %v5278
        %v5297 = vpack.c.b16 %v5279, %v5279
        %v5298 = vpack.c.b16 %v5280, %v5280
        %v5299 = vpack.c.b16 %v5281, %v5281
        %v5300 = vpack.c.b16 %v5282, %v5282
        %v5301 = vpack.c.b16 %v5283, %v5283
        %v5302 = vpack.c.b16 %v5284, %v5284
        %v5303 = vpack.c.b16 %v5285, %v5285
        %v5304 = vpack.c.b16 %v5286, %v5286
        %v5305 = vpack.c.b16 %v5287, %v5287
        %v5306 = vpack.c.b16 %v5288, %v5288
        %v5307 = vpack.c.b16 %v5289, %v5289
        %v5308 = vpack.c.b16 %v5290, %v5290
        %v5309 = vpack.c.b16 %v5291, %v5291
        %v5310 = vpack.c.b16 %v5292, %v5292
        %v5311 = vpack.c.b16 %v5293, %v5293
        %v5312 = vpack.c.b16 %v5294, %v5294
        %vm5313 = vsmask.f32 7424
        %v5315 = vshrl.u32 %v5241, 16
        %v5317 = vshll.u32 %v5241, 16
        %v5319 = vrot.slane %v5317, 1
        %v5320 = vor.u32 %v5315, %v5319
        %v5322 = vshll.u32 %v5295, 16
        %v5324 = vrot.slane %v5322, 1
        %v5325 = vsel %vm5313, %v5320, %v5324
        %v5327 = vshrl.u32 %v5242, 16
        %v5329 = vshll.u32 %v5242, 16
        %v5331 = vrot.slane %v5329, 1
        %v5332 = vor.u32 %v5327, %v5331
        %v5334 = vshll.u32 %v5296, 16
        %v5336 = vrot.slane %v5334, 1
        %v5337 = vsel %vm5313, %v5332, %v5336
        %v5339 = vshrl.u32 %v5243, 16
        %v5341 = vshll.u32 %v5243, 16
        %v5343 = vrot.slane %v5341, 1
        %v5344 = vor.u32 %v5339, %v5343
        %v5346 = vshll.u32 %v5297, 16
        %v5348 = vrot.slane %v5346, 1
        %v5349 = vsel %vm5313, %v5344, %v5348
        %v5351 = vshrl.u32 %v5244, 16
        %v5353 = vshll.u32 %v5244, 16
        %v5355 = vrot.slane %v5353, 1
        %v5356 = vor.u32 %v5351, %v5355
        %v5358 = vshll.u32 %v5298, 16
        %v5360 = vrot.slane %v5358, 1
        %v5361 = vsel %vm5313, %v5356, %v5360
        %v5363 = vshrl.u32 %v5245, 16
        %v5365 = vshll.u32 %v5245, 16
        %v5367 = vrot.slane %v5365, 1
        %v5368 = vor.u32 %v5363, %v5367
        %v5370 = vshll.u32 %v5299, 16
        %v5372 = vrot.slane %v5370, 1
        %v5373 = vsel %vm5313, %v5368, %v5372
        %v5375 = vshrl.u32 %v5246, 16
        %v5377 = vshll.u32 %v5246, 16
        %v5379 = vrot.slane %v5377, 1
        %v5380 = vor.u32 %v5375, %v5379
        %v5382 = vshll.u32 %v5300, 16
        %v5384 = vrot.slane %v5382, 1
        %v5385 = vsel %vm5313, %v5380, %v5384
        %v5387 = vshrl.u32 %v5247, 16
        %v5389 = vshll.u32 %v5247, 16
        %v5391 = vrot.slane %v5389, 1
        %v5392 = vor.u32 %v5387, %v5391
        %v5394 = vshll.u32 %v5301, 16
        %v5396 = vrot.slane %v5394, 1
        %v5397 = vsel %vm5313, %v5392, %v5396
        %v5399 = vshrl.u32 %v5248, 16
        %v5401 = vshll.u32 %v5248, 16
        %v5403 = vrot.slane %v5401, 1
        %v5404 = vor.u32 %v5399, %v5403
        %v5406 = vshll.u32 %v5302, 16
        %v5408 = vrot.slane %v5406, 1
        %v5409 = vsel %vm5313, %v5404, %v5408
        %v5411 = vshrl.u32 %v5249, 16
        %v5413 = vshll.u32 %v5249, 16
        %v5415 = vrot.slane %v5413, 1
        %v5416 = vor.u32 %v5411, %v5415
        %v5418 = vshll.u32 %v5303, 16
        %v5420 = vrot.slane %v5418, 1
        %v5421 = vsel %vm5313, %v5416, %v5420
        %v5423 = vshrl.u32 %v5250, 16
        %v5425 = vshll.u32 %v5250, 16
        %v5427 = vrot.slane %v5425, 1
        %v5428 = vor.u32 %v5423, %v5427
        %v5430 = vshll.u32 %v5304, 16
        %v5432 = vrot.slane %v5430, 1
        %v5433 = vsel %vm5313, %v5428, %v5432
        %v5435 = vshrl.u32 %v5251, 16
        %v5437 = vshll.u32 %v5251, 16
        %v5439 = vrot.slane %v5437, 1
        %v5440 = vor.u32 %v5435, %v5439
        %v5442 = vshll.u32 %v5305, 16
        %v5444 = vrot.slane %v5442, 1
        %v5445 = vsel %vm5313, %v5440, %v5444
        %v5447 = vshrl.u32 %v5252, 16
        %v5449 = vshll.u32 %v5252, 16
        %v5451 = vrot.slane %v5449, 1
        %v5452 = vor.u32 %v5447, %v5451
        %v5454 = vshll.u32 %v5306, 16
        %v5456 = vrot.slane %v5454, 1
        %v5457 = vsel %vm5313, %v5452, %v5456
        %v5459 = vshrl.u32 %v5253, 16
        %v5461 = vshll.u32 %v5253, 16
        %v5463 = vrot.slane %v5461, 1
        %v5464 = vor.u32 %v5459, %v5463
        %v5466 = vshll.u32 %v5307, 16
        %v5468 = vrot.slane %v5466, 1
        %v5469 = vsel %vm5313, %v5464, %v5468
        %v5471 = vshrl.u32 %v5254, 16
        %v5473 = vshll.u32 %v5254, 16
        %v5475 = vrot.slane %v5473, 1
        %v5476 = vor.u32 %v5471, %v5475
        %v5478 = vshll.u32 %v5308, 16
        %v5480 = vrot.slane %v5478, 1
        %v5481 = vsel %vm5313, %v5476, %v5480
        %v5483 = vshrl.u32 %v5255, 16
        %v5485 = vshll.u32 %v5255, 16
        %v5487 = vrot.slane %v5485, 1
        %v5488 = vor.u32 %v5483, %v5487
        %v5490 = vshll.u32 %v5309, 16
        %v5492 = vrot.slane %v5490, 1
        %v5493 = vsel %vm5313, %v5488, %v5492
        %v5495 = vshrl.u32 %v5256, 16
        %v5497 = vshll.u32 %v5256, 16
        %v5499 = vrot.slane %v5497, 1
        %v5500 = vor.u32 %v5495, %v5499
        %v5502 = vshll.u32 %v5310, 16
        %v5504 = vrot.slane %v5502, 1
        %v5505 = vsel %vm5313, %v5500, %v5504
        %v5507 = vshrl.u32 %v5257, 16
        %v5509 = vshll.u32 %v5257, 16
        %v5511 = vrot.slane %v5509, 1
        %v5512 = vor.u32 %v5507, %v5511
        %v5514 = vshll.u32 %v5311, 16
        %v5516 = vrot.slane %v5514, 1
        %v5517 = vsel %vm5313, %v5512, %v5516
        %v5519 = vshrl.u32 %v5258, 16
        %v5521 = vshll.u32 %v5258, 16
        %v5523 = vrot.slane %v5521, 1
        %v5524 = vor.u32 %v5519, %v5523
        %v5526 = vshll.u32 %v5312, 16
        %v5528 = vrot.slane %v5526, 1
        %v5529 = vsel %vm5313, %v5524, %v5528
        %5530 = vrot.lane.b32.xlu0 %v5325, 32
        %v5531 = vpop.permute.xlu0 %5530
        %5532 = vrot.lane.b32.xlu0 %v5337, 32
        %v5533 = vpop.permute.xlu0 %5532
        %5534 = vrot.lane.b32.xlu0 %v5349, 32
        %v5535 = vpop.permute.xlu0 %5534
        %5536 = vrot.lane.b32.xlu0 %v5361, 32
        %v5537 = vpop.permute.xlu0 %5536
        %5538 = vrot.lane.b32.xlu0 %v5373, 32
        %v5539 = vpop.permute.xlu0 %5538
        %5540 = vrot.lane.b32.xlu0 %v5385, 32
        %v5541 = vpop.permute.xlu0 %5540
        %5542 = vrot.lane.b32.xlu0 %v5397, 32
        %v5543 = vpop.permute.xlu0 %5542
        %5544 = vrot.lane.b32.xlu0 %v5409, 32
        %v5545 = vpop.permute.xlu0 %5544
        %5546 = vrot.lane.b32.xlu0 %v5421, 32
        %v5547 = vpop.permute.xlu0 %5546
        %5548 = vrot.lane.b32.xlu0 %v5433, 32
        %v5549 = vpop.permute.xlu0 %5548
        %5550 = vrot.lane.b32.xlu0 %v5445, 32
        %v5551 = vpop.permute.xlu0 %5550
        %5552 = vrot.lane.b32.xlu0 %v5457, 32
        %v5553 = vpop.permute.xlu0 %5552
        %5554 = vrot.lane.b32.xlu0 %v5469, 32
        %v5555 = vpop.permute.xlu0 %5554
        %5556 = vrot.lane.b32.xlu0 %v5481, 32
        %v5557 = vpop.permute.xlu0 %5556
        %5558 = vrot.lane.b32.xlu0 %v5493, 32
        %v5559 = vpop.permute.xlu0 %5558
        %5560 = vrot.lane.b32.xlu0 %v5505, 32
        %v5561 = vpop.permute.xlu0 %5560
        %5562 = vrot.lane.b32.xlu0 %v5517, 32
        %v5563 = vpop.permute.xlu0 %5562
        %5564 = vrot.lane.b32.xlu0 %v5529, 32
        %v5565 = vpop.permute.xlu0 %5564
        %vm5566 = vcmask 1046528
        %v5567 = vrot.slane %v5241, 1
        %v5568 = vrot.slane %v5295, 1
        %v5569 = vsel %vm5566, %v5567, %v5568
        %v5570 = vrot.slane %v5242, 1
        %v5571 = vrot.slane %v5296, 1
        %v5572 = vsel %vm5566, %v5570, %v5571
        %v5573 = vrot.slane %v5243, 1
        %v5574 = vrot.slane %v5297, 1
        %v5575 = vsel %vm5566, %v5573, %v5574
        %v5576 = vrot.slane %v5244, 1
        %v5577 = vrot.slane %v5298, 1
        %v5578 = vsel %vm5566, %v5576, %v5577
        %v5579 = vrot.slane %v5245, 1
        %v5580 = vrot.slane %v5299, 1
        %v5581 = vsel %vm5566, %v5579, %v5580
        %v5582 = vrot.slane %v5246, 1
        %v5583 = vrot.slane %v5300, 1
        %v5584 = vsel %vm5566, %v5582, %v5583
        %v5585 = vrot.slane %v5247, 1
        %v5586 = vrot.slane %v5301, 1
        %v5587 = vsel %vm5566, %v5585, %v5586
        %v5588 = vrot.slane %v5248, 1
        %v5589 = vrot.slane %v5302, 1
        %v5590 = vsel %vm5566, %v5588, %v5589
        %v5591 = vrot.slane %v5249, 1
        %v5592 = vrot.slane %v5303, 1
        %v5593 = vsel %vm5566, %v5591, %v5592
        %v5594 = vrot.slane %v5250, 1
        %v5595 = vrot.slane %v5304, 1
        %v5596 = vsel %vm5566, %v5594, %v5595
        %v5597 = vrot.slane %v5251, 1
        %v5598 = vrot.slane %v5305, 1
        %v5599 = vsel %vm5566, %v5597, %v5598
        %v5600 = vrot.slane %v5252, 1
        %v5601 = vrot.slane %v5306, 1
        %v5602 = vsel %vm5566, %v5600, %v5601
        %v5603 = vrot.slane %v5253, 1
        %v5604 = vrot.slane %v5307, 1
        %v5605 = vsel %vm5566, %v5603, %v5604
        %v5606 = vrot.slane %v5254, 1
        %v5607 = vrot.slane %v5308, 1
        %v5608 = vsel %vm5566, %v5606, %v5607
        %v5609 = vrot.slane %v5255, 1
        %v5610 = vrot.slane %v5309, 1
        %v5611 = vsel %vm5566, %v5609, %v5610
        %v5612 = vrot.slane %v5256, 1
        %v5613 = vrot.slane %v5310, 1
        %v5614 = vsel %vm5566, %v5612, %v5613
        %v5615 = vrot.slane %v5257, 1
        %v5616 = vrot.slane %v5311, 1
        %v5617 = vsel %vm5566, %v5615, %v5616
        %v5618 = vrot.slane %v5258, 1
        %v5619 = vrot.slane %v5312, 1
        %v5620 = vsel %vm5566, %v5618, %v5619
        %5621 = vrot.lane.b32.xlu0 %v5569, 64
        %v5622 = vpop.permute.xlu0 %5621
        %5623 = vrot.lane.b32.xlu0 %v5572, 64
        %v5624 = vpop.permute.xlu0 %5623
        %5625 = vrot.lane.b32.xlu0 %v5575, 64
        %v5626 = vpop.permute.xlu0 %5625
        %5627 = vrot.lane.b32.xlu0 %v5578, 64
        %v5628 = vpop.permute.xlu0 %5627
        %5629 = vrot.lane.b32.xlu0 %v5581, 64
        %v5630 = vpop.permute.xlu0 %5629
        %5631 = vrot.lane.b32.xlu0 %v5584, 64
        %v5632 = vpop.permute.xlu0 %5631
        %5633 = vrot.lane.b32.xlu0 %v5587, 64
        %v5634 = vpop.permute.xlu0 %5633
        %5635 = vrot.lane.b32.xlu0 %v5590, 64
        %v5636 = vpop.permute.xlu0 %5635
        %5637 = vrot.lane.b32.xlu0 %v5593, 64
        %v5638 = vpop.permute.xlu0 %5637
        %5639 = vrot.lane.b32.xlu0 %v5596, 64
        %v5640 = vpop.permute.xlu0 %5639
        %5641 = vrot.lane.b32.xlu0 %v5599, 64
        %v5642 = vpop.permute.xlu0 %5641
        %5643 = vrot.lane.b32.xlu0 %v5602, 64
        %v5644 = vpop.permute.xlu0 %5643
        %5645 = vrot.lane.b32.xlu0 %v5605, 64
        %v5646 = vpop.permute.xlu0 %5645
        %5647 = vrot.lane.b32.xlu0 %v5608, 64
        %v5648 = vpop.permute.xlu0 %5647
        %5649 = vrot.lane.b32.xlu0 %v5611, 64
        %v5650 = vpop.permute.xlu0 %5649
        %5651 = vrot.lane.b32.xlu0 %v5614, 64
        %v5652 = vpop.permute.xlu0 %5651
        %5653 = vrot.lane.b32.xlu0 %v5617, 64
        %v5654 = vpop.permute.xlu0 %5653
        %5655 = vrot.lane.b32.xlu0 %v5620, 64
        %v5656 = vpop.permute.xlu0 %5655
        %vm5657 = vcmask 261120
        %v5659 = vsel %vm5657, %v5241, %v5531
        %v5661 = vsel %vm5657, %v5242, %v5533
        %v5663 = vsel %vm5657, %v5243, %v5535
        %v5665 = vsel %vm5657, %v5244, %v5537
        %v5667 = vsel %vm5657, %v5245, %v5539
        %v5669 = vsel %vm5657, %v5246, %v5541
        %v5671 = vsel %vm5657, %v5247, %v5543
        %v5673 = vsel %vm5657, %v5248, %v5545
        %v5675 = vsel %vm5657, %v5249, %v5547
        %v5677 = vsel %vm5657, %v5250, %v5549
        %v5679 = vsel %vm5657, %v5251, %v5551
        %v5681 = vsel %vm5657, %v5252, %v5553
        %v5683 = vsel %vm5657, %v5253, %v5555
        %v5685 = vsel %vm5657, %v5254, %v5557
        %v5687 = vsel %vm5657, %v5255, %v5559
        %v5689 = vsel %vm5657, %v5256, %v5561
        %v5691 = vsel %vm5657, %v5257, %v5563
        %v5693 = vsel %vm5657, %v5258, %v5565
        %vm5694 = vcmask 523264
        %v5696 = vsel %vm5694, %v5659, %v5622
        %v5698 = vsel %vm5694, %v5661, %v5624
        %v5700 = vsel %vm5694, %v5663, %v5626
        %v5702 = vsel %vm5694, %v5665, %v5628
        %v5704 = vsel %vm5694, %v5667, %v5630
        %v5706 = vsel %vm5694, %v5669, %v5632
        %v5708 = vsel %vm5694, %v5671, %v5634
        %v5710 = vsel %vm5694, %v5673, %v5636
        %v5712 = vsel %vm5694, %v5675, %v5638
        %v5714 = vsel %vm5694, %v5677, %v5640
        %v5716 = vsel %vm5694, %v5679, %v5642
        %v5718 = vsel %vm5694, %v5681, %v5644
        %v5720 = vsel %vm5694, %v5683, %v5646
        %v5722 = vsel %vm5694, %v5685, %v5648
        %v5724 = vsel %vm5694, %v5687, %v5650
        %v5726 = vsel %vm5694, %v5689, %v5652
        %v5728 = vsel %vm5694, %v5691, %v5654
        %v5730 = vsel %vm5694, %v5693, %v5656
        %s5731 = scalar_lea.vmem %s1, 576
        %v5732 = vld [vmem:[%s5731] sm:$0xf]
        %v5733 = vld [vmem:[%s5731 + $0x4] sm:$0xf]
        %v5734 = vld [vmem:[%s5731 + $0x8] sm:$0xf]
        %v5735 = vld [vmem:[%s5731 + $0xc] sm:$0xf]
        %v5736 = vld [vmem:[%s5731 + $0x10] sm:$0xf]
        %v5737 = vld [vmem:[%s5731 + $0x14] sm:$0xf]
        %v5738 = vld [vmem:[%s5731 + $0x18] sm:$0xf]
        %v5739 = vld [vmem:[%s5731 + $0x1c] sm:$0xf]
        %v5740 = vld [vmem:[%s5731 + $0x20] sm:$0xf]
        %v5741 = vld [vmem:[%s5731 + $0x24] sm:$0xf]
        %v5742 = vld [vmem:[%s5731 + $0x28] sm:$0xf]
        %v5743 = vld [vmem:[%s5731 + $0x2c] sm:$0xf]
        %v5744 = vld [vmem:[%s5731 + $0x30] sm:$0xf]
        %v5745 = vld [vmem:[%s5731 + $0x34] sm:$0xf]
        %v5746 = vld [vmem:[%s5731 + $0x38] sm:$0xf]
        %v5747 = vld [vmem:[%s5731 + $0x3c] sm:$0xf]
        %v5748 = vld [vmem:[%s5731 + $0x40] sm:$0xf]
        %v5749 = vld [vmem:[%s5731 + $0x44] sm:$0xf]
        %v5750 = vld [vmem:[%s5731 + $0x48] sm:$0xf]
        %v5751 = vld [vmem:[%s5731 + $0x4c] sm:$0xf]
        %v5752 = vld [vmem:[%s5731 + $0x50] sm:$0xf]
        %v5753 = vld [vmem:[%s5731 + $0x54] sm:$0xf]
        %v5754 = vld [vmem:[%s5731 + $0x58] sm:$0xf]
        %v5755 = vld [vmem:[%s5731 + $0x5c] sm:$0xf]
        %v5756 = vld [vmem:[%s5731 + $0x60] sm:$0xf]
        %v5757 = vld [vmem:[%s5731 + $0x64] sm:$0xf]
        %v5758 = vld [vmem:[%s5731 + $0x68] sm:$0xf]
        %v5759 = vld [vmem:[%s5731 + $0x6c] sm:$0xf]
        %v5760 = vld [vmem:[%s5731 + $0x70] sm:$0xf]
        %v5761 = vld [vmem:[%s5731 + $0x74] sm:$0xf]
        %v5762 = vld [vmem:[%s5731 + $0x78] sm:$0xf]
        %v5763 = vld [vmem:[%s5731 + $0x7c] sm:$0xf]
        %v5764 = vld [vmem:[%s5731 + $0x80] sm:$0xf]
        %v5765 = vld [vmem:[%s5731 + $0x84] sm:$0xf]
        %v5766 = vld [vmem:[%s5731 + $0x88] sm:$0xf]
        %v5767 = vld [vmem:[%s5731 + $0x8c] sm:$0xf]
        %s5768 = scalar_lea.vmem %s2, 4
        %v5769 = vld [vmem:[%s5768] sm:$0x1]
        %v5782 = vunpack.c.l.b16 %v5732
        %v5783 = vunpack.c.l.b16 %v5733
        %v5784 = vunpack.c.l.b16 %v5734
        %v5785 = vunpack.c.l.b16 %v5735
        %v5786 = vunpack.c.l.b16 %v5736
        %v5787 = vunpack.c.l.b16 %v5737
        %v5788 = vunpack.c.l.b16 %v5738
        %v5789 = vunpack.c.l.b16 %v5739
        %v5790 = vunpack.c.l.b16 %v5740
        %v5791 = vunpack.c.l.b16 %v5741
        %v5792 = vunpack.c.l.b16 %v5742
        %v5793 = vunpack.c.l.b16 %v5743
        %v5794 = vpack.c.b16 %v5783, %v5782
        %v5795 = vpack.c.b16 %v5785, %v5784
        %v5796 = vpack.c.b16 %v5787, %v5786
        %v5797 = vpack.c.b16 %v5789, %v5788
        %v5798 = vpack.c.b16 %v5791, %v5790
        %v5799 = vpack.c.b16 %v5793, %v5792
        %vm5806 = vcmask 785408
        %v5807 = vsel %vm5806, %v5696, 0
        %v5809 = vsel %vm5806, %v5698, 0
        %v5811 = vsel %vm5806, %v5700, 0
        %v5813 = vsel %vm5806, %v5702, 0
        %v5815 = vsel %vm5806, %v5704, 0
        %v5817 = vsel %vm5806, %v5706, 0
        %v5819 = vsel %vm5806, %v5708, 0
        %v5821 = vsel %vm5806, %v5710, 0
        %v5823 = vsel %vm5806, %v5712, 0
        %v5825 = vsel %vm5806, %v5714, 0
        %v5827 = vsel %vm5806, %v5716, 0
        %v5829 = vsel %vm5806, %v5718, 0
        %v5831 = vsel %vm5806, %v5720, 0
        %v5833 = vsel %vm5806, %v5722, 0
        %v5835 = vsel %vm5806, %v5724, 0
        %v5837 = vsel %vm5806, %v5726, 0
        %5839 = vmatprep.subr.bf16.mxu0 0
        %5840 = vmatpush1.bf16.msra.mxu0 %v5794
        %5841 = vmatprep.subr.bf16.mxu0 0
        %5842 = vmatpush1.bf16.msra.mxu0 %v5795
        %5843 = vmatprep.subr.bf16.mxu0 0
        %5844 = vmatpush1.bf16.msra.mxu0 %v5796
        %5845 = vmatprep.subr.bf16.mxu0 0
        %5846 = vmatpush1.bf16.msra.mxu0 %v5797
        %5847 = vmatprep.subr.bf16.mxu0 0
        %5848 = vmatpush1.bf16.msra.mxu0 %v5798
        %5849 = vmatprep.subr.bf16.mxu0 0
        %5850 = vmatpush1.bf16.msra.mxu0 %v5799
        %5851 = vmatprep.subr.bf16.mxu0 0
        %5852 = vmatpush1.bf16.msra.mxu0 0
        %5853 = vmatprep.subr.bf16.mxu0 0
        %5854 = vmatpush1.bf16.msra.mxu0 0
        %5855 = vmatprep.subr.bf16.mxu0 0
        %5856 = vmatpush1.bf16.msra.mxu0 0
        %5857 = vmatprep.subr.bf16.mxu0 0
        %5858 = vmatpush1.bf16.msra.mxu0 0
        %5859 = vmatprep.subr.bf16.mxu0 0
        %5860 = vmatpush1.bf16.msra.mxu0 0
        %5861 = vmatprep.subr.bf16.mxu0 0
        %5862 = vmatpush1.bf16.msra.mxu0 0
        %5863 = vmatprep.subr.bf16.mxu0 0
        %5864 = vmatpush1.bf16.msra.mxu0 0
        %5865 = vmatprep.subr.bf16.mxu0 0
        %5866 = vmatpush1.bf16.msra.mxu0 0
        %5867 = vmatprep.subr.bf16.mxu0 0
        %5868 = vmatpush1.bf16.msra.mxu0 0
        %5869 = vmatprep.subr.bf16.mxu0 0
        %5870 = vmatpush1.bf16.msra.mxu0 0
        %5871 = vmatprep.mubr.bf16.mxu0 0
        %5872 = vmatmul.mubr.bf16.gmra.mrb[0].mxu0 %v5807
        %v5873 = vpop.f32.mrb[0].mxu0
        %v5874 = vadd.f32 0.0, %v5873
        %v5875 = vpop.f32.mrb[0].mxu0
        %v5876 = vpop.f32.mrb[0].mxu0
        %v5877 = vadd.f32 0.0, %v5876
        %v5878 = vpop.f32.mrb[0].mxu0
        %5879 = vmatprep.mubr.bf16.mxu0 0
        %5880 = vmatmul.mubr.bf16.gmra.mrb[0].mxu0 %v5809
        %v5881 = vpop.f32.mrb[0].mxu0
        %v5882 = vadd.f32 0.0, %v5881
        %v5883 = vpop.f32.mrb[0].mxu0
        %v5884 = vpop.f32.mrb[0].mxu0
        %v5885 = vadd.f32 0.0, %v5884
        %v5886 = vpop.f32.mrb[0].mxu0
        %5887 = vmatprep.mubr.bf16.mxu0 0
        %5888 = vmatmul.mubr.bf16.gmra.mrb[0].mxu0 %v5811
        %v5889 = vpop.f32.mrb[0].mxu0
        %v5890 = vadd.f32 0.0, %v5889
        %v5891 = vpop.f32.mrb[0].mxu0
        %v5892 = vpop.f32.mrb[0].mxu0
        %v5893 = vadd.f32 0.0, %v5892
        %v5894 = vpop.f32.mrb[0].mxu0
        %5895 = vmatprep.mubr.bf16.mxu0 0
        %5896 = vmatmul.mubr.bf16.gmra.mrb[0].mxu0 %v5813
        %v5897 = vpop.f32.mrb[0].mxu0
        %v5898 = vadd.f32 0.0, %v5897
        %v5899 = vpop.f32.mrb[0].mxu0
        %v5900 = vpop.f32.mrb[0].mxu0
        %v5901 = vadd.f32 0.0, %v5900
        %v5902 = vpop.f32.mrb[0].mxu0
        %5903 = vmatprep.mubr.bf16.mxu0 0
        %5904 = vmatmul.mubr.bf16.gmra.mrb[0].mxu0 %v5815
        %v5905 = vpop.f32.mrb[0].mxu0
        %v5906 = vadd.f32 0.0, %v5905
        %v5907 = vpop.f32.mrb[0].mxu0
        %v5908 = vpop.f32.mrb[0].mxu0
        %v5909 = vadd.f32 0.0, %v5908
        %v5910 = vpop.f32.mrb[0].mxu0
        %5911 = vmatprep.mubr.bf16.mxu0 0
        %5912 = vmatmul.mubr.bf16.gmra.mrb[0].mxu0 %v5817
        %v5913 = vpop.f32.mrb[0].mxu0
        %v5914 = vadd.f32 0.0, %v5913
        %v5915 = vpop.f32.mrb[0].mxu0
        %v5916 = vpop.f32.mrb[0].mxu0
        %v5917 = vadd.f32 0.0, %v5916
        %v5918 = vpop.f32.mrb[0].mxu0
        %5919 = vmatprep.mubr.bf16.mxu0 0
        %5920 = vmatmul.mubr.bf16.gmra.mrb[0].mxu0 %v5819
        %v5921 = vpop.f32.mrb[0].mxu0
        %v5922 = vadd.f32 0.0, %v5921
        %v5923 = vpop.f32.mrb[0].mxu0
        %v5924 = vpop.f32.mrb[0].mxu0
        %v5925 = vadd.f32 0.0, %v5924
        %v5926 = vpop.f32.mrb[0].mxu0
        %5927 = vmatprep.mubr.bf16.mxu0 0
        %5928 = vmatmul.mubr.bf16.gmra.mrb[0].mxu0 %v5821
        %v5929 = vpop.f32.mrb[0].mxu0
        %v5930 = vadd.f32 0.0, %v5929
        %v5931 = vpop.f32.mrb[0].mxu0
        %v5932 = vpop.f32.mrb[0].mxu0
        %v5933 = vadd.f32 0.0, %v5932
        %v5934 = vpop.f32.mrb[0].mxu0
        %5935 = vmatprep.mubr.bf16.mxu0 0
        %5936 = vmatmul.mubr.bf16.gmra.mrb[0].mxu0 %v5823
        %v5937 = vpop.f32.mrb[0].mxu0
        %v5938 = vadd.f32 0.0, %v5937
        %v5939 = vpop.f32.mrb[0].mxu0
        %v5940 = vpop.f32.mrb[0].mxu0
        %v5941 = vadd.f32 0.0, %v5940
        %v5942 = vpop.f32.mrb[0].mxu0
        %5943 = vmatprep.mubr.bf16.mxu0 0
        %5944 = vmatmul.mubr.bf16.gmra.mrb[0].mxu0 %v5825
        %v5945 = vpop.f32.mrb[0].mxu0
        %v5946 = vadd.f32 0.0, %v5945
        %v5947 = vpop.f32.mrb[0].mxu0
        %v5948 = vpop.f32.mrb[0].mxu0
        %v5949 = vadd.f32 0.0, %v5948
        %v5950 = vpop.f32.mrb[0].mxu0
        %5951 = vmatprep.mubr.bf16.mxu0 0
        %5952 = vmatmul.mubr.bf16.gmra.mrb[0].mxu0 %v5827
        %v5953 = vpop.f32.mrb[0].mxu0
        %v5954 = vadd.f32 0.0, %v5953
        %v5955 = vpop.f32.mrb[0].mxu0
        %v5956 = vpop.f32.mrb[0].mxu0
        %v5957 = vadd.f32 0.0, %v5956
        %v5958 = vpop.f32.mrb[0].mxu0
        %5959 = vmatprep.mubr.bf16.mxu0 0
        %5960 = vmatmul.mubr.bf16.gmra.mrb[0].mxu0 %v5829
        %v5961 = vpop.f32.mrb[0].mxu0
        %v5962 = vadd.f32 0.0, %v5961
        %v5963 = vpop.f32.mrb[0].mxu0
        %v5964 = vpop.f32.mrb[0].mxu0
        %v5965 = vadd.f32 0.0, %v5964
        %v5966 = vpop.f32.mrb[0].mxu0
        %5967 = vmatprep.mubr.bf16.mxu0 0
        %5968 = vmatmul.mubr.bf16.gmra.mrb[0].mxu0 %v5831
        %v5969 = vpop.f32.mrb[0].mxu0
        %v5970 = vadd.f32 0.0, %v5969
        %v5971 = vpop.f32.mrb[0].mxu0
        %v5972 = vpop.f32.mrb[0].mxu0
        %v5973 = vadd.f32 0.0, %v5972
        %v5974 = vpop.f32.mrb[0].mxu0
        %5975 = vmatprep.mubr.bf16.mxu0 0
        %5976 = vmatmul.mubr.bf16.gmra.mrb[0].mxu0 %v5833
        %v5977 = vpop.f32.mrb[0].mxu0
        %v5978 = vadd.f32 0.0, %v5977
        %v5979 = vpop.f32.mrb[0].mxu0
        %v5980 = vpop.f32.mrb[0].mxu0
        %v5981 = vadd.f32 0.0, %v5980
        %v5982 = vpop.f32.mrb[0].mxu0
        %5983 = vmatprep.mubr.bf16.mxu0 0
        %5984 = vmatmul.mubr.bf16.gmra.mrb[0].mxu0 %v5835
        %v5985 = vpop.f32.mrb[0].mxu0
        %v5986 = vadd.f32 0.0, %v5985
        %v5987 = vpop.f32.mrb[0].mxu0
        %v5988 = vpop.f32.mrb[0].mxu0
        %v5989 = vadd.f32 0.0, %v5988
        %v5990 = vpop.f32.mrb[0].mxu0
        %5991 = vmatprep.mubr.bf16.mxu0 0
        %5992 = vmatmul.mubr.bf16.gmra.mrb[0].mxu0 %v5837
        %v5993 = vpop.f32.mrb[0].mxu0
        %v5994 = vadd.f32 0.0, %v5993
        %v5995 = vpop.f32.mrb[0].mxu0
        %v5996 = vpop.f32.mrb[0].mxu0
        %v5997 = vadd.f32 0.0, %v5996
        %v5998 = vpop.f32.mrb[0].mxu0
        %5999 = vdwg.mxu0
        %v6001 = vlaneseq
        %v6002 = vshrl.u32 %v6001, 7
        %v6003 = vsub.s32 0, %v6002
        %v6004 = vrot.slane %v5769, %v6003
        %v6006 = vadd.f32 %v6004, %v5874
        %v6007 = vadd.f32 %v6004, %v5877
        %v6008 = vadd.f32 %v6004, %v5882
        %v6009 = vadd.f32 %v6004, %v5885
        %v6010 = vadd.f32 %v6004, %v5890
        %v6011 = vadd.f32 %v6004, %v5893
        %v6012 = vadd.f32 %v6004, %v5898
        %v6013 = vadd.f32 %v6004, %v5901
        %v6014 = vadd.f32 %v6004, %v5906
        %v6015 = vadd.f32 %v6004, %v5909
        %v6016 = vadd.f32 %v6004, %v5914
        %v6017 = vadd.f32 %v6004, %v5917
        %v6018 = vadd.f32 %v6004, %v5922
        %v6019 = vadd.f32 %v6004, %v5925
        %v6020 = vadd.f32 %v6004, %v5930
        %v6021 = vadd.f32 %v6004, %v5933
        %v6022 = vadd.f32 %v6004, %v5938
        %v6023 = vadd.f32 %v6004, %v5941
        %v6024 = vadd.f32 %v6004, %v5946
        %v6025 = vadd.f32 %v6004, %v5949
        %v6026 = vadd.f32 %v6004, %v5954
        %v6027 = vadd.f32 %v6004, %v5957
        %v6028 = vadd.f32 %v6004, %v5962
        %v6029 = vadd.f32 %v6004, %v5965
        %v6030 = vadd.f32 %v6004, %v5970
        %v6031 = vadd.f32 %v6004, %v5973
        %v6032 = vadd.f32 %v6004, %v5978
        %v6033 = vadd.f32 %v6004, %v5981
        %v6034 = vadd.f32 %v6004, %v5986
        %v6035 = vadd.f32 %v6004, %v5989
        %v6036 = vadd.f32 %v6004, %v5994
        %v6037 = vadd.f32 %v6004, %v5997
        %v6050 = vunpack.c.l.b16 %v5744
        %v6051 = vunpack.c.l.b16 %v5745
        %v6052 = vunpack.c.l.b16 %v5746
        %v6053 = vunpack.c.l.b16 %v5747
        %v6054 = vunpack.c.l.b16 %v5748
        %v6055 = vunpack.c.l.b16 %v5749
        %v6056 = vunpack.c.l.b16 %v5750
        %v6057 = vunpack.c.l.b16 %v5751
        %v6058 = vunpack.c.l.b16 %v5752
        %v6059 = vunpack.c.l.b16 %v5753
        %v6060 = vunpack.c.l.b16 %v5754
        %v6061 = vunpack.c.l.b16 %v5755
        %v6062 = vpack.c.b16 %v6051, %v6050
        %v6063 = vpack.c.b16 %v6053, %v6052
        %v6064 = vpack.c.b16 %v6055, %v6054
        %v6065 = vpack.c.b16 %v6057, %v6056
        %v6066 = vpack.c.b16 %v6059, %v6058
        %v6067 = vpack.c.b16 %v6061, %v6060
        %v6074 = vsel %vm5806, %v5728, 0
        %6076 = vmatprep.subr.bf16.mxu0 0
        %6077 = vmatpush1.bf16.msra.mxu0 %v6062
        %6078 = vmatprep.subr.bf16.mxu0 0
        %6079 = vmatpush1.bf16.msra.mxu0 %v6063
        %6080 = vmatprep.subr.bf16.mxu0 0
        %6081 = vmatpush1.bf16.msra.mxu0 %v6064
        %6082 = vmatprep.subr.bf16.mxu0 0
        %6083 = vmatpush1.bf16.msra.mxu0 %v6065
        %6084 = vmatprep.subr.bf16.mxu0 0
        %6085 = vmatpush1.bf16.msra.mxu0 %v6066
        %6086 = vmatprep.subr.bf16.mxu0 0
        %6087 = vmatpush1.bf16.msra.mxu0 %v6067
        %6088 = vmatprep.subr.bf16.mxu0 0
        %6089 = vmatpush1.bf16.msra.mxu0 0
        %6090 = vmatprep.subr.bf16.mxu0 0
        %6091 = vmatpush1.bf16.msra.mxu0 0
        %6092 = vmatprep.subr.bf16.mxu0 0
        %6093 = vmatpush1.bf16.msra.mxu0 0
        %6094 = vmatprep.subr.bf16.mxu0 0
        %6095 = vmatpush1.bf16.msra.mxu0 0
        %6096 = vmatprep.subr.bf16.mxu0 0
        %6097 = vmatpush1.bf16.msra.mxu0 0
        %6098 = vmatprep.subr.bf16.mxu0 0
        %6099 = vmatpush1.bf16.msra.mxu0 0
        %6100 = vmatprep.subr.bf16.mxu0 0
        %6101 = vmatpush1.bf16.msra.mxu0 0
        %6102 = vmatprep.subr.bf16.mxu0 0
        %6103 = vmatpush1.bf16.msra.mxu0 0
        %6104 = vmatprep.subr.bf16.mxu0 0
        %6105 = vmatpush1.bf16.msra.mxu0 0
        %6106 = vmatprep.subr.bf16.mxu0 0
        %6107 = vmatpush1.bf16.msra.mxu0 0
        %6108 = vmatprep.mubr.bf16.mxu0 0
        %6109 = vmatmul.mubr.bf16.gmra.mrb[0].mxu0 %v5809
        %v6110 = vpop.f32.mrb[0].mxu0
        %v6111 = vadd.f32 0.0, %v6110
        %v6112 = vpop.f32.mrb[0].mxu0
        %v6113 = vpop.f32.mrb[0].mxu0
        %v6114 = vadd.f32 0.0, %v6113
        %v6115 = vpop.f32.mrb[0].mxu0
        %6116 = vmatprep.mubr.bf16.mxu0 0
        %6117 = vmatmul.mubr.bf16.gmra.mrb[0].mxu0 %v5811
        %v6118 = vpop.f32.mrb[0].mxu0
        %v6119 = vadd.f32 0.0, %v6118
        %v6120 = vpop.f32.mrb[0].mxu0
        %v6121 = vpop.f32.mrb[0].mxu0
        %v6122 = vadd.f32 0.0, %v6121
        %v6123 = vpop.f32.mrb[0].mxu0
        %6124 = vmatprep.mubr.bf16.mxu0 0
        %6125 = vmatmul.mubr.bf16.gmra.mrb[0].mxu0 %v5813
        %v6126 = vpop.f32.mrb[0].mxu0
        %v6127 = vadd.f32 0.0, %v6126
        %v6128 = vpop.f32.mrb[0].mxu0
        %v6129 = vpop.f32.mrb[0].mxu0
        %v6130 = vadd.f32 0.0, %v6129
        %v6131 = vpop.f32.mrb[0].mxu0
        %6132 = vmatprep.mubr.bf16.mxu0 0
        %6133 = vmatmul.mubr.bf16.gmra.mrb[0].mxu0 %v5815
        %v6134 = vpop.f32.mrb[0].mxu0
        %v6135 = vadd.f32 0.0, %v6134
        %v6136 = vpop.f32.mrb[0].mxu0
        %v6137 = vpop.f32.mrb[0].mxu0
        %v6138 = vadd.f32 0.0, %v6137
        %v6139 = vpop.f32.mrb[0].mxu0
        %6140 = vmatprep.mubr.bf16.mxu0 0
        %6141 = vmatmul.mubr.bf16.gmra.mrb[0].mxu0 %v5817
        %v6142 = vpop.f32.mrb[0].mxu0
        %v6143 = vadd.f32 0.0, %v6142
        %v6144 = vpop.f32.mrb[0].mxu0
        %v6145 = vpop.f32.mrb[0].mxu0
        %v6146 = vadd.f32 0.0, %v6145
        %v6147 = vpop.f32.mrb[0].mxu0
        %6148 = vmatprep.mubr.bf16.mxu0 0
        %6149 = vmatmul.mubr.bf16.gmra.mrb[0].mxu0 %v5819
        %v6150 = vpop.f32.mrb[0].mxu0
        %v6151 = vadd.f32 0.0, %v6150
        %v6152 = vpop.f32.mrb[0].mxu0
        %v6153 = vpop.f32.mrb[0].mxu0
        %v6154 = vadd.f32 0.0, %v6153
        %v6155 = vpop.f32.mrb[0].mxu0
        %6156 = vmatprep.mubr.bf16.mxu0 0
        %6157 = vmatmul.mubr.bf16.gmra.mrb[0].mxu0 %v5821
        %v6158 = vpop.f32.mrb[0].mxu0
        %v6159 = vadd.f32 0.0, %v6158
        %v6160 = vpop.f32.mrb[0].mxu0
        %v6161 = vpop.f32.mrb[0].mxu0
        %v6162 = vadd.f32 0.0, %v6161
        %v6163 = vpop.f32.mrb[0].mxu0
        %6164 = vmatprep.mubr.bf16.mxu0 0
        %6165 = vmatmul.mubr.bf16.gmra.mrb[0].mxu0 %v5823
        %v6166 = vpop.f32.mrb[0].mxu0
        %v6167 = vadd.f32 0.0, %v6166
        %v6168 = vpop.f32.mrb[0].mxu0
        %v6169 = vpop.f32.mrb[0].mxu0
        %v6170 = vadd.f32 0.0, %v6169
        %v6171 = vpop.f32.mrb[0].mxu0
        %6172 = vmatprep.mubr.bf16.mxu0 0
        %6173 = vmatmul.mubr.bf16.gmra.mrb[0].mxu0 %v5825
        %v6174 = vpop.f32.mrb[0].mxu0
        %v6175 = vadd.f32 0.0, %v6174
        %v6176 = vpop.f32.mrb[0].mxu0
        %v6177 = vpop.f32.mrb[0].mxu0
        %v6178 = vadd.f32 0.0, %v6177
        %v6179 = vpop.f32.mrb[0].mxu0
        %6180 = vmatprep.mubr.bf16.mxu0 0
        %6181 = vmatmul.mubr.bf16.gmra.mrb[0].mxu0 %v5827
        %v6182 = vpop.f32.mrb[0].mxu0
        %v6183 = vadd.f32 0.0, %v6182
        %v6184 = vpop.f32.mrb[0].mxu0
        %v6185 = vpop.f32.mrb[0].mxu0
        %v6186 = vadd.f32 0.0, %v6185
        %v6187 = vpop.f32.mrb[0].mxu0
        %6188 = vmatprep.mubr.bf16.mxu0 0
        %6189 = vmatmul.mubr.bf16.gmra.mrb[0].mxu0 %v5829
        %v6190 = vpop.f32.mrb[0].mxu0
        %v6191 = vadd.f32 0.0, %v6190
        %v6192 = vpop.f32.mrb[0].mxu0
        %v6193 = vpop.f32.mrb[0].mxu0
        %v6194 = vadd.f32 0.0, %v6193
        %v6195 = vpop.f32.mrb[0].mxu0
        %6196 = vmatprep.mubr.bf16.mxu0 0
        %6197 = vmatmul.mubr.bf16.gmra.mrb[0].mxu0 %v5831
        %v6198 = vpop.f32.mrb[0].mxu0
        %v6199 = vadd.f32 0.0, %v6198
        %v6200 = vpop.f32.mrb[0].mxu0
        %v6201 = vpop.f32.mrb[0].mxu0
        %v6202 = vadd.f32 0.0, %v6201
        %v6203 = vpop.f32.mrb[0].mxu0
        %6204 = vmatprep.mubr.bf16.mxu0 0
        %6205 = vmatmul.mubr.bf16.gmra.mrb[0].mxu0 %v5833
        %v6206 = vpop.f32.mrb[0].mxu0
        %v6207 = vadd.f32 0.0, %v6206
        %v6208 = vpop.f32.mrb[0].mxu0
        %v6209 = vpop.f32.mrb[0].mxu0
        %v6210 = vadd.f32 0.0, %v6209
        %v6211 = vpop.f32.mrb[0].mxu0
        %6212 = vmatprep.mubr.bf16.mxu0 0
        %6213 = vmatmul.mubr.bf16.gmra.mrb[0].mxu0 %v5835
        %v6214 = vpop.f32.mrb[0].mxu0
        %v6215 = vadd.f32 0.0, %v6214
        %v6216 = vpop.f32.mrb[0].mxu0
        %v6217 = vpop.f32.mrb[0].mxu0
        %v6218 = vadd.f32 0.0, %v6217
        %v6219 = vpop.f32.mrb[0].mxu0
        %6220 = vmatprep.mubr.bf16.mxu0 0
        %6221 = vmatmul.mubr.bf16.gmra.mrb[0].mxu0 %v5837
        %v6222 = vpop.f32.mrb[0].mxu0
        %v6223 = vadd.f32 0.0, %v6222
        %v6224 = vpop.f32.mrb[0].mxu0
        %v6225 = vpop.f32.mrb[0].mxu0
        %v6226 = vadd.f32 0.0, %v6225
        %v6227 = vpop.f32.mrb[0].mxu0
        %6228 = vmatprep.mubr.bf16.mxu0 0
        %6229 = vmatmul.mubr.bf16.gmra.mrb[0].mxu0 %v6074
        %v6230 = vpop.f32.mrb[0].mxu0
        %v6231 = vadd.f32 0.0, %v6230
        %v6232 = vpop.f32.mrb[0].mxu0
        %v6233 = vpop.f32.mrb[0].mxu0
        %v6234 = vadd.f32 0.0, %v6233
        %v6235 = vpop.f32.mrb[0].mxu0
        %6236 = vdwg.mxu0
        %v6237 = vadd.f32 %v6006, %v6111
        %v6238 = vadd.f32 %v6007, %v6114
        %v6239 = vadd.f32 %v6008, %v6119
        %v6240 = vadd.f32 %v6009, %v6122
        %v6241 = vadd.f32 %v6010, %v6127
        %v6242 = vadd.f32 %v6011, %v6130
        %v6243 = vadd.f32 %v6012, %v6135
        %v6244 = vadd.f32 %v6013, %v6138
        %v6245 = vadd.f32 %v6014, %v6143
        %v6246 = vadd.f32 %v6015, %v6146
        %v6247 = vadd.f32 %v6016, %v6151
        %v6248 = vadd.f32 %v6017, %v6154
        %v6249 = vadd.f32 %v6018, %v6159
        %v6250 = vadd.f32 %v6019, %v6162
        %v6251 = vadd.f32 %v6020, %v6167
        %v6252 = vadd.f32 %v6021, %v6170
        %v6253 = vadd.f32 %v6022, %v6175
        %v6254 = vadd.f32 %v6023, %v6178
        %v6255 = vadd.f32 %v6024, %v6183
        %v6256 = vadd.f32 %v6025, %v6186
        %v6257 = vadd.f32 %v6026, %v6191
        %v6258 = vadd.f32 %v6027, %v6194
        %v6259 = vadd.f32 %v6028, %v6199
        %v6260 = vadd.f32 %v6029, %v6202
        %v6261 = vadd.f32 %v6030, %v6207
        %v6262 = vadd.f32 %v6031, %v6210
        %v6263 = vadd.f32 %v6032, %v6215
        %v6264 = vadd.f32 %v6033, %v6218
        %v6265 = vadd.f32 %v6034, %v6223
        %v6266 = vadd.f32 %v6035, %v6226
        %v6267 = vadd.f32 %v6036, %v6231
        %v6268 = vadd.f32 %v6037, %v6234
        %v6281 = vunpack.c.l.b16 %v5756
        %v6282 = vunpack.c.l.b16 %v5757
        %v6283 = vunpack.c.l.b16 %v5758
        %v6284 = vunpack.c.l.b16 %v5759
        %v6285 = vunpack.c.l.b16 %v5760
        %v6286 = vunpack.c.l.b16 %v5761
        %v6287 = vunpack.c.l.b16 %v5762
        %v6288 = vunpack.c.l.b16 %v5763
        %v6289 = vunpack.c.l.b16 %v5764
        %v6290 = vunpack.c.l.b16 %v5765
        %v6291 = vunpack.c.l.b16 %v5766
        %v6292 = vunpack.c.l.b16 %v5767
        %v6293 = vpack.c.b16 %v6282, %v6281
        %v6294 = vpack.c.b16 %v6284, %v6283
        %v6295 = vpack.c.b16 %v6286, %v6285
        %v6296 = vpack.c.b16 %v6288, %v6287
        %v6297 = vpack.c.b16 %v6290, %v6289
        %v6298 = vpack.c.b16 %v6292, %v6291
        %v6305 = vsel %vm5806, %v5730, 0
        %6307 = vmatprep.subr.bf16.mxu0 0
        %6308 = vmatpush1.bf16.msra.mxu0 %v6293
        %6309 = vmatprep.subr.bf16.mxu0 0
        %6310 = vmatpush1.bf16.msra.mxu0 %v6294
        %6311 = vmatprep.subr.bf16.mxu0 0
        %6312 = vmatpush1.bf16.msra.mxu0 %v6295
        %6313 = vmatprep.subr.bf16.mxu0 0
        %6314 = vmatpush1.bf16.msra.mxu0 %v6296
        %6315 = vmatprep.subr.bf16.mxu0 0
        %6316 = vmatpush1.bf16.msra.mxu0 %v6297
        %6317 = vmatprep.subr.bf16.mxu0 0
        %6318 = vmatpush1.bf16.msra.mxu0 %v6298
        %6319 = vmatprep.subr.bf16.mxu0 0
        %6320 = vmatpush1.bf16.msra.mxu0 0
        %6321 = vmatprep.subr.bf16.mxu0 0
        %6322 = vmatpush1.bf16.msra.mxu0 0
        %6323 = vmatprep.subr.bf16.mxu0 0
        %6324 = vmatpush1.bf16.msra.mxu0 0
        %6325 = vmatprep.subr.bf16.mxu0 0
        %6326 = vmatpush1.bf16.msra.mxu0 0
        %6327 = vmatprep.subr.bf16.mxu0 0
        %6328 = vmatpush1.bf16.msra.mxu0 0
        %6329 = vmatprep.subr.bf16.mxu0 0
        %6330 = vmatpush1.bf16.msra.mxu0 0
        %6331 = vmatprep.subr.bf16.mxu0 0
        %6332 = vmatpush1.bf16.msra.mxu0 0
        %6333 = vmatprep.subr.bf16.mxu0 0
        %6334 = vmatpush1.bf16.msra.mxu0 0
        %6335 = vmatprep.subr.bf16.mxu0 0
        %6336 = vmatpush1.bf16.msra.mxu0 0
        %6337 = vmatprep.subr.bf16.mxu0 0
        %6338 = vmatpush1.bf16.msra.mxu0 0
        %6339 = vmatprep.mubr.bf16.mxu0 0
        %6340 = vmatmul.mubr.bf16.gmra.mrb[0].mxu0 %v5811
        %v6341 = vpop.f32.mrb[0].mxu0
        %v6342 = vadd.f32 0.0, %v6341
        %v6343 = vpop.f32.mrb[0].mxu0
        %v6344 = vpop.f32.mrb[0].mxu0
        %v6345 = vadd.f32 0.0, %v6344
        %v6346 = vpop.f32.mrb[0].mxu0
        %6347 = vmatprep.mubr.bf16.mxu0 0
        %6348 = vmatmul.mubr.bf16.gmra.mrb[0].mxu0 %v5813
        %v6349 = vpop.f32.mrb[0].mxu0
        %v6350 = vadd.f32 0.0, %v6349
        %v6351 = vpop.f32.mrb[0].mxu0
        %v6352 = vpop.f32.mrb[0].mxu0
        %v6353 = vadd.f32 0.0, %v6352
        %v6354 = vpop.f32.mrb[0].mxu0
        %6355 = vmatprep.mubr.bf16.mxu0 0
        %6356 = vmatmul.mubr.bf16.gmra.mrb[0].mxu0 %v5815
        %v6357 = vpop.f32.mrb[0].mxu0
        %v6358 = vadd.f32 0.0, %v6357
        %v6359 = vpop.f32.mrb[0].mxu0
        %v6360 = vpop.f32.mrb[0].mxu0
        %v6361 = vadd.f32 0.0, %v6360
        %v6362 = vpop.f32.mrb[0].mxu0
        %6363 = vmatprep.mubr.bf16.mxu0 0
        %6364 = vmatmul.mubr.bf16.gmra.mrb[0].mxu0 %v5817
        %v6365 = vpop.f32.mrb[0].mxu0
        %v6366 = vadd.f32 0.0, %v6365
        %v6367 = vpop.f32.mrb[0].mxu0
        %v6368 = vpop.f32.mrb[0].mxu0
        %v6369 = vadd.f32 0.0, %v6368
        %v6370 = vpop.f32.mrb[0].mxu0
        %6371 = vmatprep.mubr.bf16.mxu0 0
        %6372 = vmatmul.mubr.bf16.gmra.mrb[0].mxu0 %v5819
        %v6373 = vpop.f32.mrb[0].mxu0
        %v6374 = vadd.f32 0.0, %v6373
        %v6375 = vpop.f32.mrb[0].mxu0
        %v6376 = vpop.f32.mrb[0].mxu0
        %v6377 = vadd.f32 0.0, %v6376
        %v6378 = vpop.f32.mrb[0].mxu0
        %6379 = vmatprep.mubr.bf16.mxu0 0
        %6380 = vmatmul.mubr.bf16.gmra.mrb[0].mxu0 %v5821
        %v6381 = vpop.f32.mrb[0].mxu0
        %v6382 = vadd.f32 0.0, %v6381
        %v6383 = vpop.f32.mrb[0].mxu0
        %v6384 = vpop.f32.mrb[0].mxu0
        %v6385 = vadd.f32 0.0, %v6384
        %v6386 = vpop.f32.mrb[0].mxu0
        %6387 = vmatprep.mubr.bf16.mxu0 0
        %6388 = vmatmul.mubr.bf16.gmra.mrb[0].mxu0 %v5823
        %v6389 = vpop.f32.mrb[0].mxu0
        %v6390 = vadd.f32 0.0, %v6389
        %v6391 = vpop.f32.mrb[0].mxu0
        %v6392 = vpop.f32.mrb[0].mxu0
        %v6393 = vadd.f32 0.0, %v6392
        %v6394 = vpop.f32.mrb[0].mxu0
        %6395 = vmatprep.mubr.bf16.mxu0 0
        %6396 = vmatmul.mubr.bf16.gmra.mrb[0].mxu0 %v5825
        %v6397 = vpop.f32.mrb[0].mxu0
        %v6398 = vadd.f32 0.0, %v6397
        %v6399 = vpop.f32.mrb[0].mxu0
        %v6400 = vpop.f32.mrb[0].mxu0
        %v6401 = vadd.f32 0.0, %v6400
        %v6402 = vpop.f32.mrb[0].mxu0
        %6403 = vmatprep.mubr.bf16.mxu0 0
        %6404 = vmatmul.mubr.bf16.gmra.mrb[0].mxu0 %v5827
        %v6405 = vpop.f32.mrb[0].mxu0
        %v6406 = vadd.f32 0.0, %v6405
        %v6407 = vpop.f32.mrb[0].mxu0
        %v6408 = vpop.f32.mrb[0].mxu0
        %v6409 = vadd.f32 0.0, %v6408
        %v6410 = vpop.f32.mrb[0].mxu0
        %6411 = vmatprep.mubr.bf16.mxu0 0
        %6412 = vmatmul.mubr.bf16.gmra.mrb[0].mxu0 %v5829
        %v6413 = vpop.f32.mrb[0].mxu0
        %v6414 = vadd.f32 0.0, %v6413
        %v6415 = vpop.f32.mrb[0].mxu0
        %v6416 = vpop.f32.mrb[0].mxu0
        %v6417 = vadd.f32 0.0, %v6416
        %v6418 = vpop.f32.mrb[0].mxu0
        %6419 = vmatprep.mubr.bf16.mxu0 0
        %6420 = vmatmul.mubr.bf16.gmra.mrb[0].mxu0 %v5831
        %v6421 = vpop.f32.mrb[0].mxu0
        %v6422 = vadd.f32 0.0, %v6421
        %v6423 = vpop.f32.mrb[0].mxu0
        %v6424 = vpop.f32.mrb[0].mxu0
        %v6425 = vadd.f32 0.0, %v6424
        %v6426 = vpop.f32.mrb[0].mxu0
        %6427 = vmatprep.mubr.bf16.mxu0 0
        %6428 = vmatmul.mubr.bf16.gmra.mrb[0].mxu0 %v5833
        %v6429 = vpop.f32.mrb[0].mxu0
        %v6430 = vadd.f32 0.0, %v6429
        %v6431 = vpop.f32.mrb[0].mxu0
        %v6432 = vpop.f32.mrb[0].mxu0
        %v6433 = vadd.f32 0.0, %v6432
        %v6434 = vpop.f32.mrb[0].mxu0
        %6435 = vmatprep.mubr.bf16.mxu0 0
        %6436 = vmatmul.mubr.bf16.gmra.mrb[0].mxu0 %v5835
        %v6437 = vpop.f32.mrb[0].mxu0
        %v6438 = vadd.f32 0.0, %v6437
        %v6439 = vpop.f32.mrb[0].mxu0
        %v6440 = vpop.f32.mrb[0].mxu0
        %v6441 = vadd.f32 0.0, %v6440
        %v6442 = vpop.f32.mrb[0].mxu0
        %6443 = vmatprep.mubr.bf16.mxu0 0
        %6444 = vmatmul.mubr.bf16.gmra.mrb[0].mxu0 %v5837
        %v6445 = vpop.f32.mrb[0].mxu0
        %v6446 = vadd.f32 0.0, %v6445
        %v6447 = vpop.f32.mrb[0].mxu0
        %v6448 = vpop.f32.mrb[0].mxu0
        %v6449 = vadd.f32 0.0, %v6448
        %v6450 = vpop.f32.mrb[0].mxu0
        %6451 = vmatprep.mubr.bf16.mxu0 0
        %6452 = vmatmul.mubr.bf16.gmra.mrb[0].mxu0 %v6074
        %v6453 = vpop.f32.mrb[0].mxu0
        %v6454 = vadd.f32 0.0, %v6453
        %v6455 = vpop.f32.mrb[0].mxu0
        %v6456 = vpop.f32.mrb[0].mxu0
        %v6457 = vadd.f32 0.0, %v6456
        %v6458 = vpop.f32.mrb[0].mxu0
        %6459 = vmatprep.mubr.bf16.mxu0 0
        %6460 = vmatmul.mubr.bf16.gmra.mrb[0].mxu0 %v6305
        %v6461 = vpop.f32.mrb[0].mxu0
        %v6462 = vadd.f32 0.0, %v6461
        %v6463 = vpop.f32.mrb[0].mxu0
        %v6464 = vpop.f32.mrb[0].mxu0
        %v6465 = vadd.f32 0.0, %v6464
        %v6466 = vpop.f32.mrb[0].mxu0
        %6467 = vdwg.mxu0
        %v6468 = vadd.f32 %v6237, %v6342
        %v6469 = vadd.f32 %v6238, %v6345
        %v6470 = vadd.f32 %v6239, %v6350
        %v6471 = vadd.f32 %v6240, %v6353
        %v6472 = vadd.f32 %v6241, %v6358
        %v6473 = vadd.f32 %v6242, %v6361
        %v6474 = vadd.f32 %v6243, %v6366
        %v6475 = vadd.f32 %v6244, %v6369
        %v6476 = vadd.f32 %v6245, %v6374
        %v6477 = vadd.f32 %v6246, %v6377
        %v6478 = vadd.f32 %v6247, %v6382
        %v6479 = vadd.f32 %v6248, %v6385
        %v6480 = vadd.f32 %v6249, %v6390
        %v6481 = vadd.f32 %v6250, %v6393
        %v6482 = vadd.f32 %v6251, %v6398
        %v6483 = vadd.f32 %v6252, %v6401
        %v6484 = vadd.f32 %v6253, %v6406
        %v6485 = vadd.f32 %v6254, %v6409
        %v6486 = vadd.f32 %v6255, %v6414
        %v6487 = vadd.f32 %v6256, %v6417
        %v6488 = vadd.f32 %v6257, %v6422
        %v6489 = vadd.f32 %v6258, %v6425
        %v6490 = vadd.f32 %v6259, %v6430
        %v6491 = vadd.f32 %v6260, %v6433
        %v6492 = vadd.f32 %v6261, %v6438
        %v6493 = vadd.f32 %v6262, %v6441
        %v6494 = vadd.f32 %v6263, %v6446
        %v6495 = vadd.f32 %v6264, %v6449
        %v6496 = vadd.f32 %v6265, %v6454
        %v6497 = vadd.f32 %v6266, %v6457
        %v6498 = vadd.f32 %v6267, %v6462
        %v6499 = vadd.f32 %v6268, %v6465
        %v6500 = vadd.f32 %v6468, %v334
        %v6501 = vadd.f32 %v6469, %v335
        %v6502 = vadd.f32 %v6470, %v336
        %v6503 = vadd.f32 %v6471, %v337
        %v6504 = vadd.f32 %v6472, %v338
        %v6505 = vadd.f32 %v6473, %v339
        %v6506 = vadd.f32 %v6474, %v340
        %v6507 = vadd.f32 %v6475, %v341
        %v6508 = vadd.f32 %v6476, %v342
        %v6509 = vadd.f32 %v6477, %v343
        %v6510 = vadd.f32 %v6478, %v344
        %v6511 = vadd.f32 %v6479, %v345
        %v6512 = vadd.f32 %v6480, %v346
        %v6513 = vadd.f32 %v6481, %v347
        %v6514 = vadd.f32 %v6482, %v348
        %v6515 = vadd.f32 %v6483, %v349
        %v6516 = vadd.f32 %v6484, %v350
        %v6517 = vadd.f32 %v6485, %v351
        %v6518 = vadd.f32 %v6486, %v352
        %v6519 = vadd.f32 %v6487, %v353
        %v6520 = vadd.f32 %v6488, %v354
        %v6521 = vadd.f32 %v6489, %v355
        %v6522 = vadd.f32 %v6490, %v356
        %v6523 = vadd.f32 %v6491, %v357
        %v6524 = vadd.f32 %v6492, %v358
        %v6525 = vadd.f32 %v6493, %v359
        %v6526 = vadd.f32 %v6494, %v360
        %v6527 = vadd.f32 %v6495, %v361
        %v6528 = vadd.f32 %v6496, %v362
        %v6529 = vadd.f32 %v6497, %v363
        %v6530 = vadd.f32 %v6498, %v364
        %v6531 = vadd.f32 %v6499, %v365
        %6532 = vst.msk [vmem:[%s271] sm:$0xff] %vm5657, %v6500
        %6533 = vst.msk [vmem:[%s271 + $0x8] sm:$0xff] %vm5657, %v6501
        %6534 = vst.msk [vmem:[%s271 + $0x10] sm:$0xff] %vm5657, %v6502
        %6535 = vst.msk [vmem:[%s271 + $0x18] sm:$0xff] %vm5657, %v6503
        %6536 = vst.msk [vmem:[%s271 + $0x20] sm:$0xff] %vm5657, %v6504
        %6537 = vst.msk [vmem:[%s271 + $0x28] sm:$0xff] %vm5657, %v6505
        %6538 = vst.msk [vmem:[%s271 + $0x30] sm:$0xff] %vm5657, %v6506
        %6539 = vst.msk [vmem:[%s271 + $0x38] sm:$0xff] %vm5657, %v6507
        %6540 = vst.msk [vmem:[%s271 + $0x40] sm:$0xff] %vm5657, %v6508
        %6541 = vst.msk [vmem:[%s271 + $0x48] sm:$0xff] %vm5657, %v6509
        %6542 = vst.msk [vmem:[%s271 + $0x50] sm:$0xff] %vm5657, %v6510
        %6543 = vst.msk [vmem:[%s271 + $0x58] sm:$0xff] %vm5657, %v6511
        %6544 = vst.msk [vmem:[%s271 + $0x60] sm:$0xff] %vm5657, %v6512
        %6545 = vst.msk [vmem:[%s271 + $0x68] sm:$0xff] %vm5657, %v6513
        %6546 = vst.msk [vmem:[%s271 + $0x70] sm:$0xff] %vm5657, %v6514
        %6547 = vst.msk [vmem:[%s271 + $0x78] sm:$0xff] %vm5657, %v6515
        %6548 = vst.msk [vmem:[%s271 + $0x80] sm:$0xff] %vm5657, %v6516
        %6549 = vst.msk [vmem:[%s271 + $0x88] sm:$0xff] %vm5657, %v6517
        %6550 = vst.msk [vmem:[%s271 + $0x90] sm:$0xff] %vm5657, %v6518
        %6551 = vst.msk [vmem:[%s271 + $0x98] sm:$0xff] %vm5657, %v6519
        %6552 = vst.msk [vmem:[%s271 + $0xa0] sm:$0xff] %vm5657, %v6520
        %6553 = vst.msk [vmem:[%s271 + $0xa8] sm:$0xff] %vm5657, %v6521
        %6554 = vst.msk [vmem:[%s271 + $0xb0] sm:$0xff] %vm5657, %v6522
        %6555 = vst.msk [vmem:[%s271 + $0xb8] sm:$0xff] %vm5657, %v6523
        %6556 = vst.msk [vmem:[%s271 + $0xc0] sm:$0xff] %vm5657, %v6524
        %6557 = vst.msk [vmem:[%s271 + $0xc8] sm:$0xff] %vm5657, %v6525
        %6558 = vst.msk [vmem:[%s271 + $0xd0] sm:$0xff] %vm5657, %v6526
        %6559 = vst.msk [vmem:[%s271 + $0xd8] sm:$0xff] %vm5657, %v6527
        %6560 = vst.msk [vmem:[%s271 + $0xe0] sm:$0xff] %vm5657, %v6528
        %6561 = vst.msk [vmem:[%s271 + $0xe8] sm:$0xff] %vm5657, %v6529
        %6562 = vst.msk [vmem:[%s271 + $0xf0] sm:$0xff] %vm5657, %v6530
        %6563 = vst.msk [vmem:[%s271 + $0xf8] sm:$0xff] %vm5657, %v6531
        %s6564 = sand.u32 %s181, 1
        %s6565 = scalar_lea.sflag [#allocation4], %s6564
        %s6566 = sand.u32 %s181, 1
        %s6567 = smul.addr %s6566, 256
        %s6568 = scalar_lea.vmem [#allocation3], %s6567
        // Predicated region
        $region56: #{tpu_custom_call.1} parent=47 // pred_check
          %p6569 = pneg %p191
        $region57: #{tpu_custom_call.1} parent=47 // pred_check_branch
          %6571 = sbr.rel (%p6569) target = $region59
        $region58: #{tpu_custom_call.1} parent=47 // pred_region
          %s6573 = ssub.s32 4096, 4096
          %6574 = vsyncadd %s6565, %s6573
          %s6575 = smul.addr %s21, 32
          %s6576 = smul.addr %s6575, 128
          %s6577 = scalar_lea.hbm %s7, %s6576
          %s6578 = sshll.u32 %s6568, 4
          %s6579 = int_to_ptr.vmem [resolvable:$true] %s6578
          %6584 = dma.vmem_to_hbm [thread:$0]  %s6579, 4096, %s6577, %s6565, 128, 128, 8
        $region59: #{tpu_custom_call.1} parent=47 // pred_fallthru
          _
      $region48: #{tpu_custom_call.1} parent=5 // pred_fallthru
        _
      %p6585 = scmp.le.s32.totalorder 2, %s16
      // Predicated region
      $region60: #{tpu_custom_call.1} parent=5 // pred_check
        %p6586 = pneg %p6585
      $region61: #{tpu_custom_call.1} parent=5 // pred_check_branch
        %6588 = sbr.rel (%p6586) target = $region63
      $region62: #{tpu_custom_call.1} parent=5 // pred_region
        %s6589 = ssub.s32 %s16, 2
        // Predicated region
        $region64: #{tpu_custom_call.1} parent=62 // pred_check
          %p6590 = pneg %p197
        $region65: #{tpu_custom_call.1} parent=62 // pred_check_branch
          %6592 = sbr.rel (%p6590) target = $region67
        $region66: #{tpu_custom_call.1} parent=62 // pred_region
          %s6593 = sand.u32 %s182, 1
          %s6594 = scalar_lea.sflag [#allocation4], %s6593
          %s6595 = sand.u32 %s182, 1
          %s6596 = smul.addr %s6595, 256
          %s6597 = scalar_lea.vmem [#allocation3], %s6596
          %6598 = dma.done %s6594, 4096
        $region67: #{tpu_custom_call.1} parent=62 // pred_fallthru
          _
      $region63: #{tpu_custom_call.1} parent=5 // pred_fallthru
        _
    $region6: #{tpu_custom_call.1} parent=1 // loop_footer
      %s20 = sadd.s32 1, %s16
    $region7: #{tpu_custom_call.1} parent=1 // loop_footer_branch
      %15 = sbr.rel target = $region3
    $region8: #{tpu_custom_call.1} parent=1 // loop_exit
      _
    %6599 = vsyncpa [#allocation4], 1
    %s6600 = scalar_lea.sflag [#allocation4], 1
    %6601 = vsyncpa %s6600, 1

</llo_original>
